<compile_context>
chip_gen: v7x
topology: tpu7x:2x2x1
jax: 0.10.0
libtpu: 0.0.40
codegen_flags: <defaults>
</compile_context>

<pallas_src>
import jax
import jax.numpy as jnp
from jax.experimental import pallas as pl
from jax.experimental.pallas import tpu as pltpu


_NEG = -1e30          # pad-lane bias: exp underflows to exactly 0 in softmax
_IN_DIM = 240
_PAD = 128            # all hidden/output widths padded to one lane tile
_LAYER_DIMS = [(240, 120), (120, 72), (72, 64), (64, 32), (32, 6)]


# ----------------------------------------------------------------------------
# Pallas kernel: fused 5-layer MLP with full-row softmax after every layer.
#   x_ref     : (B_tile, 240)   streamed per grid step
#   w1_ref    : (240, 128)      resident (constant index_map)
#   wrest_ref : (4, 128, 128)   resident, layers 2..5 packed
#   b_ref     : (5, 128)        resident, pad lanes = -1e30
#   o_ref     : (B_tile, 128)   lane-dense output (slice [:, :6] outside)
# ----------------------------------------------------------------------------
def _agent_kernel(x_ref, w1_ref, wrest_ref, b_ref, o_ref):
    def softmax(z):
        m = jnp.max(z, axis=-1, keepdims=True)
        e = jnp.exp(z - m)
        s = jnp.sum(e, axis=-1, keepdims=True)
        r = pl.reciprocal(s, approx=True)   # EUP
        r = r * (2.0 - s * r)               # one Newton step -> ~f32 exact
        return e * r

    b_all = b_ref[...]                      # (5, 128), tiny, load once

    h = x_ref[...]                          # (B_tile, 240)
    z = jnp.dot(h, w1_ref[...], preferred_element_type=jnp.float32) + b_all[0:1, :]
    h = softmax(z)                          # (B_tile, 128), lanes >=120 are ~0

    for l in range(4):                      # layers 2..5, statically unrolled
        w = wrest_ref[l]                    # (128, 128)
        z = jnp.dot(h, w, preferred_element_type=jnp.float32) + b_all[l + 1:l + 2, :]
        h = softmax(z)

    o_ref[...] = h


# ----------------------------------------------------------------------------
# One-time parameter preparation (hoisted out of the forward path).
# params are nn.Linear-style: list of (W (out,in), b (out,)).
# ----------------------------------------------------------------------------
def prepare_params(params):
    (w1, b1) = params[0]
    w1p = jnp.zeros((_IN_DIM, _PAD), jnp.float32).at[:, :w1.shape[0]].set(w1.T)

    wrest = jnp.zeros((4, _PAD, _PAD), jnp.float32)
    for l, (w, _) in enumerate(params[1:]):
        out_d, in_d = w.shape
        wrest = wrest.at[l, :in_d, :out_d].set(w.T)

    biases = jnp.full((5, _PAD), _NEG, jnp.float32)
    for l, (_, b) in enumerate(params):
        biases = biases.at[l, :b.shape[0]].set(b)

    return w1p, wrest, biases


def _round_up(n, m):
    return (n + m - 1) // m * m


# ----------------------------------------------------------------------------
# Batched forward: x_batch (B, 12, 20) -> (B, 6)
# ----------------------------------------------------------------------------
def deep_learning_agent_forward_batch(x_batch, prepared, *, b_tile=256):
    w1p, wrest, biases = prepared
    B = x_batch.shape[0]
    x2 = x_batch.reshape(B, -1).astype(jnp.float32)     # row-major flatten per sample

    bt = min(b_tile, _round_up(max(B, 1), 8))            # batch tile (multiple of 8)
    Bp = _round_up(B, bt)
    if Bp != B:
        x2 = jnp.pad(x2, ((0, Bp - B), (0, 0)))

    out = pl.pallas_call(
        _agent_kernel,
        out_shape=jax.ShapeDtypeStruct((Bp, _PAD), jnp.float32),
        grid=(Bp // bt,),
        in_specs=[
            pl.BlockSpec((bt, _IN_DIM), lambda i: (i, 0)),       # x: streamed
            pl.BlockSpec((_IN_DIM, _PAD), lambda i: (0, 0)),     # W1: resident
            pl.BlockSpec((4, _PAD, _PAD), lambda i: (0, 0, 0)),  # W2..W5: resident
            pl.BlockSpec((5, _PAD), lambda i: (0, 0)),           # biases: resident
        ],
        out_specs=pl.BlockSpec((bt, _PAD), lambda i: (i, 0)),
        compiler_params=pltpu.CompilerParams(
            dimension_semantics=("parallel",)),                  # shard tiles on v7x 2 TCs
    )(x2, w1p, wrest, biases)

    return out[:B, :6]


# Single-sample forward — matches the original module's forward((12, 20)) -> (6,).
def deep_learning_agent_forward(x, prepared):
    return deep_learning_agent_forward_batch(x[None], prepared)[0]


# ----------------------------------------------------------------------------
# Deterministic parameter init (mimics nn.Linear default: U(-1/sqrt(in), +)).
# ----------------------------------------------------------------------------
def init_params(key):
    params = []
    for (fan_in, fan_out) in _LAYER_DIMS:
        key, kw, kb = jax.random.split(key, 3)
        bound = 1.0 / jnp.sqrt(fan_in)
        w = jax.random.uniform(kw, (fan_out, fan_in), jnp.float32, -bound, bound)
        b = jax.random.uniform(kb, (fan_out,), jnp.float32, -bound, bound)
        params.append((w, b))
    return params


# Pure-JAX reference (batched) for sanity checking.
def _ref_forward_batch(x_batch, params):
    h = x_batch.reshape(x_batch.shape[0], -1)
    for (w, b) in params:
        h = jax.nn.softmax(h @ w.T + b, axis=-1)
    return h


if __name__ == "__main__":
    key = jax.random.PRNGKey(0)
    key, kx = jax.random.split(key)
    params = init_params(key)
    prepared = prepare_params(params)     # one-time: transpose / pad / pack

    # Batched workload: B samples of the module's (12 pokemon, 20 features) encoding.
    B = 512
    xb = jax.random.uniform(kx, (B, 12, 20), jnp.float32)

    out = deep_learning_agent_forward_batch(xb, prepared)
    out = jax.block_until_ready(out)
    ref = _ref_forward_batch(xb, params)

    assert out.shape == (B, 6)
    assert jnp.allclose(out, ref, atol=1e-4, rtol=1e-4), float(jnp.max(jnp.abs(out - ref)))
    assert jnp.allclose(jnp.sum(out, axis=-1), 1.0, atol=1e-4)

    # Single-sample path (original module semantics).
    out1 = jax.block_until_ready(deep_learning_agent_forward(xb[0], prepared))
    assert out1.shape == (6,)
    assert jnp.allclose(out1, ref[0], atol=1e-4, rtol=1e-4)

    print("KERNEL_OK")
</pallas_src>

<mosaic_0001>
module attributes {stable_mosaic.version = 11 : i64} {
  func.func @_agent_kernel(%arg0: i32, %arg1: memref<256x240xf32, #tpu.memory_space<vmem>>, %arg2: memref<240x128xf32, #tpu.memory_space<vmem>>, %arg3: memref<4x128x128xf32, #tpu.memory_space<vmem>>, %arg4: memref<5x128xf32, #tpu.memory_space<vmem>>, %arg5: memref<256x128xf32, #tpu.memory_space<vmem>>) attributes {dimension_semantics = [#tpu.dimension_semantics<parallel>], iteration_bounds = array<i64: 2>, scalar_prefetch = 0 : i64, scratch_operands = 0 : i64, tpu.core_type = #tpu.core_type<tc>, window_params = [{transform_indices = @transform_0, window_bounds = array<i64: 256, 240>}, {pipeline_mode = #tpu.pipeline_mode<synchronous>, transform_indices = @transform_1, window_bounds = array<i64: 240, 128>}, {pipeline_mode = #tpu.pipeline_mode<synchronous>, transform_indices = @transform_2, window_bounds = array<i64: 4, 128, 128>}, {pipeline_mode = #tpu.pipeline_mode<synchronous>, transform_indices = @transform_3, window_bounds = array<i64: 5, 128>}, {transform_indices = @transform_4, window_bounds = array<i64: 256, 128>}]} {
    %c0 = arith.constant 0 : index
    %c0_0 = arith.constant 0 : index
    %0 = vector.load %arg4[%c0, %c0_0] : memref<5x128xf32, #tpu.memory_space<vmem>>, vector<5x128xf32>
    %c0_1 = arith.constant 0 : index
    %c0_2 = arith.constant 0 : index
    %1 = vector.load %arg1[%c0_1, %c0_2] : memref<256x240xf32, #tpu.memory_space<vmem>>, vector<256x240xf32>
    %c0_3 = arith.constant 0 : index
    %c0_4 = arith.constant 0 : index
    %2 = vector.load %arg2[%c0_3, %c0_4] : memref<240x128xf32, #tpu.memory_space<vmem>>, vector<240x128xf32>
    %cst = arith.constant dense<0.000000e+00> : vector<256x128xf32>
    %3 = tpu.matmul %1, %2, %cst {dimension_numbers = #tpu.dot_dimension_numbers<[1], [0], [0], [1], [0, 0, 1, 1], [], []>} : vector<256x240xf32>, vector<240x128xf32>, vector<256x128xf32> -> vector<256x128xf32>
    %4 = vector.extract_strided_slice %0 {offsets = [0, 0], sizes = [1, 128], strides = [1, 1]} : vector<5x128xf32> to vector<1x128xf32>
    %5 = vector.broadcast %4 : vector<1x128xf32> to vector<256x128xf32>
    %6 = arith.addf %3, %5 : vector<256x128xf32>
    %cst_5 = arith.constant dense<0xFF800000> : vector<256xf32>
    %7 = vector.multi_reduction <maximumf>, %6, %cst_5 [1] : vector<256x128xf32> to vector<256xf32>
    %8 = vector.shape_cast %7 : vector<256xf32> to vector<256x1xf32>
    %9 = vector.broadcast %8 : vector<256x1xf32> to vector<256x128xf32>
    %10 = arith.subf %6, %9 : vector<256x128xf32>
    %11 = math.exp %10 : vector<256x128xf32>
    %cst_6 = arith.constant dense<0.000000e+00> : vector<256xf32>
    %12 = vector.multi_reduction <add>, %11, %cst_6 [1] : vector<256x128xf32> to vector<256xf32>
    %13 = vector.shape_cast %12 : vector<256xf32> to vector<256x1xf32>
    %14 = tpu.reciprocal %13 {approx = true} : vector<256x1xf32> -> vector<256x1xf32>
    %15 = arith.mulf %13, %14 : vector<256x1xf32>
    %cst_7 = arith.constant 2.000000e+00 : f32
    %16 = vector.broadcast %cst_7 : f32 to vector<256x1xf32>
    %17 = arith.subf %16, %15 : vector<256x1xf32>
    %18 = arith.mulf %14, %17 : vector<256x1xf32>
    %19 = vector.broadcast %18 : vector<256x1xf32> to vector<256x128xf32>
    %20 = arith.mulf %11, %19 : vector<256x128xf32>
    %c0_8 = arith.constant 0 : index
    %c0_9 = arith.constant 0 : index
    %c0_10 = arith.constant 0 : index
    %21 = vector.load %arg3[%c0_8, %c0_9, %c0_10] : memref<4x128x128xf32, #tpu.memory_space<vmem>>, vector<1x128x128xf32>
    %22 = vector.shape_cast %21 : vector<1x128x128xf32> to vector<128x128xf32>
    %cst_11 = arith.constant dense<0.000000e+00> : vector<256x128xf32>
    %23 = tpu.matmul %20, %22, %cst_11 {dimension_numbers = #tpu.dot_dimension_numbers<[1], [0], [0], [1], [0, 0, 1, 1], [], []>} : vector<256x128xf32>, vector<128x128xf32>, vector<256x128xf32> -> vector<256x128xf32>
    %24 = vector.extract_strided_slice %0 {offsets = [1, 0], sizes = [1, 128], strides = [1, 1]} : vector<5x128xf32> to vector<1x128xf32>
    %25 = vector.broadcast %24 : vector<1x128xf32> to vector<256x128xf32>
    %26 = arith.addf %23, %25 : vector<256x128xf32>
    %cst_12 = arith.constant dense<0xFF800000> : vector<256xf32>
    %27 = vector.multi_reduction <maximumf>, %26, %cst_12 [1] : vector<256x128xf32> to vector<256xf32>
    %28 = vector.shape_cast %27 : vector<256xf32> to vector<256x1xf32>
    %29 = vector.broadcast %28 : vector<256x1xf32> to vector<256x128xf32>
    %30 = arith.subf %26, %29 : vector<256x128xf32>
    %31 = math.exp %30 : vector<256x128xf32>
    %cst_13 = arith.constant dense<0.000000e+00> : vector<256xf32>
    %32 = vector.multi_reduction <add>, %31, %cst_13 [1] : vector<256x128xf32> to vector<256xf32>
    %33 = vector.shape_cast %32 : vector<256xf32> to vector<256x1xf32>
    %34 = tpu.reciprocal %33 {approx = true} : vector<256x1xf32> -> vector<256x1xf32>
    %35 = arith.mulf %33, %34 : vector<256x1xf32>
    %cst_14 = arith.constant 2.000000e+00 : f32
    %36 = vector.broadcast %cst_14 : f32 to vector<256x1xf32>
    %37 = arith.subf %36, %35 : vector<256x1xf32>
    %38 = arith.mulf %34, %37 : vector<256x1xf32>
    %39 = vector.broadcast %38 : vector<256x1xf32> to vector<256x128xf32>
    %40 = arith.mulf %31, %39 : vector<256x128xf32>
    %c1 = arith.constant 1 : index
    %c0_15 = arith.constant 0 : index
    %c0_16 = arith.constant 0 : index
    %41 = vector.load %arg3[%c1, %c0_15, %c0_16] : memref<4x128x128xf32, #tpu.memory_space<vmem>>, vector<1x128x128xf32>
    %42 = vector.shape_cast %41 : vector<1x128x128xf32> to vector<128x128xf32>
    %cst_17 = arith.constant dense<0.000000e+00> : vector<256x128xf32>
    %43 = tpu.matmul %40, %42, %cst_17 {dimension_numbers = #tpu.dot_dimension_numbers<[1], [0], [0], [1], [0, 0, 1, 1], [], []>} : vector<256x128xf32>, vector<128x128xf32>, vector<256x128xf32> -> vector<256x128xf32>
    %44 = vector.extract_strided_slice %0 {offsets = [2, 0], sizes = [1, 128], strides = [1, 1]} : vector<5x128xf32> to vector<1x128xf32>
    %45 = vector.broadcast %44 : vector<1x128xf32> to vector<256x128xf32>
    %46 = arith.addf %43, %45 : vector<256x128xf32>
    %cst_18 = arith.constant dense<0xFF800000> : vector<256xf32>
    %47 = vector.multi_reduction <maximumf>, %46, %cst_18 [1] : vector<256x128xf32> to vector<256xf32>
    %48 = vector.shape_cast %47 : vector<256xf32> to vector<256x1xf32>
    %49 = vector.broadcast %48 : vector<256x1xf32> to vector<256x128xf32>
    %50 = arith.subf %46, %49 : vector<256x128xf32>
    %51 = math.exp %50 : vector<256x128xf32>
    %cst_19 = arith.constant dense<0.000000e+00> : vector<256xf32>
    %52 = vector.multi_reduction <add>, %51, %cst_19 [1] : vector<256x128xf32> to vector<256xf32>
    %53 = vector.shape_cast %52 : vector<256xf32> to vector<256x1xf32>
    %54 = tpu.reciprocal %53 {approx = true} : vector<256x1xf32> -> vector<256x1xf32>
    %55 = arith.mulf %53, %54 : vector<256x1xf32>
    %cst_20 = arith.constant 2.000000e+00 : f32
    %56 = vector.broadcast %cst_20 : f32 to vector<256x1xf32>
    %57 = arith.subf %56, %55 : vector<256x1xf32>
    %58 = arith.mulf %54, %57 : vector<256x1xf32>
    %59 = vector.broadcast %58 : vector<256x1xf32> to vector<256x128xf32>
    %60 = arith.mulf %51, %59 : vector<256x128xf32>
    %c2 = arith.constant 2 : index
    %c0_21 = arith.constant 0 : index
    %c0_22 = arith.constant 0 : index
    %61 = vector.load %arg3[%c2, %c0_21, %c0_22] : memref<4x128x128xf32, #tpu.memory_space<vmem>>, vector<1x128x128xf32>
    %62 = vector.shape_cast %61 : vector<1x128x128xf32> to vector<128x128xf32>
    %cst_23 = arith.constant dense<0.000000e+00> : vector<256x128xf32>
    %63 = tpu.matmul %60, %62, %cst_23 {dimension_numbers = #tpu.dot_dimension_numbers<[1], [0], [0], [1], [0, 0, 1, 1], [], []>} : vector<256x128xf32>, vector<128x128xf32>, vector<256x128xf32> -> vector<256x128xf32>
    %64 = vector.extract_strided_slice %0 {offsets = [3, 0], sizes = [1, 128], strides = [1, 1]} : vector<5x128xf32> to vector<1x128xf32>
    %65 = vector.broadcast %64 : vector<1x128xf32> to vector<256x128xf32>
    %66 = arith.addf %63, %65 : vector<256x128xf32>
    %cst_24 = arith.constant dense<0xFF800000> : vector<256xf32>
    %67 = vector.multi_reduction <maximumf>, %66, %cst_24 [1] : vector<256x128xf32> to vector<256xf32>
    %68 = vector.shape_cast %67 : vector<256xf32> to vector<256x1xf32>
    %69 = vector.broadcast %68 : vector<256x1xf32> to vector<256x128xf32>
    %70 = arith.subf %66, %69 : vector<256x128xf32>
    %71 = math.exp %70 : vector<256x128xf32>
    %cst_25 = arith.constant dense<0.000000e+00> : vector<256xf32>
    %72 = vector.multi_reduction <add>, %71, %cst_25 [1] : vector<256x128xf32> to vector<256xf32>
    %73 = vector.shape_cast %72 : vector<256xf32> to vector<256x1xf32>
    %74 = tpu.reciprocal %73 {approx = true} : vector<256x1xf32> -> vector<256x1xf32>
    %75 = arith.mulf %73, %74 : vector<256x1xf32>
    %cst_26 = arith.constant 2.000000e+00 : f32
    %76 = vector.broadcast %cst_26 : f32 to vector<256x1xf32>
    %77 = arith.subf %76, %75 : vector<256x1xf32>
    %78 = arith.mulf %74, %77 : vector<256x1xf32>
    %79 = vector.broadcast %78 : vector<256x1xf32> to vector<256x128xf32>
    %80 = arith.mulf %71, %79 : vector<256x128xf32>
    %c3 = arith.constant 3 : index
    %c0_27 = arith.constant 0 : index
    %c0_28 = arith.constant 0 : index
    %81 = vector.load %arg3[%c3, %c0_27, %c0_28] : memref<4x128x128xf32, #tpu.memory_space<vmem>>, vector<1x128x128xf32>
    %82 = vector.shape_cast %81 : vector<1x128x128xf32> to vector<128x128xf32>
    %cst_29 = arith.constant dense<0.000000e+00> : vector<256x128xf32>
    %83 = tpu.matmul %80, %82, %cst_29 {dimension_numbers = #tpu.dot_dimension_numbers<[1], [0], [0], [1], [0, 0, 1, 1], [], []>} : vector<256x128xf32>, vector<128x128xf32>, vector<256x128xf32> -> vector<256x128xf32>
    %84 = vector.extract_strided_slice %0 {offsets = [4, 0], sizes = [1, 128], strides = [1, 1]} : vector<5x128xf32> to vector<1x128xf32>
    %85 = vector.broadcast %84 : vector<1x128xf32> to vector<256x128xf32>
    %86 = arith.addf %83, %85 : vector<256x128xf32>
    %cst_30 = arith.constant dense<0xFF800000> : vector<256xf32>
    %87 = vector.multi_reduction <maximumf>, %86, %cst_30 [1] : vector<256x128xf32> to vector<256xf32>
    %88 = vector.shape_cast %87 : vector<256xf32> to vector<256x1xf32>
    %89 = vector.broadcast %88 : vector<256x1xf32> to vector<256x128xf32>
    %90 = arith.subf %86, %89 : vector<256x128xf32>
    %91 = math.exp %90 : vector<256x128xf32>
    %cst_31 = arith.constant dense<0.000000e+00> : vector<256xf32>
    %92 = vector.multi_reduction <add>, %91, %cst_31 [1] : vector<256x128xf32> to vector<256xf32>
    %93 = vector.shape_cast %92 : vector<256xf32> to vector<256x1xf32>
    %94 = tpu.reciprocal %93 {approx = true} : vector<256x1xf32> -> vector<256x1xf32>
    %95 = arith.mulf %93, %94 : vector<256x1xf32>
    %cst_32 = arith.constant 2.000000e+00 : f32
    %96 = vector.broadcast %cst_32 : f32 to vector<256x1xf32>
    %97 = arith.subf %96, %95 : vector<256x1xf32>
    %98 = arith.mulf %94, %97 : vector<256x1xf32>
    %99 = vector.broadcast %98 : vector<256x1xf32> to vector<256x128xf32>
    %100 = arith.mulf %91, %99 : vector<256x128xf32>
    %c0_33 = arith.constant 0 : index
    %c0_34 = arith.constant 0 : index
    %101 = vector.load %arg5[%c0_33, %c0_34] : memref<256x128xf32, #tpu.memory_space<vmem>>, vector<256x128xf32>
    tpu.vector_store %arg5[%c0_33, %c0_34], %100 {strides = array<i32>} : memref<256x128xf32, #tpu.memory_space<vmem>>, vector<256x128xf32>,
    return
  }
  func.func @transform_0(%arg0: i32) -> (i32, i32) {
    %c0_i32 = arith.constant 0 : i32
    %c0_i32_0 = arith.constant 0 : i32
    return %arg0, %c0_i32 : i32, i32
  }
  func.func @transform_1(%arg0: i32) -> (i32, i32) {
    %c0_i32 = arith.constant 0 : i32
    %c0_i32_0 = arith.constant 0 : i32
    %c0_i32_1 = arith.constant 0 : i32
    return %c0_i32, %c0_i32_0 : i32, i32
  }
  func.func @transform_2(%arg0: i32) -> (i32, i32, i32) {
    %c0_i32 = arith.constant 0 : i32
    %c0_i32_0 = arith.constant 0 : i32
    %c0_i32_1 = arith.constant 0 : i32
    %c0_i32_2 = arith.constant 0 : i32
    return %c0_i32, %c0_i32_0, %c0_i32_1 : i32, i32, i32
  }
  func.func @transform_3(%arg0: i32) -> (i32, i32) {
    %c0_i32 = arith.constant 0 : i32
    %c0_i32_0 = arith.constant 0 : i32
    %c0_i32_1 = arith.constant 0 : i32
    return %c0_i32, %c0_i32_0 : i32, i32
  }
  func.func @transform_4(%arg0: i32) -> (i32, i32) {
    %c0_i32 = arith.constant 0 : i32
    %c0_i32_0 = arith.constant 0 : i32
    return %arg0, %c0_i32 : i32, i32
  }
}

</mosaic_0001>

<llo_original>
// kernel: tpu_custom_call.1
$region0: #{tpu_custom_call.1}
  #allocation0 [shape = 'u32[]', space=smem, size = 0x4, offset = 0x4, fixed_abs, tag = 'smem constant byte address 0x4 - core index']
  #allocation1 [shape = 'u32[144,128]{1,0:T(1,128)}', space=vmem, size = 0x12000, scoped, tag = 'internal scratch']
  %s0 = inlined_call_operand.vmem [shape: f32[512,240], index: 0, kind: input, shape index: {}]
  %s1 = inlined_call_operand.vmem [shape: f32[240,128], index: 1, kind: input, shape index: {}]
  %s2 = inlined_call_operand.vmem [shape: f32[4,128,128], index: 2, kind: input, shape index: {}]
  %s3 = inlined_call_operand.vmem [shape: f32[5,128], index: 3, kind: input, shape index: {}]
  %s4 = inlined_call_operand.hbm [shape: f32[512,128], index: 4, kind: output, shape index: {}]
  %s5 = sld [smem:[#allocation0]]
  $region49: #{tpu_custom_call.1} parent=0
    _
  %s7 = ssub.s32 1, %s5
  %s8 = scalar_select 0, %s7, %s5
  $region1: #{tpu_custom_call.1} parent=0
    #allocation2 [shape = 'u8[262144]{0}', space=vmem, size = 0x40000, scoped, tag = 'output window, operand 0']
    #allocation3 [shape = 's32[2]{0}', space=sflag, size = 0x8, scoped, tag = 'scoped memory for tpu_custom_call.1']
    %9 = vsyncpa [#allocation3], 0
    %s10 = scalar_lea.sflag [#allocation3], 1
    %11 = vsyncpa %s10, 0
    loop: start=0, step=1, limit=4
    $region2: #{tpu_custom_call.1} parent=1 // loop_pre_header
      _
    $region3: #{tpu_custom_call.1} parent=1 // loop_header
      %s13 = sphi 0, %s17
      %p14 = scmp.ge.s32.totalorder %s13, 4
      %s23 = sphi 0, %s25
      %s26 = sphi 0, %s23
      %s27 = sphi 0, %s26
      %s43 = sphi 0, %s27
      %s47 = sphi 0, %s47
      %s49 = sphi 0, %s47
      %s50 = sphi 0, %s49
      %s64 = sphi 0, %s50
      %s68 = sphi 0, %s68
      %s70 = sphi 0, %s68
      %s71 = sphi 0, %s70
      %s85 = sphi 0, %s71
      %s89 = sphi 0, %s89
      %s91 = sphi 0, %s89
      %s92 = sphi 0, %s91
      %s106 = sphi 0, %s92
      %s112 = sphi 0, %s114
      %s115 = sphi 0, %s112
      %s116 = sphi 0, %s115
      %s132 = sphi 0, %s116
    $region4: #{tpu_custom_call.1} parent=1 // loop_header_branch
      %16 = sbr.rel (%p14) target = $region8
    $region5: #{tpu_custom_call.1} parent=1 // loop_body
      %s18 = ssub.s32 %s13, 1
      %s19 = ssub.s32 %s13, 2
      %s20 = sadd.s32 %s13, 1
      %s21 = ssub.s32 %s13, %s20
      %p22 = scmp.eq.s32.totalorder %s21, 0
      %s24 = sadd.s32 %s23, 1
      %s25 = scalar_select %p22, %s23, %s24
      %p28 = pneg %p22
      %p29 = scmp.eq.s32.totalorder %s13, 1
      %p30 = por %p28, %p29
      %p31 = scmp.ne.s32.totalorder %s23, %s26
      %p32 = scmp.eq.s32.totalorder %s13, 0
      %p33 = por %p31, %p32
      %p34 = scmp.ne.s32.totalorder %s23, %s26
      %p35 = scmp.eq.s32.totalorder %s18, 1
      %p36 = por %p34, %p35
      %p37 = scmp.ne.s32.totalorder %s26, %s27
      %p38 = scmp.eq.s32.totalorder %s18, 0
      %p39 = por %p37, %p38
      %p40 = scmp.ne.s32.totalorder %s26, %s27
      %p41 = scmp.eq.s32.totalorder %s19, 1
      %p42 = por %p40, %p41
      %p44 = scmp.ne.s32.totalorder %s27, %s43
      %p45 = scmp.eq.s32.totalorder %s19, 0
      %p46 = por %p44, %p45
      %s48 = sadd.s32 %s47, 1
      %p51 = scmp.eq.s32.totalorder %s13, 1
      %p52 = scmp.ne.s32.totalorder %s47, %s49
      %p53 = scmp.eq.s32.totalorder %s13, 0
      %p54 = por %p52, %p53
      %p55 = scmp.ne.s32.totalorder %s47, %s49
      %p56 = scmp.eq.s32.totalorder %s18, 1
      %p57 = por %p55, %p56
      %p58 = scmp.ne.s32.totalorder %s49, %s50
      %p59 = scmp.eq.s32.totalorder %s18, 0
      %p60 = por %p58, %p59
      %p61 = scmp.ne.s32.totalorder %s49, %s50
      %p62 = scmp.eq.s32.totalorder %s19, 1
      %p63 = por %p61, %p62
      %p65 = scmp.ne.s32.totalorder %s50, %s64
      %p66 = scmp.eq.s32.totalorder %s19, 0
      %p67 = por %p65, %p66
      %s69 = sadd.s32 %s68, 1
      %p72 = scmp.eq.s32.totalorder %s13, 1
      %p73 = scmp.ne.s32.totalorder %s68, %s70
      %p74 = scmp.eq.s32.totalorder %s13, 0
      %p75 = por %p73, %p74
      %p76 = scmp.ne.s32.totalorder %s68, %s70
      %p77 = scmp.eq.s32.totalorder %s18, 1
      %p78 = por %p76, %p77
      %p79 = scmp.ne.s32.totalorder %s70, %s71
      %p80 = scmp.eq.s32.totalorder %s18, 0
      %p81 = por %p79, %p80
      %p82 = scmp.ne.s32.totalorder %s70, %s71
      %p83 = scmp.eq.s32.totalorder %s19, 1
      %p84 = por %p82, %p83
      %p86 = scmp.ne.s32.totalorder %s71, %s85
      %p87 = scmp.eq.s32.totalorder %s19, 0
      %p88 = por %p86, %p87
      %s90 = sadd.s32 %s89, 1
      %p93 = scmp.eq.s32.totalorder %s13, 1
      %p94 = scmp.ne.s32.totalorder %s89, %s91
      %p95 = scmp.eq.s32.totalorder %s13, 0
      %p96 = por %p94, %p95
      %p97 = scmp.ne.s32.totalorder %s89, %s91
      %p98 = scmp.eq.s32.totalorder %s18, 1
      %p99 = por %p97, %p98
      %p100 = scmp.ne.s32.totalorder %s91, %s92
      %p101 = scmp.eq.s32.totalorder %s18, 0
      %p102 = por %p100, %p101
      %p103 = scmp.ne.s32.totalorder %s91, %s92
      %p104 = scmp.eq.s32.totalorder %s19, 1
      %p105 = por %p103, %p104
      %p107 = scmp.ne.s32.totalorder %s92, %s106
      %p108 = scmp.eq.s32.totalorder %s19, 0
      %p109 = por %p107, %p108
      %s110 = ssub.s32 %s13, %s20
      %p111 = scmp.eq.s32.totalorder %s110, 0
      %s113 = sadd.s32 %s112, 1
      %s114 = scalar_select %p111, %s112, %s113
      %p117 = pneg %p111
      %p118 = scmp.eq.s32.totalorder %s13, 1
      %p119 = por %p117, %p118
      %p120 = scmp.ne.s32.totalorder %s112, %s115
      %p121 = scmp.eq.s32.totalorder %s13, 0
      %p122 = por %p120, %p121
      %p123 = scmp.ne.s32.totalorder %s112, %s115
      %p124 = scmp.eq.s32.totalorder %s18, 1
      %p125 = por %p123, %p124
      %p126 = scmp.ne.s32.totalorder %s115, %s116
      %p127 = scmp.eq.s32.totalorder %s18, 0
      %p128 = por %p126, %p127
      %p129 = scmp.ne.s32.totalorder %s115, %s116
      %p130 = scmp.eq.s32.totalorder %s19, 1
      %p131 = por %p129, %p130
      %p133 = scmp.ne.s32.totalorder %s116, %s132
      %p134 = scmp.eq.s32.totalorder %s19, 0
      %p135 = por %p133, %p134
      %p136 = scmp.le.s32.totalorder 1, %s13
      %p137 = scmp.lt.s32.totalorder %s13, 3
      %p138 = pnand %p136, %p137
      %p139 = pneg %p138
      // Predicated region
      $region9: #{tpu_custom_call.1} parent=5 // pred_check
        _
      $region10: #{tpu_custom_call.1} parent=5 // pred_check_branch
        %141 = sbr.rel (%p138) target = $region12
      $region11: #{tpu_custom_call.1} parent=5 // pred_region
        %s142 = ssub.s32 %s13, 1
        // Predicated region
        $region13: #{tpu_custom_call.1} parent=11 // pred_check
          %p143 = pneg %p60
        $region14: #{tpu_custom_call.1} parent=11 // pred_check_branch
          %145 = sbr.rel (%p143) target = $region16
        $region15: #{tpu_custom_call.1} parent=11 // pred_region
          _
        $region16: #{tpu_custom_call.1} parent=11 // pred_fallthru
          _
        // Predicated region
        $region17: #{tpu_custom_call.1} parent=11 // pred_check
          %p146 = pneg %p81
        $region18: #{tpu_custom_call.1} parent=11 // pred_check_branch
          %148 = sbr.rel (%p146) target = $region20
        $region19: #{tpu_custom_call.1} parent=11 // pred_region
          _
        $region20: #{tpu_custom_call.1} parent=11 // pred_fallthru
          _
        // Predicated region
        $region21: #{tpu_custom_call.1} parent=11 // pred_check
          %p149 = pneg %p102
        $region22: #{tpu_custom_call.1} parent=11 // pred_check_branch
          %151 = sbr.rel (%p149) target = $region24
        $region23: #{tpu_custom_call.1} parent=11 // pred_region
          _
        $region24: #{tpu_custom_call.1} parent=11 // pred_fallthru
          _
      $region12: #{tpu_custom_call.1} parent=5 // pred_fallthru
        _
      %p152 = scmp.lt.s32.totalorder %s13, 2
      // Predicated region
      $region25: #{tpu_custom_call.1} parent=5 // pred_check
        %p153 = pneg %p152
      $region26: #{tpu_custom_call.1} parent=5 // pred_check_branch
        %155 = sbr.rel (%p153) target = $region28
      $region27: #{tpu_custom_call.1} parent=5 // pred_region
        // Predicated region
        $region29: #{tpu_custom_call.1} parent=27 // pred_check
          %p156 = pneg %p33
        $region30: #{tpu_custom_call.1} parent=27 // pred_check_branch
          %158 = sbr.rel (%p156) target = $region32
        $region31: #{tpu_custom_call.1} parent=27 // pred_region
          %s159 = smul.u32 32, %s13
          %p160 = scmp.lt.s32.totalorder %s159, 63
          %s161 = scalar_select %p160, %s159, 63
          %s162 = smul.addr %s161, 2
          %s163 = smul.addr %s162, 8
          %s164 = scalar_lea.vmem %s0, %s163
          %s165 = smul.u32 32, %s13
        $region32: #{tpu_custom_call.1} parent=27 // pred_fallthru
          _
      $region28: #{tpu_custom_call.1} parent=5 // pred_fallthru
        _
      %p166 = scmp.le.s32.totalorder 1, %s13
      %p167 = scmp.lt.s32.totalorder %s13, 3
      %p168 = pnand %p166, %p167
      %p169 = pneg %p168
      // Predicated region
      $region33: #{tpu_custom_call.1} parent=5 // pred_check
        _
      $region34: #{tpu_custom_call.1} parent=5 // pred_check_branch
        %171 = sbr.rel (%p168) target = $region36
      $region35: #{tpu_custom_call.1} parent=5 // pred_region
        %s172 = ssub.s32 %s13, 1
        %s173 = smul.u32 32, %s18
        %p174 = scmp.lt.s32.totalorder %s173, 63
        %s175 = scalar_select %p174, %s173, 63
        %s176 = smul.addr %s175, 2
        %s177 = smul.addr %s176, 8
        %s178 = scalar_lea.vmem %s0, %s177
        %p179 = pneg %p39
        %p180 = pneg %p36
        %p181 = pneg %p60
        %p182 = pneg %p57
        %p183 = pneg %p81
        %p184 = pneg %p78
        %p185 = pneg %p102
        %p186 = pneg %p99
        %p187 = pneg %p128
        %p188 = pneg %p125
        %s189 = sand.u32 %s115, 1
        %s190 = scalar_lea.sflag [#allocation3], %s189
        %s191 = sand.u32 %s115, 1
        %s192 = smul.addr %s191, 256
        %s193 = scalar_lea.vmem [#allocation2], %s192
        %s194 = smul.u32 32, %s18
        %p195 = scmp.lt.s32.totalorder %s194, 63
        %s196 = scalar_select %p195, %s194, 63
        %s197 = smul.addr %s196, 2
        %s198 = smul.addr %s197, 8
        %s199 = scalar_lea.vmem %s0, %s198
        %s200 = smul.u32 32, %s18
        %s201 = smul.u32 32, %s18
        %v202 = vld [vmem:[%s3] sm:$0x1f]
        %v203 = vld [vmem:[%s199] sm:$0xff]
        %v204 = vld [vmem:[%s199 + $0x8] sm:$0xff]
        %v205 = vld [vmem:[%s199 + $0x10] sm:$0xff]
        %v206 = vld [vmem:[%s199 + $0x18] sm:$0xff]
        %v207 = vld [vmem:[%s199 + $0x20] sm:$0xff]
        %v208 = vld [vmem:[%s199 + $0x28] sm:$0xff]
        %v209 = vld [vmem:[%s199 + $0x30] sm:$0xff]
        %v210 = vld [vmem:[%s199 + $0x38] sm:$0xff]
        %v211 = vld [vmem:[%s199 + $0x40] sm:$0xff]
        %v212 = vld [vmem:[%s199 + $0x48] sm:$0xff]
        %v213 = vld [vmem:[%s199 + $0x50] sm:$0xff]
        %v214 = vld [vmem:[%s199 + $0x58] sm:$0xff]
        %v215 = vld [vmem:[%s199 + $0x60] sm:$0xff]
        %v216 = vld [vmem:[%s199 + $0x68] sm:$0xff]
        %v217 = vld [vmem:[%s199 + $0x70] sm:$0xff]
        %v218 = vld [vmem:[%s199 + $0x78] sm:$0xff]
        %v219 = vld [vmem:[%s199 + $0x80] sm:$0xff]
        %v220 = vld [vmem:[%s199 + $0x88] sm:$0xff]
        %v221 = vld [vmem:[%s199 + $0x90] sm:$0xff]
        %v222 = vld [vmem:[%s199 + $0x98] sm:$0xff]
        %v223 = vld [vmem:[%s199 + $0xa0] sm:$0xff]
        %v224 = vld [vmem:[%s199 + $0xa8] sm:$0xff]
        %v225 = vld [vmem:[%s199 + $0xb0] sm:$0xff]
        %v226 = vld [vmem:[%s199 + $0xb8] sm:$0xff]
        %v227 = vld [vmem:[%s199 + $0xc0] sm:$0xff]
        %v228 = vld [vmem:[%s199 + $0xc8] sm:$0xff]
        %v229 = vld [vmem:[%s199 + $0xd0] sm:$0xff]
        %v230 = vld [vmem:[%s199 + $0xd8] sm:$0xff]
        %v231 = vld [vmem:[%s199 + $0xe0] sm:$0xff]
        %v232 = vld [vmem:[%s199 + $0xe8] sm:$0xff]
        %v233 = vld [vmem:[%s199 + $0xf0] sm:$0xff]
        %v234 = vld [vmem:[%s199 + $0xf8] sm:$0xff]
        %v235 = vld [vmem:[%s199 + $0x100] sm:$0xff]
        %v236 = vld [vmem:[%s199 + $0x108] sm:$0xff]
        %v237 = vld [vmem:[%s199 + $0x110] sm:$0xff]
        %v238 = vld [vmem:[%s199 + $0x118] sm:$0xff]
        %v239 = vld [vmem:[%s199 + $0x120] sm:$0xff]
        %v240 = vld [vmem:[%s199 + $0x128] sm:$0xff]
        %v241 = vld [vmem:[%s199 + $0x130] sm:$0xff]
        %v242 = vld [vmem:[%s199 + $0x138] sm:$0xff]
        %v243 = vld [vmem:[%s199 + $0x140] sm:$0xff]
        %v244 = vld [vmem:[%s199 + $0x148] sm:$0xff]
        %v245 = vld [vmem:[%s199 + $0x150] sm:$0xff]
        %v246 = vld [vmem:[%s199 + $0x158] sm:$0xff]
        %v247 = vld [vmem:[%s199 + $0x160] sm:$0xff]
        %v248 = vld [vmem:[%s199 + $0x168] sm:$0xff]
        %v249 = vld [vmem:[%s199 + $0x170] sm:$0xff]
        %v250 = vld [vmem:[%s199 + $0x178] sm:$0xff]
        %v251 = vld [vmem:[%s199 + $0x180] sm:$0xff]
        %v252 = vld [vmem:[%s199 + $0x188] sm:$0xff]
        %v253 = vld [vmem:[%s199 + $0x190] sm:$0xff]
        %v254 = vld [vmem:[%s199 + $0x198] sm:$0xff]
        %v255 = vld [vmem:[%s199 + $0x1a0] sm:$0xff]
        %v256 = vld [vmem:[%s199 + $0x1a8] sm:$0xff]
        %v257 = vld [vmem:[%s199 + $0x1b0] sm:$0xff]
        %v258 = vld [vmem:[%s199 + $0x1b8] sm:$0xff]
        %v259 = vld [vmem:[%s199 + $0x1c0] sm:$0xff]
        %v260 = vld [vmem:[%s199 + $0x1c8] sm:$0xff]
        %v261 = vld [vmem:[%s199 + $0x1d0] sm:$0xff]
        %v262 = vld [vmem:[%s199 + $0x1d8] sm:$0xff]
        %v263 = vld [vmem:[%s199 + $0x1e0] sm:$0xff]
        %v264 = vld [vmem:[%s199 + $0x1e8] sm:$0xff]
        %v265 = vld [vmem:[%s199 + $0x1f0] sm:$0xff]
        %v266 = vld [vmem:[%s199 + $0x1f8] sm:$0xff]
        %v267 = vld [vmem:[%s1] sm:$0xff]
        %v268 = vld [vmem:[%s1 + $0x8] sm:$0xff]
        %v269 = vld [vmem:[%s1 + $0x10] sm:$0xff]
        %v270 = vld [vmem:[%s1 + $0x18] sm:$0xff]
        %v271 = vld [vmem:[%s1 + $0x20] sm:$0xff]
        %v272 = vld [vmem:[%s1 + $0x28] sm:$0xff]
        %v273 = vld [vmem:[%s1 + $0x30] sm:$0xff]
        %v274 = vld [vmem:[%s1 + $0x38] sm:$0xff]
        %v275 = vld [vmem:[%s1 + $0x40] sm:$0xff]
        %v276 = vld [vmem:[%s1 + $0x48] sm:$0xff]
        %v277 = vld [vmem:[%s1 + $0x50] sm:$0xff]
        %v278 = vld [vmem:[%s1 + $0x58] sm:$0xff]
        %v279 = vld [vmem:[%s1 + $0x60] sm:$0xff]
        %v280 = vld [vmem:[%s1 + $0x68] sm:$0xff]
        %v281 = vld [vmem:[%s1 + $0x70] sm:$0xff]
        %v282 = vld [vmem:[%s1 + $0x78] sm:$0xff]
        %v283 = vld [vmem:[%s1 + $0x80] sm:$0xff]
        %v284 = vld [vmem:[%s1 + $0x88] sm:$0xff]
        %v285 = vld [vmem:[%s1 + $0x90] sm:$0xff]
        %v286 = vld [vmem:[%s1 + $0x98] sm:$0xff]
        %v287 = vld [vmem:[%s1 + $0xa0] sm:$0xff]
        %v288 = vld [vmem:[%s1 + $0xa8] sm:$0xff]
        %v289 = vld [vmem:[%s1 + $0xb0] sm:$0xff]
        %v290 = vld [vmem:[%s1 + $0xb8] sm:$0xff]
        %v291 = vld [vmem:[%s1 + $0xc0] sm:$0xff]
        %v292 = vld [vmem:[%s1 + $0xc8] sm:$0xff]
        %v293 = vld [vmem:[%s1 + $0xd0] sm:$0xff]
        %v294 = vld [vmem:[%s1 + $0xd8] sm:$0xff]
        %v295 = vld [vmem:[%s1 + $0xe0] sm:$0xff]
        %v296 = vld [vmem:[%s1 + $0xe8] sm:$0xff]
        %v297 = vlaneseq
        %v298 = vshrl.u32 %v297, 7
        %v299 = vsub.s32 0, %v298
        %v300 = vrot.slane %v202, %v299
        %vm301 = vcmask 916480
        %v303 = vsel %vm301, %v204, 0
        %v306 = vsel %vm301, %v206, 0
        %v309 = vsel %vm301, %v208, 0
        %v312 = vsel %vm301, %v210, 0
        %v315 = vsel %vm301, %v212, 0
        %v318 = vsel %vm301, %v214, 0
        %v321 = vsel %vm301, %v216, 0
        %v324 = vsel %vm301, %v218, 0
        %v327 = vsel %vm301, %v220, 0
        %v330 = vsel %vm301, %v222, 0
        %v333 = vsel %vm301, %v224, 0
        %v336 = vsel %vm301, %v226, 0
        %v339 = vsel %vm301, %v228, 0
        %v342 = vsel %vm301, %v230, 0
        %v345 = vsel %vm301, %v232, 0
        %v348 = vsel %vm301, %v234, 0
        %v351 = vsel %vm301, %v236, 0
        %v354 = vsel %vm301, %v238, 0
        %v357 = vsel %vm301, %v240, 0
        %v360 = vsel %vm301, %v242, 0
        %v363 = vsel %vm301, %v244, 0
        %v366 = vsel %vm301, %v246, 0
        %v369 = vsel %vm301, %v248, 0
        %v372 = vsel %vm301, %v250, 0
        %v375 = vsel %vm301, %v252, 0
        %v378 = vsel %vm301, %v254, 0
        %v381 = vsel %vm301, %v256, 0
        %v384 = vsel %vm301, %v258, 0
        %v387 = vsel %vm301, %v260, 0
        %v390 = vsel %vm301, %v262, 0
        %v393 = vsel %vm301, %v264, 0
        %v396 = vsel %vm301, %v266, 0
        %398 = vmatprep.subr.mxu0 0.0
        %399 = vmatpush1.msra.mxu0 %v267
        %400 = vmatprep.subr.mxu0 0.0
        %401 = vmatpush1.msra.mxu0 %v268
        %402 = vmatprep.subr.mxu0 0.0
        %403 = vmatpush1.msra.mxu0 %v269
        %404 = vmatprep.subr.mxu0 0.0
        %405 = vmatpush1.msra.mxu0 %v270
        %406 = vmatprep.subr.mxu0 0.0
        %407 = vmatpush1.msra.mxu0 %v271
        %408 = vmatprep.subr.mxu0 0.0
        %409 = vmatpush1.msra.mxu0 %v272
        %410 = vmatprep.subr.mxu0 0.0
        %411 = vmatpush1.msra.mxu0 %v273
        %412 = vmatprep.subr.mxu0 0.0
        %413 = vmatpush1.msra.mxu0 %v274
        %414 = vmatprep.subr.mxu0 0.0
        %415 = vmatpush1.msra.mxu0 %v275
        %416 = vmatprep.subr.mxu0 0.0
        %417 = vmatpush1.msra.mxu0 %v276
        %418 = vmatprep.subr.mxu0 0.0
        %419 = vmatpush1.msra.mxu0 %v277
        %420 = vmatprep.subr.mxu0 0.0
        %421 = vmatpush1.msra.mxu0 %v278
        %422 = vmatprep.subr.mxu0 0.0
        %423 = vmatpush1.msra.mxu0 %v279
        %424 = vmatprep.subr.mxu0 0.0
        %425 = vmatpush1.msra.mxu0 %v280
        %426 = vmatprep.subr.mxu0 0.0
        %427 = vmatpush1.msra.mxu0 %v281
        %428 = vmatprep.subr.mxu0 0.0
        %429 = vmatpush1.msra.mxu0 %v282
        %430 = vmatprep.subr.mxu0 0.0
        %431 = vmatpush1.msra.mxu0 %v283
        %432 = vmatprep.subr.mxu0 0.0
        %433 = vmatpush1.msra.mxu0 %v284
        %434 = vmatprep.subr.mxu0 0.0
        %435 = vmatpush1.msra.mxu0 %v285
        %436 = vmatprep.subr.mxu0 0.0
        %437 = vmatpush1.msra.mxu0 %v286
        %438 = vmatprep.subr.mxu0 0.0
        %439 = vmatpush1.msra.mxu0 %v287
        %440 = vmatprep.subr.mxu0 0.0
        %441 = vmatpush1.msra.mxu0 %v288
        %442 = vmatprep.subr.mxu0 0.0
        %443 = vmatpush1.msra.mxu0 %v289
        %444 = vmatprep.subr.mxu0 0.0
        %445 = vmatpush1.msra.mxu0 %v290
        %446 = vmatprep.subr.mxu0 0.0
        %447 = vmatpush1.msra.mxu0 %v291
        %448 = vmatprep.subr.mxu0 0.0
        %449 = vmatpush1.msra.mxu0 %v292
        %450 = vmatprep.subr.mxu0 0.0
        %451 = vmatpush1.msra.mxu0 %v293
        %452 = vmatprep.subr.mxu0 0.0
        %453 = vmatpush1.msra.mxu0 %v294
        %454 = vmatprep.subr.mxu0 0.0
        %455 = vmatpush1.msra.mxu0 %v295
        %456 = vmatprep.subr.mxu0 0.0
        %457 = vmatpush1.msra.mxu0 %v296
        %458 = vmatprep.subr.mxu0 0.0
        %459 = vmatpush1.msra.mxu0 0.0
        %460 = vmatprep.subr.mxu0 0.0
        %461 = vmatpush1.msra.mxu0 0.0
        %462 = vmatprep.mubr.f32.mxu0 %v303
        %463 = vmatmul.mubr.f32.gmra.mrb[0].mxu0 %v203
        %v464 = vpop.f32.mrb[0].mxu0
        %v465 = vadd.f32 %v300, %v464
        %v466 = vpop.f32.mrb[0].mxu0
        %467 = vmatprep.mubr.f32.mxu0 %v306
        %468 = vmatmul.mubr.f32.gmra.mrb[0].mxu0 %v205
        %v469 = vpop.f32.mrb[0].mxu0
        %v470 = vadd.f32 %v300, %v469
        %v471 = vpop.f32.mrb[0].mxu0
        %472 = vmatprep.mubr.f32.mxu0 %v309
        %473 = vmatmul.mubr.f32.gmra.mrb[0].mxu0 %v207
        %v474 = vpop.f32.mrb[0].mxu0
        %v475 = vadd.f32 %v300, %v474
        %v476 = vpop.f32.mrb[0].mxu0
        %477 = vmatprep.mubr.f32.mxu0 %v312
        %478 = vmatmul.mubr.f32.gmra.mrb[0].mxu0 %v209
        %v479 = vpop.f32.mrb[0].mxu0
        %v480 = vadd.f32 %v300, %v479
        %v481 = vpop.f32.mrb[0].mxu0
        %482 = vmatprep.mubr.f32.mxu0 %v315
        %483 = vmatmul.mubr.f32.gmra.mrb[0].mxu0 %v211
        %v484 = vpop.f32.mrb[0].mxu0
        %v485 = vadd.f32 %v300, %v484
        %v486 = vpop.f32.mrb[0].mxu0
        %487 = vmatprep.mubr.f32.mxu0 %v318
        %488 = vmatmul.mubr.f32.gmra.mrb[0].mxu0 %v213
        %v489 = vpop.f32.mrb[0].mxu0
        %v490 = vadd.f32 %v300, %v489
        %v491 = vpop.f32.mrb[0].mxu0
        %492 = vmatprep.mubr.f32.mxu0 %v321
        %493 = vmatmul.mubr.f32.gmra.mrb[0].mxu0 %v215
        %v494 = vpop.f32.mrb[0].mxu0
        %v495 = vadd.f32 %v300, %v494
        %v496 = vpop.f32.mrb[0].mxu0
        %497 = vmatprep.mubr.f32.mxu0 %v324
        %498 = vmatmul.mubr.f32.gmra.mrb[0].mxu0 %v217
        %v499 = vpop.f32.mrb[0].mxu0
        %v500 = vadd.f32 %v300, %v499
        %v501 = vpop.f32.mrb[0].mxu0
        %502 = vmatprep.mubr.f32.mxu0 %v327
        %503 = vmatmul.mubr.f32.gmra.mrb[0].mxu0 %v219
        %v504 = vpop.f32.mrb[0].mxu0
        %v505 = vadd.f32 %v300, %v504
        %v506 = vpop.f32.mrb[0].mxu0
        %507 = vmatprep.mubr.f32.mxu0 %v330
        %508 = vmatmul.mubr.f32.gmra.mrb[0].mxu0 %v221
        %v509 = vpop.f32.mrb[0].mxu0
        %v510 = vadd.f32 %v300, %v509
        %v511 = vpop.f32.mrb[0].mxu0
        %512 = vmatprep.mubr.f32.mxu0 %v333
        %513 = vmatmul.mubr.f32.gmra.mrb[0].mxu0 %v223
        %v514 = vpop.f32.mrb[0].mxu0
        %v515 = vadd.f32 %v300, %v514
        %v516 = vpop.f32.mrb[0].mxu0
        %517 = vmatprep.mubr.f32.mxu0 %v336
        %518 = vmatmul.mubr.f32.gmra.mrb[0].mxu0 %v225
        %v519 = vpop.f32.mrb[0].mxu0
        %v520 = vadd.f32 %v300, %v519
        %v521 = vpop.f32.mrb[0].mxu0
        %522 = vmatprep.mubr.f32.mxu0 %v339
        %523 = vmatmul.mubr.f32.gmra.mrb[0].mxu0 %v227
        %v524 = vpop.f32.mrb[0].mxu0
        %v525 = vadd.f32 %v300, %v524
        %v526 = vpop.f32.mrb[0].mxu0
        %527 = vmatprep.mubr.f32.mxu0 %v342
        %528 = vmatmul.mubr.f32.gmra.mrb[0].mxu0 %v229
        %v529 = vpop.f32.mrb[0].mxu0
        %v530 = vadd.f32 %v300, %v529
        %v531 = vpop.f32.mrb[0].mxu0
        %532 = vmatprep.mubr.f32.mxu0 %v345
        %533 = vmatmul.mubr.f32.gmra.mrb[0].mxu0 %v231
        %v534 = vpop.f32.mrb[0].mxu0
        %v535 = vadd.f32 %v300, %v534
        %v536 = vpop.f32.mrb[0].mxu0
        %537 = vmatprep.mubr.f32.mxu0 %v348
        %538 = vmatmul.mubr.f32.gmra.mrb[0].mxu0 %v233
        %v539 = vpop.f32.mrb[0].mxu0
        %v540 = vadd.f32 %v300, %v539
        %v541 = vpop.f32.mrb[0].mxu0
        %542 = vmatprep.mubr.f32.mxu0 %v351
        %543 = vmatmul.mubr.f32.gmra.mrb[0].mxu0 %v235
        %v544 = vpop.f32.mrb[0].mxu0
        %v545 = vadd.f32 %v300, %v544
        %v546 = vpop.f32.mrb[0].mxu0
        %547 = vmatprep.mubr.f32.mxu0 %v354
        %548 = vmatmul.mubr.f32.gmra.mrb[0].mxu0 %v237
        %v549 = vpop.f32.mrb[0].mxu0
        %v550 = vadd.f32 %v300, %v549
        %v551 = vpop.f32.mrb[0].mxu0
        %552 = vmatprep.mubr.f32.mxu0 %v357
        %553 = vmatmul.mubr.f32.gmra.mrb[0].mxu0 %v239
        %v554 = vpop.f32.mrb[0].mxu0
        %v555 = vadd.f32 %v300, %v554
        %v556 = vpop.f32.mrb[0].mxu0
        %557 = vmatprep.mubr.f32.mxu0 %v360
        %558 = vmatmul.mubr.f32.gmra.mrb[0].mxu0 %v241
        %v559 = vpop.f32.mrb[0].mxu0
        %v560 = vadd.f32 %v300, %v559
        %v561 = vpop.f32.mrb[0].mxu0
        %562 = vmatprep.mubr.f32.mxu0 %v363
        %563 = vmatmul.mubr.f32.gmra.mrb[0].mxu0 %v243
        %v564 = vpop.f32.mrb[0].mxu0
        %v565 = vadd.f32 %v300, %v564
        %v566 = vpop.f32.mrb[0].mxu0
        %567 = vmatprep.mubr.f32.mxu0 %v366
        %568 = vmatmul.mubr.f32.gmra.mrb[0].mxu0 %v245
        %v569 = vpop.f32.mrb[0].mxu0
        %v570 = vadd.f32 %v300, %v569
        %v571 = vpop.f32.mrb[0].mxu0
        %572 = vmatprep.mubr.f32.mxu0 %v369
        %573 = vmatmul.mubr.f32.gmra.mrb[0].mxu0 %v247
        %v574 = vpop.f32.mrb[0].mxu0
        %v575 = vadd.f32 %v300, %v574
        %v576 = vpop.f32.mrb[0].mxu0
        %577 = vmatprep.mubr.f32.mxu0 %v372
        %578 = vmatmul.mubr.f32.gmra.mrb[0].mxu0 %v249
        %v579 = vpop.f32.mrb[0].mxu0
        %v580 = vadd.f32 %v300, %v579
        %v581 = vpop.f32.mrb[0].mxu0
        %582 = vmatprep.mubr.f32.mxu0 %v375
        %583 = vmatmul.mubr.f32.gmra.mrb[0].mxu0 %v251
        %v584 = vpop.f32.mrb[0].mxu0
        %v585 = vadd.f32 %v300, %v584
        %v586 = vpop.f32.mrb[0].mxu0
        %587 = vmatprep.mubr.f32.mxu0 %v378
        %588 = vmatmul.mubr.f32.gmra.mrb[0].mxu0 %v253
        %v589 = vpop.f32.mrb[0].mxu0
        %v590 = vadd.f32 %v300, %v589
        %v591 = vpop.f32.mrb[0].mxu0
        %592 = vmatprep.mubr.f32.mxu0 %v381
        %593 = vmatmul.mubr.f32.gmra.mrb[0].mxu0 %v255
        %v594 = vpop.f32.mrb[0].mxu0
        %v595 = vadd.f32 %v300, %v594
        %v596 = vpop.f32.mrb[0].mxu0
        %597 = vmatprep.mubr.f32.mxu0 %v384
        %598 = vmatmul.mubr.f32.gmra.mrb[0].mxu0 %v257
        %v599 = vpop.f32.mrb[0].mxu0
        %v600 = vadd.f32 %v300, %v599
        %v601 = vpop.f32.mrb[0].mxu0
        %602 = vmatprep.mubr.f32.mxu0 %v387
        %603 = vmatmul.mubr.f32.gmra.mrb[0].mxu0 %v259
        %v604 = vpop.f32.mrb[0].mxu0
        %v605 = vadd.f32 %v300, %v604
        %v606 = vpop.f32.mrb[0].mxu0
        %607 = vmatprep.mubr.f32.mxu0 %v390
        %608 = vmatmul.mubr.f32.gmra.mrb[0].mxu0 %v261
        %v609 = vpop.f32.mrb[0].mxu0
        %v610 = vadd.f32 %v300, %v609
        %v611 = vpop.f32.mrb[0].mxu0
        %612 = vmatprep.mubr.f32.mxu0 %v393
        %613 = vmatmul.mubr.f32.gmra.mrb[0].mxu0 %v263
        %v614 = vpop.f32.mrb[0].mxu0
        %v615 = vadd.f32 %v300, %v614
        %v616 = vpop.f32.mrb[0].mxu0
        %617 = vmatprep.mubr.f32.mxu0 %v396
        %618 = vmatmul.mubr.f32.gmra.mrb[0].mxu0 %v265
        %v619 = vpop.f32.mrb[0].mxu0
        %v620 = vadd.f32 %v300, %v619
        %v621 = vpop.f32.mrb[0].mxu0
        %622 = vdwg.mxu0
        %623 = vmax.xlane.f32.xlu0 %v465
        %v624 = vpop.xlane.xlu0 %623
        %625 = vmax.xlane.f32.xlu0 %v470
        %v626 = vpop.xlane.xlu0 %625
        %627 = vmax.xlane.f32.xlu0 %v475
        %v628 = vpop.xlane.xlu0 %627
        %629 = vmax.xlane.f32.xlu0 %v480
        %v630 = vpop.xlane.xlu0 %629
        %631 = vmax.xlane.f32.xlu0 %v485
        %v632 = vpop.xlane.xlu0 %631
        %633 = vmax.xlane.f32.xlu0 %v490
        %v634 = vpop.xlane.xlu0 %633
        %635 = vmax.xlane.f32.xlu0 %v495
        %v636 = vpop.xlane.xlu0 %635
        %637 = vmax.xlane.f32.xlu0 %v500
        %v638 = vpop.xlane.xlu0 %637
        %639 = vmax.xlane.f32.xlu0 %v505
        %v640 = vpop.xlane.xlu0 %639
        %641 = vmax.xlane.f32.xlu0 %v510
        %v642 = vpop.xlane.xlu0 %641
        %643 = vmax.xlane.f32.xlu0 %v515
        %v644 = vpop.xlane.xlu0 %643
        %645 = vmax.xlane.f32.xlu0 %v520
        %v646 = vpop.xlane.xlu0 %645
        %647 = vmax.xlane.f32.xlu0 %v525
        %v648 = vpop.xlane.xlu0 %647
        %649 = vmax.xlane.f32.xlu0 %v530
        %v650 = vpop.xlane.xlu0 %649
        %651 = vmax.xlane.f32.xlu0 %v535
        %v652 = vpop.xlane.xlu0 %651
        %653 = vmax.xlane.f32.xlu0 %v540
        %v654 = vpop.xlane.xlu0 %653
        %655 = vmax.xlane.f32.xlu0 %v545
        %v656 = vpop.xlane.xlu0 %655
        %657 = vmax.xlane.f32.xlu0 %v550
        %v658 = vpop.xlane.xlu0 %657
        %659 = vmax.xlane.f32.xlu0 %v555
        %v660 = vpop.xlane.xlu0 %659
        %661 = vmax.xlane.f32.xlu0 %v560
        %v662 = vpop.xlane.xlu0 %661
        %663 = vmax.xlane.f32.xlu0 %v565
        %v664 = vpop.xlane.xlu0 %663
        %665 = vmax.xlane.f32.xlu0 %v570
        %v666 = vpop.xlane.xlu0 %665
        %667 = vmax.xlane.f32.xlu0 %v575
        %v668 = vpop.xlane.xlu0 %667
        %669 = vmax.xlane.f32.xlu0 %v580
        %v670 = vpop.xlane.xlu0 %669
        %671 = vmax.xlane.f32.xlu0 %v585
        %v672 = vpop.xlane.xlu0 %671
        %673 = vmax.xlane.f32.xlu0 %v590
        %v674 = vpop.xlane.xlu0 %673
        %675 = vmax.xlane.f32.xlu0 %v595
        %v676 = vpop.xlane.xlu0 %675
        %677 = vmax.xlane.f32.xlu0 %v600
        %v678 = vpop.xlane.xlu0 %677
        %679 = vmax.xlane.f32.xlu0 %v605
        %v680 = vpop.xlane.xlu0 %679
        %681 = vmax.xlane.f32.xlu0 %v610
        %v682 = vpop.xlane.xlu0 %681
        %683 = vmax.xlane.f32.xlu0 %v615
        %v684 = vpop.xlane.xlu0 %683
        %685 = vmax.xlane.f32.xlu0 %v620
        %v686 = vpop.xlane.xlu0 %685
        %v687 = vsub.f32 %v465, %v624
        %v688 = vsub.f32 %v470, %v626
        %v689 = vsub.f32 %v475, %v628
        %v690 = vsub.f32 %v480, %v630
        %v691 = vsub.f32 %v485, %v632
        %v692 = vsub.f32 %v490, %v634
        %v693 = vsub.f32 %v495, %v636
        %v694 = vsub.f32 %v500, %v638
        %v695 = vsub.f32 %v505, %v640
        %v696 = vsub.f32 %v510, %v642
        %v697 = vsub.f32 %v515, %v644
        %v698 = vsub.f32 %v520, %v646
        %v699 = vsub.f32 %v525, %v648
        %v700 = vsub.f32 %v530, %v650
        %v701 = vsub.f32 %v535, %v652
        %v702 = vsub.f32 %v540, %v654
        %v703 = vsub.f32 %v545, %v656
        %v704 = vsub.f32 %v550, %v658
        %v705 = vsub.f32 %v555, %v660
        %v706 = vsub.f32 %v560, %v662
        %v707 = vsub.f32 %v565, %v664
        %v708 = vsub.f32 %v570, %v666
        %v709 = vsub.f32 %v575, %v668
        %v710 = vsub.f32 %v580, %v670
        %v711 = vsub.f32 %v585, %v672
        %v712 = vsub.f32 %v590, %v674
        %v713 = vsub.f32 %v595, %v676
        %v714 = vsub.f32 %v600, %v678
        %v715 = vsub.f32 %v605, %v680
        %v716 = vsub.f32 %v610, %v682
        %v717 = vsub.f32 %v615, %v684
        %v718 = vsub.f32 %v620, %v686
        %v719 = vmul.f32 %v687, 1.442695
        %v720 = vpow.pop %v719
        %v721 = vmul.f32 %v688, 1.442695
        %v722 = vpow.pop %v721
        %v723 = vmul.f32 %v689, 1.442695
        %v724 = vpow.pop %v723
        %v725 = vmul.f32 %v690, 1.442695
        %v726 = vpow.pop %v725
        %v727 = vmul.f32 %v691, 1.442695
        %v728 = vpow.pop %v727
        %v729 = vmul.f32 %v692, 1.442695
        %v730 = vpow.pop %v729
        %v731 = vmul.f32 %v693, 1.442695
        %v732 = vpow.pop %v731
        %v733 = vmul.f32 %v694, 1.442695
        %v734 = vpow.pop %v733
        %v735 = vmul.f32 %v695, 1.442695
        %v736 = vpow.pop %v735
        %v737 = vmul.f32 %v696, 1.442695
        %v738 = vpow.pop %v737
        %v739 = vmul.f32 %v697, 1.442695
        %v740 = vpow.pop %v739
        %v741 = vmul.f32 %v698, 1.442695
        %v742 = vpow.pop %v741
        %v743 = vmul.f32 %v699, 1.442695
        %v744 = vpow.pop %v743
        %v745 = vmul.f32 %v700, 1.442695
        %v746 = vpow.pop %v745
        %v747 = vmul.f32 %v701, 1.442695
        %v748 = vpow.pop %v747
        %v749 = vmul.f32 %v702, 1.442695
        %v750 = vpow.pop %v749
        %v751 = vmul.f32 %v703, 1.442695
        %v752 = vpow.pop %v751
        %v753 = vmul.f32 %v704, 1.442695
        %v754 = vpow.pop %v753
        %v755 = vmul.f32 %v705, 1.442695
        %v756 = vpow.pop %v755
        %v757 = vmul.f32 %v706, 1.442695
        %v758 = vpow.pop %v757
        %v759 = vmul.f32 %v707, 1.442695
        %v760 = vpow.pop %v759
        %v761 = vmul.f32 %v708, 1.442695
        %v762 = vpow.pop %v761
        %v763 = vmul.f32 %v709, 1.442695
        %v764 = vpow.pop %v763
        %v765 = vmul.f32 %v710, 1.442695
        %v766 = vpow.pop %v765
        %v767 = vmul.f32 %v711, 1.442695
        %v768 = vpow.pop %v767
        %v769 = vmul.f32 %v712, 1.442695
        %v770 = vpow.pop %v769
        %v771 = vmul.f32 %v713, 1.442695
        %v772 = vpow.pop %v771
        %v773 = vmul.f32 %v714, 1.442695
        %v774 = vpow.pop %v773
        %v775 = vmul.f32 %v715, 1.442695
        %v776 = vpow.pop %v775
        %v777 = vmul.f32 %v716, 1.442695
        %v778 = vpow.pop %v777
        %v779 = vmul.f32 %v717, 1.442695
        %v780 = vpow.pop %v779
        %v781 = vmul.f32 %v718, 1.442695
        %v782 = vpow.pop %v781
        %783 = vadd.xlane.f32.xlu0 %v720
        %v784 = vpop.xlane.xlu0 %783
        %785 = vadd.xlane.f32.xlu0 %v722
        %v786 = vpop.xlane.xlu0 %785
        %787 = vadd.xlane.f32.xlu0 %v724
        %v788 = vpop.xlane.xlu0 %787
        %789 = vadd.xlane.f32.xlu0 %v726
        %v790 = vpop.xlane.xlu0 %789
        %791 = vadd.xlane.f32.xlu0 %v728
        %v792 = vpop.xlane.xlu0 %791
        %793 = vadd.xlane.f32.xlu0 %v730
        %v794 = vpop.xlane.xlu0 %793
        %795 = vadd.xlane.f32.xlu0 %v732
        %v796 = vpop.xlane.xlu0 %795
        %797 = vadd.xlane.f32.xlu0 %v734
        %v798 = vpop.xlane.xlu0 %797
        %799 = vadd.xlane.f32.xlu0 %v736
        %v800 = vpop.xlane.xlu0 %799
        %801 = vadd.xlane.f32.xlu0 %v738
        %v802 = vpop.xlane.xlu0 %801
        %803 = vadd.xlane.f32.xlu0 %v740
        %v804 = vpop.xlane.xlu0 %803
        %805 = vadd.xlane.f32.xlu0 %v742
        %v806 = vpop.xlane.xlu0 %805
        %807 = vadd.xlane.f32.xlu0 %v744
        %v808 = vpop.xlane.xlu0 %807
        %809 = vadd.xlane.f32.xlu0 %v746
        %v810 = vpop.xlane.xlu0 %809
        %811 = vadd.xlane.f32.xlu0 %v748
        %v812 = vpop.xlane.xlu0 %811
        %813 = vadd.xlane.f32.xlu0 %v750
        %v814 = vpop.xlane.xlu0 %813
        %815 = vadd.xlane.f32.xlu0 %v752
        %v816 = vpop.xlane.xlu0 %815
        %817 = vadd.xlane.f32.xlu0 %v754
        %v818 = vpop.xlane.xlu0 %817
        %819 = vadd.xlane.f32.xlu0 %v756
        %v820 = vpop.xlane.xlu0 %819
        %821 = vadd.xlane.f32.xlu0 %v758
        %v822 = vpop.xlane.xlu0 %821
        %823 = vadd.xlane.f32.xlu0 %v760
        %v824 = vpop.xlane.xlu0 %823
        %825 = vadd.xlane.f32.xlu0 %v762
        %v826 = vpop.xlane.xlu0 %825
        %827 = vadd.xlane.f32.xlu0 %v764
        %v828 = vpop.xlane.xlu0 %827
        %829 = vadd.xlane.f32.xlu0 %v766
        %v830 = vpop.xlane.xlu0 %829
        %831 = vadd.xlane.f32.xlu0 %v768
        %v832 = vpop.xlane.xlu0 %831
        %833 = vadd.xlane.f32.xlu0 %v770
        %v834 = vpop.xlane.xlu0 %833
        %835 = vadd.xlane.f32.xlu0 %v772
        %v836 = vpop.xlane.xlu0 %835
        %837 = vadd.xlane.f32.xlu0 %v774
        %v838 = vpop.xlane.xlu0 %837
        %839 = vadd.xlane.f32.xlu0 %v776
        %v840 = vpop.xlane.xlu0 %839
        %841 = vadd.xlane.f32.xlu0 %v778
        %v842 = vpop.xlane.xlu0 %841
        %843 = vadd.xlane.f32.xlu0 %v780
        %v844 = vpop.xlane.xlu0 %843
        %845 = vadd.xlane.f32.xlu0 %v782
        %v846 = vpop.xlane.xlu0 %845
        %v847 = vrcp.pop %v784
        %v848 = vrcp.pop %v786
        %v849 = vrcp.pop %v788
        %v850 = vrcp.pop %v790
        %v851 = vrcp.pop %v792
        %v852 = vrcp.pop %v794
        %v853 = vrcp.pop %v796
        %v854 = vrcp.pop %v798
        %v855 = vrcp.pop %v800
        %v856 = vrcp.pop %v802
        %v857 = vrcp.pop %v804
        %v858 = vrcp.pop %v806
        %v859 = vrcp.pop %v808
        %v860 = vrcp.pop %v810
        %v861 = vrcp.pop %v812
        %v862 = vrcp.pop %v814
        %v863 = vrcp.pop %v816
        %v864 = vrcp.pop %v818
        %v865 = vrcp.pop %v820
        %v866 = vrcp.pop %v822
        %v867 = vrcp.pop %v824
        %v868 = vrcp.pop %v826
        %v869 = vrcp.pop %v828
        %v870 = vrcp.pop %v830
        %v871 = vrcp.pop %v832
        %v872 = vrcp.pop %v834
        %v873 = vrcp.pop %v836
        %v874 = vrcp.pop %v838
        %v875 = vrcp.pop %v840
        %v876 = vrcp.pop %v842
        %v877 = vrcp.pop %v844
        %v878 = vrcp.pop %v846
        %v879 = vmul.f32 %v784, %v847
        %v880 = vmul.f32 %v786, %v848
        %v881 = vmul.f32 %v788, %v849
        %v882 = vmul.f32 %v790, %v850
        %v883 = vmul.f32 %v792, %v851
        %v884 = vmul.f32 %v794, %v852
        %v885 = vmul.f32 %v796, %v853
        %v886 = vmul.f32 %v798, %v854
        %v887 = vmul.f32 %v800, %v855
        %v888 = vmul.f32 %v802, %v856
        %v889 = vmul.f32 %v804, %v857
        %v890 = vmul.f32 %v806, %v858
        %v891 = vmul.f32 %v808, %v859
        %v892 = vmul.f32 %v810, %v860
        %v893 = vmul.f32 %v812, %v861
        %v894 = vmul.f32 %v814, %v862
        %v895 = vmul.f32 %v816, %v863
        %v896 = vmul.f32 %v818, %v864
        %v897 = vmul.f32 %v820, %v865
        %v898 = vmul.f32 %v822, %v866
        %v899 = vmul.f32 %v824, %v867
        %v900 = vmul.f32 %v826, %v868
        %v901 = vmul.f32 %v828, %v869
        %v902 = vmul.f32 %v830, %v870
        %v903 = vmul.f32 %v832, %v871
        %v904 = vmul.f32 %v834, %v872
        %v905 = vmul.f32 %v836, %v873
        %v906 = vmul.f32 %v838, %v874
        %v907 = vmul.f32 %v840, %v875
        %v908 = vmul.f32 %v842, %v876
        %v909 = vmul.f32 %v844, %v877
        %v910 = vmul.f32 %v846, %v878
        %v911 = vsub.f32 2.0, %v879
        %v912 = vsub.f32 2.0, %v880
        %v913 = vsub.f32 2.0, %v881
        %v914 = vsub.f32 2.0, %v882
        %v915 = vsub.f32 2.0, %v883
        %v916 = vsub.f32 2.0, %v884
        %v917 = vsub.f32 2.0, %v885
        %v918 = vsub.f32 2.0, %v886
        %v919 = vsub.f32 2.0, %v887
        %v920 = vsub.f32 2.0, %v888
        %v921 = vsub.f32 2.0, %v889
        %v922 = vsub.f32 2.0, %v890
        %v923 = vsub.f32 2.0, %v891
        %v924 = vsub.f32 2.0, %v892
        %v925 = vsub.f32 2.0, %v893
        %v926 = vsub.f32 2.0, %v894
        %v927 = vsub.f32 2.0, %v895
        %v928 = vsub.f32 2.0, %v896
        %v929 = vsub.f32 2.0, %v897
        %v930 = vsub.f32 2.0, %v898
        %v931 = vsub.f32 2.0, %v899
        %v932 = vsub.f32 2.0, %v900
        %v933 = vsub.f32 2.0, %v901
        %v934 = vsub.f32 2.0, %v902
        %v935 = vsub.f32 2.0, %v903
        %v936 = vsub.f32 2.0, %v904
        %v937 = vsub.f32 2.0, %v905
        %v938 = vsub.f32 2.0, %v906
        %v939 = vsub.f32 2.0, %v907
        %v940 = vsub.f32 2.0, %v908
        %v941 = vsub.f32 2.0, %v909
        %v942 = vsub.f32 2.0, %v910
        %v943 = vmul.f32 %v847, %v911
        %v944 = vmul.f32 %v848, %v912
        %v945 = vmul.f32 %v849, %v913
        %v946 = vmul.f32 %v850, %v914
        %v947 = vmul.f32 %v851, %v915
        %v948 = vmul.f32 %v852, %v916
        %v949 = vmul.f32 %v853, %v917
        %v950 = vmul.f32 %v854, %v918
        %v951 = vmul.f32 %v855, %v919
        %v952 = vmul.f32 %v856, %v920
        %v953 = vmul.f32 %v857, %v921
        %v954 = vmul.f32 %v858, %v922
        %v955 = vmul.f32 %v859, %v923
        %v956 = vmul.f32 %v860, %v924
        %v957 = vmul.f32 %v861, %v925
        %v958 = vmul.f32 %v862, %v926
        %v959 = vmul.f32 %v863, %v927
        %v960 = vmul.f32 %v864, %v928
        %v961 = vmul.f32 %v865, %v929
        %v962 = vmul.f32 %v866, %v930
        %v963 = vmul.f32 %v867, %v931
        %v964 = vmul.f32 %v868, %v932
        %v965 = vmul.f32 %v869, %v933
        %v966 = vmul.f32 %v870, %v934
        %v967 = vmul.f32 %v871, %v935
        %v968 = vmul.f32 %v872, %v936
        %v969 = vmul.f32 %v873, %v937
        %v970 = vmul.f32 %v874, %v938
        %v971 = vmul.f32 %v875, %v939
        %v972 = vmul.f32 %v876, %v940
        %v973 = vmul.f32 %v877, %v941
        %v974 = vmul.f32 %v878, %v942
        %v975 = vmul.f32 %v720, %v943
        %v976 = vmul.f32 %v722, %v944
        %v977 = vmul.f32 %v724, %v945
        %v978 = vmul.f32 %v726, %v946
        %v979 = vmul.f32 %v728, %v947
        %v980 = vmul.f32 %v730, %v948
        %v981 = vmul.f32 %v732, %v949
        %v982 = vmul.f32 %v734, %v950
        %v983 = vmul.f32 %v736, %v951
        %v984 = vmul.f32 %v738, %v952
        %v985 = vmul.f32 %v740, %v953
        %v986 = vmul.f32 %v742, %v954
        %v987 = vmul.f32 %v744, %v955
        %v988 = vmul.f32 %v746, %v956
        %v989 = vmul.f32 %v748, %v957
        %v990 = vmul.f32 %v750, %v958
        %v991 = vmul.f32 %v752, %v959
        %v992 = vmul.f32 %v754, %v960
        %v993 = vmul.f32 %v756, %v961
        %v994 = vmul.f32 %v758, %v962
        %v995 = vmul.f32 %v760, %v963
        %v996 = vmul.f32 %v762, %v964
        %v997 = vmul.f32 %v764, %v965
        %v998 = vmul.f32 %v766, %v966
        %v999 = vmul.f32 %v768, %v967
        %v1000 = vmul.f32 %v770, %v968
        %v1001 = vmul.f32 %v772, %v969
        %v1002 = vmul.f32 %v774, %v970
        %v1003 = vmul.f32 %v776, %v971
        %v1004 = vmul.f32 %v778, %v972
        %v1005 = vmul.f32 %v780, %v973
        %v1006 = vmul.f32 %v782, %v974
        %v1007 = vld [vmem:[%s2] sm:$0xff]
        %v1008 = vld [vmem:[%s2 + $0x8] sm:$0xff]
        %v1009 = vld [vmem:[%s2 + $0x10] sm:$0xff]
        %v1010 = vld [vmem:[%s2 + $0x18] sm:$0xff]
        %v1011 = vld [vmem:[%s2 + $0x20] sm:$0xff]
        %v1012 = vld [vmem:[%s2 + $0x28] sm:$0xff]
        %v1013 = vld [vmem:[%s2 + $0x30] sm:$0xff]
        %v1014 = vld [vmem:[%s2 + $0x38] sm:$0xff]
        %v1015 = vld [vmem:[%s2 + $0x40] sm:$0xff]
        %v1016 = vld [vmem:[%s2 + $0x48] sm:$0xff]
        %v1017 = vld [vmem:[%s2 + $0x50] sm:$0xff]
        %v1018 = vld [vmem:[%s2 + $0x58] sm:$0xff]
        %v1019 = vld [vmem:[%s2 + $0x60] sm:$0xff]
        %v1020 = vld [vmem:[%s2 + $0x68] sm:$0xff]
        %v1021 = vld [vmem:[%s2 + $0x70] sm:$0xff]
        %v1022 = vld [vmem:[%s2 + $0x78] sm:$0xff]
        %v1023 = vlaneseq
        %v1024 = vshrl.u32 %v1023, 7
        %v1025 = vsub.s32 1, %v1024
        %v1026 = vrot.slane %v202, %v1025
        %1027 = vmatprep.subr.mxu0 0.0
        %1028 = vmatpush1.msra.mxu0 %v1007
        %1029 = vmatprep.subr.mxu0 0.0
        %1030 = vmatpush1.msra.mxu0 %v1008
        %1031 = vmatprep.subr.mxu0 0.0
        %1032 = vmatpush1.msra.mxu0 %v1009
        %1033 = vmatprep.subr.mxu0 0.0
        %1034 = vmatpush1.msra.mxu0 %v1010
        %1035 = vmatprep.subr.mxu0 0.0
        %1036 = vmatpush1.msra.mxu0 %v1011
        %1037 = vmatprep.subr.mxu0 0.0
        %1038 = vmatpush1.msra.mxu0 %v1012
        %1039 = vmatprep.subr.mxu0 0.0
        %1040 = vmatpush1.msra.mxu0 %v1013
        %1041 = vmatprep.subr.mxu0 0.0
        %1042 = vmatpush1.msra.mxu0 %v1014
        %1043 = vmatprep.subr.mxu0 0.0
        %1044 = vmatpush1.msra.mxu0 %v1015
        %1045 = vmatprep.subr.mxu0 0.0
        %1046 = vmatpush1.msra.mxu0 %v1016
        %1047 = vmatprep.subr.mxu0 0.0
        %1048 = vmatpush1.msra.mxu0 %v1017
        %1049 = vmatprep.subr.mxu0 0.0
        %1050 = vmatpush1.msra.mxu0 %v1018
        %1051 = vmatprep.subr.mxu0 0.0
        %1052 = vmatpush1.msra.mxu0 %v1019
        %1053 = vmatprep.subr.mxu0 0.0
        %1054 = vmatpush1.msra.mxu0 %v1020
        %1055 = vmatprep.subr.mxu0 0.0
        %1056 = vmatpush1.msra.mxu0 %v1021
        %1057 = vmatprep.subr.mxu0 0.0
        %1058 = vmatpush1.msra.mxu0 %v1022
        %1059 = vmatprep.subr.mxu0 0.0
        %1060 = vmatpush1.msra.mxu0 0.0
        %1061 = vmatprep.subr.mxu0 0.0
        %1062 = vmatpush1.msra.mxu0 0.0
        %1063 = vmatprep.subr.mxu0 0.0
        %1064 = vmatpush1.msra.mxu0 0.0
        %1065 = vmatprep.subr.mxu0 0.0
        %1066 = vmatpush1.msra.mxu0 0.0
        %1067 = vmatprep.subr.mxu0 0.0
        %1068 = vmatpush1.msra.mxu0 0.0
        %1069 = vmatprep.subr.mxu0 0.0
        %1070 = vmatpush1.msra.mxu0 0.0
        %1071 = vmatprep.subr.mxu0 0.0
        %1072 = vmatpush1.msra.mxu0 0.0
        %1073 = vmatprep.subr.mxu0 0.0
        %1074 = vmatpush1.msra.mxu0 0.0
        %1075 = vmatprep.subr.mxu0 0.0
        %1076 = vmatpush1.msra.mxu0 0.0
        %1077 = vmatprep.subr.mxu0 0.0
        %1078 = vmatpush1.msra.mxu0 0.0
        %1079 = vmatprep.subr.mxu0 0.0
        %1080 = vmatpush1.msra.mxu0 0.0
        %1081 = vmatprep.subr.mxu0 0.0
        %1082 = vmatpush1.msra.mxu0 0.0
        %1083 = vmatprep.subr.mxu0 0.0
        %1084 = vmatpush1.msra.mxu0 0.0
        %1085 = vmatprep.subr.mxu0 0.0
        %1086 = vmatpush1.msra.mxu0 0.0
        %1087 = vmatprep.subr.mxu0 0.0
        %1088 = vmatpush1.msra.mxu0 0.0
        %1089 = vmatprep.subr.mxu0 0.0
        %1090 = vmatpush1.msra.mxu0 0.0
        %1091 = vmatprep.mubr.f32.mxu0 0.0
        %1092 = vmatmul.mubr.f32.gmra.mrb[0].mxu0 %v975
        %v1093 = vpop.f32.mrb[0].mxu0
        %v1094 = vadd.f32 %v1026, %v1093
        %v1095 = vpop.f32.mrb[0].mxu0
        %1096 = vmatprep.mubr.f32.mxu0 0.0
        %1097 = vmatmul.mubr.f32.gmra.mrb[0].mxu0 %v976
        %v1098 = vpop.f32.mrb[0].mxu0
        %v1099 = vadd.f32 %v1026, %v1098
        %v1100 = vpop.f32.mrb[0].mxu0
        %1101 = vmatprep.mubr.f32.mxu0 0.0
        %1102 = vmatmul.mubr.f32.gmra.mrb[0].mxu0 %v977
        %v1103 = vpop.f32.mrb[0].mxu0
        %v1104 = vadd.f32 %v1026, %v1103
        %v1105 = vpop.f32.mrb[0].mxu0
        %1106 = vmatprep.mubr.f32.mxu0 0.0
        %1107 = vmatmul.mubr.f32.gmra.mrb[0].mxu0 %v978
        %v1108 = vpop.f32.mrb[0].mxu0
        %v1109 = vadd.f32 %v1026, %v1108
        %v1110 = vpop.f32.mrb[0].mxu0
        %1111 = vmatprep.mubr.f32.mxu0 0.0
        %1112 = vmatmul.mubr.f32.gmra.mrb[0].mxu0 %v979
        %v1113 = vpop.f32.mrb[0].mxu0
        %v1114 = vadd.f32 %v1026, %v1113
        %v1115 = vpop.f32.mrb[0].mxu0
        %1116 = vmatprep.mubr.f32.mxu0 0.0
        %1117 = vmatmul.mubr.f32.gmra.mrb[0].mxu0 %v980
        %v1118 = vpop.f32.mrb[0].mxu0
        %v1119 = vadd.f32 %v1026, %v1118
        %v1120 = vpop.f32.mrb[0].mxu0
        %1121 = vmatprep.mubr.f32.mxu0 0.0
        %1122 = vmatmul.mubr.f32.gmra.mrb[0].mxu0 %v981
        %v1123 = vpop.f32.mrb[0].mxu0
        %v1124 = vadd.f32 %v1026, %v1123
        %v1125 = vpop.f32.mrb[0].mxu0
        %1126 = vmatprep.mubr.f32.mxu0 0.0
        %1127 = vmatmul.mubr.f32.gmra.mrb[0].mxu0 %v982
        %v1128 = vpop.f32.mrb[0].mxu0
        %v1129 = vadd.f32 %v1026, %v1128
        %v1130 = vpop.f32.mrb[0].mxu0
        %1131 = vmatprep.mubr.f32.mxu0 0.0
        %1132 = vmatmul.mubr.f32.gmra.mrb[0].mxu0 %v983
        %v1133 = vpop.f32.mrb[0].mxu0
        %v1134 = vadd.f32 %v1026, %v1133
        %v1135 = vpop.f32.mrb[0].mxu0
        %1136 = vmatprep.mubr.f32.mxu0 0.0
        %1137 = vmatmul.mubr.f32.gmra.mrb[0].mxu0 %v984
        %v1138 = vpop.f32.mrb[0].mxu0
        %v1139 = vadd.f32 %v1026, %v1138
        %v1140 = vpop.f32.mrb[0].mxu0
        %1141 = vmatprep.mubr.f32.mxu0 0.0
        %1142 = vmatmul.mubr.f32.gmra.mrb[0].mxu0 %v985
        %v1143 = vpop.f32.mrb[0].mxu0
        %v1144 = vadd.f32 %v1026, %v1143
        %v1145 = vpop.f32.mrb[0].mxu0
        %1146 = vmatprep.mubr.f32.mxu0 0.0
        %1147 = vmatmul.mubr.f32.gmra.mrb[0].mxu0 %v986
        %v1148 = vpop.f32.mrb[0].mxu0
        %v1149 = vadd.f32 %v1026, %v1148
        %v1150 = vpop.f32.mrb[0].mxu0
        %1151 = vmatprep.mubr.f32.mxu0 0.0
        %1152 = vmatmul.mubr.f32.gmra.mrb[0].mxu0 %v987
        %v1153 = vpop.f32.mrb[0].mxu0
        %v1154 = vadd.f32 %v1026, %v1153
        %v1155 = vpop.f32.mrb[0].mxu0
        %1156 = vmatprep.mubr.f32.mxu0 0.0
        %1157 = vmatmul.mubr.f32.gmra.mrb[0].mxu0 %v988
        %v1158 = vpop.f32.mrb[0].mxu0
        %v1159 = vadd.f32 %v1026, %v1158
        %v1160 = vpop.f32.mrb[0].mxu0
        %1161 = vmatprep.mubr.f32.mxu0 0.0
        %1162 = vmatmul.mubr.f32.gmra.mrb[0].mxu0 %v989
        %v1163 = vpop.f32.mrb[0].mxu0
        %v1164 = vadd.f32 %v1026, %v1163
        %v1165 = vpop.f32.mrb[0].mxu0
        %1166 = vmatprep.mubr.f32.mxu0 0.0
        %1167 = vmatmul.mubr.f32.gmra.mrb[0].mxu0 %v990
        %v1168 = vpop.f32.mrb[0].mxu0
        %v1169 = vadd.f32 %v1026, %v1168
        %v1170 = vpop.f32.mrb[0].mxu0
        %1171 = vmatprep.mubr.f32.mxu0 0.0
        %1172 = vmatmul.mubr.f32.gmra.mrb[0].mxu0 %v991
        %v1173 = vpop.f32.mrb[0].mxu0
        %v1174 = vadd.f32 %v1026, %v1173
        %v1175 = vpop.f32.mrb[0].mxu0
        %1176 = vmatprep.mubr.f32.mxu0 0.0
        %1177 = vmatmul.mubr.f32.gmra.mrb[0].mxu0 %v992
        %v1178 = vpop.f32.mrb[0].mxu0
        %v1179 = vadd.f32 %v1026, %v1178
        %v1180 = vpop.f32.mrb[0].mxu0
        %1181 = vmatprep.mubr.f32.mxu0 0.0
        %1182 = vmatmul.mubr.f32.gmra.mrb[0].mxu0 %v993
        %v1183 = vpop.f32.mrb[0].mxu0
        %v1184 = vadd.f32 %v1026, %v1183
        %v1185 = vpop.f32.mrb[0].mxu0
        %1186 = vmatprep.mubr.f32.mxu0 0.0
        %1187 = vmatmul.mubr.f32.gmra.mrb[0].mxu0 %v994
        %v1188 = vpop.f32.mrb[0].mxu0
        %v1189 = vadd.f32 %v1026, %v1188
        %v1190 = vpop.f32.mrb[0].mxu0
        %1191 = vmatprep.mubr.f32.mxu0 0.0
        %1192 = vmatmul.mubr.f32.gmra.mrb[0].mxu0 %v995
        %v1193 = vpop.f32.mrb[0].mxu0
        %v1194 = vadd.f32 %v1026, %v1193
        %v1195 = vpop.f32.mrb[0].mxu0
        %1196 = vmatprep.mubr.f32.mxu0 0.0
        %1197 = vmatmul.mubr.f32.gmra.mrb[0].mxu0 %v996
        %v1198 = vpop.f32.mrb[0].mxu0
        %v1199 = vadd.f32 %v1026, %v1198
        %v1200 = vpop.f32.mrb[0].mxu0
        %1201 = vmatprep.mubr.f32.mxu0 0.0
        %1202 = vmatmul.mubr.f32.gmra.mrb[0].mxu0 %v997
        %v1203 = vpop.f32.mrb[0].mxu0
        %v1204 = vadd.f32 %v1026, %v1203
        %v1205 = vpop.f32.mrb[0].mxu0
        %1206 = vmatprep.mubr.f32.mxu0 0.0
        %1207 = vmatmul.mubr.f32.gmra.mrb[0].mxu0 %v998
        %v1208 = vpop.f32.mrb[0].mxu0
        %v1209 = vadd.f32 %v1026, %v1208
        %v1210 = vpop.f32.mrb[0].mxu0
        %1211 = vmatprep.mubr.f32.mxu0 0.0
        %1212 = vmatmul.mubr.f32.gmra.mrb[0].mxu0 %v999
        %v1213 = vpop.f32.mrb[0].mxu0
        %v1214 = vadd.f32 %v1026, %v1213
        %v1215 = vpop.f32.mrb[0].mxu0
        %1216 = vmatprep.mubr.f32.mxu0 0.0
        %1217 = vmatmul.mubr.f32.gmra.mrb[0].mxu0 %v1000
        %v1218 = vpop.f32.mrb[0].mxu0
        %v1219 = vadd.f32 %v1026, %v1218
        %v1220 = vpop.f32.mrb[0].mxu0
        %1221 = vmatprep.mubr.f32.mxu0 0.0
        %1222 = vmatmul.mubr.f32.gmra.mrb[0].mxu0 %v1001
        %v1223 = vpop.f32.mrb[0].mxu0
        %v1224 = vadd.f32 %v1026, %v1223
        %v1225 = vpop.f32.mrb[0].mxu0
        %1226 = vmatprep.mubr.f32.mxu0 0.0
        %1227 = vmatmul.mubr.f32.gmra.mrb[0].mxu0 %v1002
        %v1228 = vpop.f32.mrb[0].mxu0
        %v1229 = vadd.f32 %v1026, %v1228
        %v1230 = vpop.f32.mrb[0].mxu0
        %1231 = vmatprep.mubr.f32.mxu0 0.0
        %1232 = vmatmul.mubr.f32.gmra.mrb[0].mxu0 %v1003
        %v1233 = vpop.f32.mrb[0].mxu0
        %v1234 = vadd.f32 %v1026, %v1233
        %v1235 = vpop.f32.mrb[0].mxu0
        %1236 = vmatprep.mubr.f32.mxu0 0.0
        %1237 = vmatmul.mubr.f32.gmra.mrb[0].mxu0 %v1004
        %v1238 = vpop.f32.mrb[0].mxu0
        %v1239 = vadd.f32 %v1026, %v1238
        %v1240 = vpop.f32.mrb[0].mxu0
        %1241 = vmatprep.mubr.f32.mxu0 0.0
        %1242 = vmatmul.mubr.f32.gmra.mrb[0].mxu0 %v1005
        %v1243 = vpop.f32.mrb[0].mxu0
        %v1244 = vadd.f32 %v1026, %v1243
        %v1245 = vpop.f32.mrb[0].mxu0
        %1246 = vmatprep.mubr.f32.mxu0 0.0
        %1247 = vmatmul.mubr.f32.gmra.mrb[0].mxu0 %v1006
        %v1248 = vpop.f32.mrb[0].mxu0
        %v1249 = vadd.f32 %v1026, %v1248
        %v1250 = vpop.f32.mrb[0].mxu0
        %1251 = vdwg.mxu0
        %1252 = vmax.xlane.f32.xlu0 %v1094
        %v1253 = vpop.xlane.xlu0 %1252
        %1254 = vmax.xlane.f32.xlu0 %v1099
        %v1255 = vpop.xlane.xlu0 %1254
        %1256 = vmax.xlane.f32.xlu0 %v1104
        %v1257 = vpop.xlane.xlu0 %1256
        %1258 = vmax.xlane.f32.xlu0 %v1109
        %v1259 = vpop.xlane.xlu0 %1258
        %1260 = vmax.xlane.f32.xlu0 %v1114
        %v1261 = vpop.xlane.xlu0 %1260
        %1262 = vmax.xlane.f32.xlu0 %v1119
        %v1263 = vpop.xlane.xlu0 %1262
        %1264 = vmax.xlane.f32.xlu0 %v1124
        %v1265 = vpop.xlane.xlu0 %1264
        %1266 = vmax.xlane.f32.xlu0 %v1129
        %v1267 = vpop.xlane.xlu0 %1266
        %1268 = vmax.xlane.f32.xlu0 %v1134
        %v1269 = vpop.xlane.xlu0 %1268
        %1270 = vmax.xlane.f32.xlu0 %v1139
        %v1271 = vpop.xlane.xlu0 %1270
        %1272 = vmax.xlane.f32.xlu0 %v1144
        %v1273 = vpop.xlane.xlu0 %1272
        %1274 = vmax.xlane.f32.xlu0 %v1149
        %v1275 = vpop.xlane.xlu0 %1274
        %1276 = vmax.xlane.f32.xlu0 %v1154
        %v1277 = vpop.xlane.xlu0 %1276
        %1278 = vmax.xlane.f32.xlu0 %v1159
        %v1279 = vpop.xlane.xlu0 %1278
        %1280 = vmax.xlane.f32.xlu0 %v1164
        %v1281 = vpop.xlane.xlu0 %1280
        %1282 = vmax.xlane.f32.xlu0 %v1169
        %v1283 = vpop.xlane.xlu0 %1282
        %1284 = vmax.xlane.f32.xlu0 %v1174
        %v1285 = vpop.xlane.xlu0 %1284
        %1286 = vmax.xlane.f32.xlu0 %v1179
        %v1287 = vpop.xlane.xlu0 %1286
        %1288 = vmax.xlane.f32.xlu0 %v1184
        %v1289 = vpop.xlane.xlu0 %1288
        %1290 = vmax.xlane.f32.xlu0 %v1189
        %v1291 = vpop.xlane.xlu0 %1290
        %1292 = vmax.xlane.f32.xlu0 %v1194
        %v1293 = vpop.xlane.xlu0 %1292
        %1294 = vmax.xlane.f32.xlu0 %v1199
        %v1295 = vpop.xlane.xlu0 %1294
        %1296 = vmax.xlane.f32.xlu0 %v1204
        %v1297 = vpop.xlane.xlu0 %1296
        %1298 = vmax.xlane.f32.xlu0 %v1209
        %v1299 = vpop.xlane.xlu0 %1298
        %1300 = vmax.xlane.f32.xlu0 %v1214
        %v1301 = vpop.xlane.xlu0 %1300
        %1302 = vmax.xlane.f32.xlu0 %v1219
        %v1303 = vpop.xlane.xlu0 %1302
        %1304 = vmax.xlane.f32.xlu0 %v1224
        %v1305 = vpop.xlane.xlu0 %1304
        %1306 = vmax.xlane.f32.xlu0 %v1229
        %v1307 = vpop.xlane.xlu0 %1306
        %1308 = vmax.xlane.f32.xlu0 %v1234
        %v1309 = vpop.xlane.xlu0 %1308
        %1310 = vmax.xlane.f32.xlu0 %v1239
        %v1311 = vpop.xlane.xlu0 %1310
        %1312 = vmax.xlane.f32.xlu0 %v1244
        %v1313 = vpop.xlane.xlu0 %1312
        %1314 = vmax.xlane.f32.xlu0 %v1249
        %v1315 = vpop.xlane.xlu0 %1314
        %v1316 = vsub.f32 %v1094, %v1253
        %v1317 = vsub.f32 %v1099, %v1255
        %v1318 = vsub.f32 %v1104, %v1257
        %v1319 = vsub.f32 %v1109, %v1259
        %v1320 = vsub.f32 %v1114, %v1261
        %v1321 = vsub.f32 %v1119, %v1263
        %v1322 = vsub.f32 %v1124, %v1265
        %v1323 = vsub.f32 %v1129, %v1267
        %v1324 = vsub.f32 %v1134, %v1269
        %v1325 = vsub.f32 %v1139, %v1271
        %v1326 = vsub.f32 %v1144, %v1273
        %v1327 = vsub.f32 %v1149, %v1275
        %v1328 = vsub.f32 %v1154, %v1277
        %v1329 = vsub.f32 %v1159, %v1279
        %v1330 = vsub.f32 %v1164, %v1281
        %v1331 = vsub.f32 %v1169, %v1283
        %v1332 = vsub.f32 %v1174, %v1285
        %v1333 = vsub.f32 %v1179, %v1287
        %v1334 = vsub.f32 %v1184, %v1289
        %v1335 = vsub.f32 %v1189, %v1291
        %v1336 = vsub.f32 %v1194, %v1293
        %v1337 = vsub.f32 %v1199, %v1295
        %v1338 = vsub.f32 %v1204, %v1297
        %v1339 = vsub.f32 %v1209, %v1299
        %v1340 = vsub.f32 %v1214, %v1301
        %v1341 = vsub.f32 %v1219, %v1303
        %v1342 = vsub.f32 %v1224, %v1305
        %v1343 = vsub.f32 %v1229, %v1307
        %v1344 = vsub.f32 %v1234, %v1309
        %v1345 = vsub.f32 %v1239, %v1311
        %v1346 = vsub.f32 %v1244, %v1313
        %v1347 = vsub.f32 %v1249, %v1315
        %v1348 = vmul.f32 %v1316, 1.442695
        %v1349 = vpow.pop %v1348
        %v1350 = vmul.f32 %v1317, 1.442695
        %v1351 = vpow.pop %v1350
        %v1352 = vmul.f32 %v1318, 1.442695
        %v1353 = vpow.pop %v1352
        %v1354 = vmul.f32 %v1319, 1.442695
        %v1355 = vpow.pop %v1354
        %v1356 = vmul.f32 %v1320, 1.442695
        %v1357 = vpow.pop %v1356
        %v1358 = vmul.f32 %v1321, 1.442695
        %v1359 = vpow.pop %v1358
        %v1360 = vmul.f32 %v1322, 1.442695
        %v1361 = vpow.pop %v1360
        %v1362 = vmul.f32 %v1323, 1.442695
        %v1363 = vpow.pop %v1362
        %v1364 = vmul.f32 %v1324, 1.442695
        %v1365 = vpow.pop %v1364
        %v1366 = vmul.f32 %v1325, 1.442695
        %v1367 = vpow.pop %v1366
        %v1368 = vmul.f32 %v1326, 1.442695
        %v1369 = vpow.pop %v1368
        %v1370 = vmul.f32 %v1327, 1.442695
        %v1371 = vpow.pop %v1370
        %v1372 = vmul.f32 %v1328, 1.442695
        %v1373 = vpow.pop %v1372
        %v1374 = vmul.f32 %v1329, 1.442695
        %v1375 = vpow.pop %v1374
        %v1376 = vmul.f32 %v1330, 1.442695
        %v1377 = vpow.pop %v1376
        %v1378 = vmul.f32 %v1331, 1.442695
        %v1379 = vpow.pop %v1378
        %v1380 = vmul.f32 %v1332, 1.442695
        %v1381 = vpow.pop %v1380
        %v1382 = vmul.f32 %v1333, 1.442695
        %v1383 = vpow.pop %v1382
        %v1384 = vmul.f32 %v1334, 1.442695
        %v1385 = vpow.pop %v1384
        %v1386 = vmul.f32 %v1335, 1.442695
        %v1387 = vpow.pop %v1386
        %v1388 = vmul.f32 %v1336, 1.442695
        %v1389 = vpow.pop %v1388
        %v1390 = vmul.f32 %v1337, 1.442695
        %v1391 = vpow.pop %v1390
        %v1392 = vmul.f32 %v1338, 1.442695
        %v1393 = vpow.pop %v1392
        %v1394 = vmul.f32 %v1339, 1.442695
        %v1395 = vpow.pop %v1394
        %v1396 = vmul.f32 %v1340, 1.442695
        %v1397 = vpow.pop %v1396
        %v1398 = vmul.f32 %v1341, 1.442695
        %v1399 = vpow.pop %v1398
        %v1400 = vmul.f32 %v1342, 1.442695
        %v1401 = vpow.pop %v1400
        %v1402 = vmul.f32 %v1343, 1.442695
        %v1403 = vpow.pop %v1402
        %v1404 = vmul.f32 %v1344, 1.442695
        %v1405 = vpow.pop %v1404
        %v1406 = vmul.f32 %v1345, 1.442695
        %v1407 = vpow.pop %v1406
        %v1408 = vmul.f32 %v1346, 1.442695
        %v1409 = vpow.pop %v1408
        %v1410 = vmul.f32 %v1347, 1.442695
        %v1411 = vpow.pop %v1410
        %1412 = vadd.xlane.f32.xlu0 %v1349
        %v1413 = vpop.xlane.xlu0 %1412
        %1414 = vadd.xlane.f32.xlu0 %v1351
        %v1415 = vpop.xlane.xlu0 %1414
        %1416 = vadd.xlane.f32.xlu0 %v1353
        %v1417 = vpop.xlane.xlu0 %1416
        %1418 = vadd.xlane.f32.xlu0 %v1355
        %v1419 = vpop.xlane.xlu0 %1418
        %1420 = vadd.xlane.f32.xlu0 %v1357
        %v1421 = vpop.xlane.xlu0 %1420
        %1422 = vadd.xlane.f32.xlu0 %v1359
        %v1423 = vpop.xlane.xlu0 %1422
        %1424 = vadd.xlane.f32.xlu0 %v1361
        %v1425 = vpop.xlane.xlu0 %1424
        %1426 = vadd.xlane.f32.xlu0 %v1363
        %v1427 = vpop.xlane.xlu0 %1426
        %1428 = vadd.xlane.f32.xlu0 %v1365
        %v1429 = vpop.xlane.xlu0 %1428
        %1430 = vadd.xlane.f32.xlu0 %v1367
        %v1431 = vpop.xlane.xlu0 %1430
        %1432 = vadd.xlane.f32.xlu0 %v1369
        %v1433 = vpop.xlane.xlu0 %1432
        %1434 = vadd.xlane.f32.xlu0 %v1371
        %v1435 = vpop.xlane.xlu0 %1434
        %1436 = vadd.xlane.f32.xlu0 %v1373
        %v1437 = vpop.xlane.xlu0 %1436
        %1438 = vadd.xlane.f32.xlu0 %v1375
        %v1439 = vpop.xlane.xlu0 %1438
        %1440 = vadd.xlane.f32.xlu0 %v1377
        %v1441 = vpop.xlane.xlu0 %1440
        %1442 = vadd.xlane.f32.xlu0 %v1379
        %v1443 = vpop.xlane.xlu0 %1442
        %1444 = vadd.xlane.f32.xlu0 %v1381
        %v1445 = vpop.xlane.xlu0 %1444
        %1446 = vadd.xlane.f32.xlu0 %v1383
        %v1447 = vpop.xlane.xlu0 %1446
        %1448 = vadd.xlane.f32.xlu0 %v1385
        %v1449 = vpop.xlane.xlu0 %1448
        %1450 = vadd.xlane.f32.xlu0 %v1387
        %v1451 = vpop.xlane.xlu0 %1450
        %1452 = vadd.xlane.f32.xlu0 %v1389
        %v1453 = vpop.xlane.xlu0 %1452
        %1454 = vadd.xlane.f32.xlu0 %v1391
        %v1455 = vpop.xlane.xlu0 %1454
        %1456 = vadd.xlane.f32.xlu0 %v1393
        %v1457 = vpop.xlane.xlu0 %1456
        %1458 = vadd.xlane.f32.xlu0 %v1395
        %v1459 = vpop.xlane.xlu0 %1458
        %1460 = vadd.xlane.f32.xlu0 %v1397
        %v1461 = vpop.xlane.xlu0 %1460
        %1462 = vadd.xlane.f32.xlu0 %v1399
        %v1463 = vpop.xlane.xlu0 %1462
        %1464 = vadd.xlane.f32.xlu0 %v1401
        %v1465 = vpop.xlane.xlu0 %1464
        %1466 = vadd.xlane.f32.xlu0 %v1403
        %v1467 = vpop.xlane.xlu0 %1466
        %1468 = vadd.xlane.f32.xlu0 %v1405
        %v1469 = vpop.xlane.xlu0 %1468
        %1470 = vadd.xlane.f32.xlu0 %v1407
        %v1471 = vpop.xlane.xlu0 %1470
        %1472 = vadd.xlane.f32.xlu0 %v1409
        %v1473 = vpop.xlane.xlu0 %1472
        %1474 = vadd.xlane.f32.xlu0 %v1411
        %v1475 = vpop.xlane.xlu0 %1474
        %v1476 = vrcp.pop %v1413
        %v1477 = vrcp.pop %v1415
        %v1478 = vrcp.pop %v1417
        %v1479 = vrcp.pop %v1419
        %v1480 = vrcp.pop %v1421
        %v1481 = vrcp.pop %v1423
        %v1482 = vrcp.pop %v1425
        %v1483 = vrcp.pop %v1427
        %v1484 = vrcp.pop %v1429
        %v1485 = vrcp.pop %v1431
        %v1486 = vrcp.pop %v1433
        %v1487 = vrcp.pop %v1435
        %v1488 = vrcp.pop %v1437
        %v1489 = vrcp.pop %v1439
        %v1490 = vrcp.pop %v1441
        %v1491 = vrcp.pop %v1443
        %v1492 = vrcp.pop %v1445
        %v1493 = vrcp.pop %v1447
        %v1494 = vrcp.pop %v1449
        %v1495 = vrcp.pop %v1451
        %v1496 = vrcp.pop %v1453
        %v1497 = vrcp.pop %v1455
        %v1498 = vrcp.pop %v1457
        %v1499 = vrcp.pop %v1459
        %v1500 = vrcp.pop %v1461
        %v1501 = vrcp.pop %v1463
        %v1502 = vrcp.pop %v1465
        %v1503 = vrcp.pop %v1467
        %v1504 = vrcp.pop %v1469
        %v1505 = vrcp.pop %v1471
        %v1506 = vrcp.pop %v1473
        %v1507 = vrcp.pop %v1475
        %v1508 = vmul.f32 %v1413, %v1476
        %v1509 = vmul.f32 %v1415, %v1477
        %v1510 = vmul.f32 %v1417, %v1478
        %v1511 = vmul.f32 %v1419, %v1479
        %v1512 = vmul.f32 %v1421, %v1480
        %v1513 = vmul.f32 %v1423, %v1481
        %v1514 = vmul.f32 %v1425, %v1482
        %v1515 = vmul.f32 %v1427, %v1483
        %v1516 = vmul.f32 %v1429, %v1484
        %v1517 = vmul.f32 %v1431, %v1485
        %v1518 = vmul.f32 %v1433, %v1486
        %v1519 = vmul.f32 %v1435, %v1487
        %v1520 = vmul.f32 %v1437, %v1488
        %v1521 = vmul.f32 %v1439, %v1489
        %v1522 = vmul.f32 %v1441, %v1490
        %v1523 = vmul.f32 %v1443, %v1491
        %v1524 = vmul.f32 %v1445, %v1492
        %v1525 = vmul.f32 %v1447, %v1493
        %v1526 = vmul.f32 %v1449, %v1494
        %v1527 = vmul.f32 %v1451, %v1495
        %v1528 = vmul.f32 %v1453, %v1496
        %v1529 = vmul.f32 %v1455, %v1497
        %v1530 = vmul.f32 %v1457, %v1498
        %v1531 = vmul.f32 %v1459, %v1499
        %v1532 = vmul.f32 %v1461, %v1500
        %v1533 = vmul.f32 %v1463, %v1501
        %v1534 = vmul.f32 %v1465, %v1502
        %v1535 = vmul.f32 %v1467, %v1503
        %v1536 = vmul.f32 %v1469, %v1504
        %v1537 = vmul.f32 %v1471, %v1505
        %v1538 = vmul.f32 %v1473, %v1506
        %v1539 = vmul.f32 %v1475, %v1507
        %v1540 = vsub.f32 2.0, %v1508
        %v1541 = vsub.f32 2.0, %v1509
        %v1542 = vsub.f32 2.0, %v1510
        %v1543 = vsub.f32 2.0, %v1511
        %v1544 = vsub.f32 2.0, %v1512
        %v1545 = vsub.f32 2.0, %v1513
        %v1546 = vsub.f32 2.0, %v1514
        %v1547 = vsub.f32 2.0, %v1515
        %v1548 = vsub.f32 2.0, %v1516
        %v1549 = vsub.f32 2.0, %v1517
        %v1550 = vsub.f32 2.0, %v1518
        %v1551 = vsub.f32 2.0, %v1519
        %v1552 = vsub.f32 2.0, %v1520
        %v1553 = vsub.f32 2.0, %v1521
        %v1554 = vsub.f32 2.0, %v1522
        %v1555 = vsub.f32 2.0, %v1523
        %v1556 = vsub.f32 2.0, %v1524
        %v1557 = vsub.f32 2.0, %v1525
        %v1558 = vsub.f32 2.0, %v1526
        %v1559 = vsub.f32 2.0, %v1527
        %v1560 = vsub.f32 2.0, %v1528
        %v1561 = vsub.f32 2.0, %v1529
        %v1562 = vsub.f32 2.0, %v1530
        %v1563 = vsub.f32 2.0, %v1531
        %v1564 = vsub.f32 2.0, %v1532
        %v1565 = vsub.f32 2.0, %v1533
        %v1566 = vsub.f32 2.0, %v1534
        %v1567 = vsub.f32 2.0, %v1535
        %v1568 = vsub.f32 2.0, %v1536
        %v1569 = vsub.f32 2.0, %v1537
        %v1570 = vsub.f32 2.0, %v1538
        %v1571 = vsub.f32 2.0, %v1539
        %v1572 = vmul.f32 %v1476, %v1540
        %v1573 = vmul.f32 %v1477, %v1541
        %v1574 = vmul.f32 %v1478, %v1542
        %v1575 = vmul.f32 %v1479, %v1543
        %v1576 = vmul.f32 %v1480, %v1544
        %v1577 = vmul.f32 %v1481, %v1545
        %v1578 = vmul.f32 %v1482, %v1546
        %v1579 = vmul.f32 %v1483, %v1547
        %v1580 = vmul.f32 %v1484, %v1548
        %v1581 = vmul.f32 %v1485, %v1549
        %v1582 = vmul.f32 %v1486, %v1550
        %v1583 = vmul.f32 %v1487, %v1551
        %v1584 = vmul.f32 %v1488, %v1552
        %v1585 = vmul.f32 %v1489, %v1553
        %v1586 = vmul.f32 %v1490, %v1554
        %v1587 = vmul.f32 %v1491, %v1555
        %v1588 = vmul.f32 %v1492, %v1556
        %v1589 = vmul.f32 %v1493, %v1557
        %v1590 = vmul.f32 %v1494, %v1558
        %v1591 = vmul.f32 %v1495, %v1559
        %v1592 = vmul.f32 %v1496, %v1560
        %v1593 = vmul.f32 %v1497, %v1561
        %v1594 = vmul.f32 %v1498, %v1562
        %v1595 = vmul.f32 %v1499, %v1563
        %v1596 = vmul.f32 %v1500, %v1564
        %v1597 = vmul.f32 %v1501, %v1565
        %v1598 = vmul.f32 %v1502, %v1566
        %v1599 = vmul.f32 %v1503, %v1567
        %v1600 = vmul.f32 %v1504, %v1568
        %v1601 = vmul.f32 %v1505, %v1569
        %v1602 = vmul.f32 %v1506, %v1570
        %v1603 = vmul.f32 %v1507, %v1571
        %v1604 = vmul.f32 %v1349, %v1572
        %v1605 = vmul.f32 %v1351, %v1573
        %v1606 = vmul.f32 %v1353, %v1574
        %v1607 = vmul.f32 %v1355, %v1575
        %v1608 = vmul.f32 %v1357, %v1576
        %v1609 = vmul.f32 %v1359, %v1577
        %v1610 = vmul.f32 %v1361, %v1578
        %v1611 = vmul.f32 %v1363, %v1579
        %v1612 = vmul.f32 %v1365, %v1580
        %v1613 = vmul.f32 %v1367, %v1581
        %v1614 = vmul.f32 %v1369, %v1582
        %v1615 = vmul.f32 %v1371, %v1583
        %v1616 = vmul.f32 %v1373, %v1584
        %v1617 = vmul.f32 %v1375, %v1585
        %v1618 = vmul.f32 %v1377, %v1586
        %v1619 = vmul.f32 %v1379, %v1587
        %v1620 = vmul.f32 %v1381, %v1588
        %v1621 = vmul.f32 %v1383, %v1589
        %v1622 = vmul.f32 %v1385, %v1590
        %v1623 = vmul.f32 %v1387, %v1591
        %v1624 = vmul.f32 %v1389, %v1592
        %v1625 = vmul.f32 %v1391, %v1593
        %v1626 = vmul.f32 %v1393, %v1594
        %v1627 = vmul.f32 %v1395, %v1595
        %v1628 = vmul.f32 %v1397, %v1596
        %v1629 = vmul.f32 %v1399, %v1597
        %v1630 = vmul.f32 %v1401, %v1598
        %v1631 = vmul.f32 %v1403, %v1599
        %v1632 = vmul.f32 %v1405, %v1600
        %v1633 = vmul.f32 %v1407, %v1601
        %v1634 = vmul.f32 %v1409, %v1602
        %v1635 = vmul.f32 %v1411, %v1603
        %s1636 = scalar_lea.vmem %s2, 128
        %v1637 = vld [vmem:[%s1636] sm:$0xff]
        %v1638 = vld [vmem:[%s1636 + $0x8] sm:$0xff]
        %v1639 = vld [vmem:[%s1636 + $0x10] sm:$0xff]
        %v1640 = vld [vmem:[%s1636 + $0x18] sm:$0xff]
        %v1641 = vld [vmem:[%s1636 + $0x20] sm:$0xff]
        %v1642 = vld [vmem:[%s1636 + $0x28] sm:$0xff]
        %v1643 = vld [vmem:[%s1636 + $0x30] sm:$0xff]
        %v1644 = vld [vmem:[%s1636 + $0x38] sm:$0xff]
        %v1645 = vld [vmem:[%s1636 + $0x40] sm:$0xff]
        %v1646 = vld [vmem:[%s1636 + $0x48] sm:$0xff]
        %v1647 = vld [vmem:[%s1636 + $0x50] sm:$0xff]
        %v1648 = vld [vmem:[%s1636 + $0x58] sm:$0xff]
        %v1649 = vld [vmem:[%s1636 + $0x60] sm:$0xff]
        %v1650 = vld [vmem:[%s1636 + $0x68] sm:$0xff]
        %v1651 = vld [vmem:[%s1636 + $0x70] sm:$0xff]
        %v1652 = vld [vmem:[%s1636 + $0x78] sm:$0xff]
        %v1653 = vlaneseq
        %v1654 = vshrl.u32 %v1653, 7
        %v1655 = vsub.s32 2, %v1654
        %v1656 = vrot.slane %v202, %v1655
        %1657 = vmatprep.subr.mxu0 0.0
        %1658 = vmatpush1.msra.mxu0 %v1637
        %1659 = vmatprep.subr.mxu0 0.0
        %1660 = vmatpush1.msra.mxu0 %v1638
        %1661 = vmatprep.subr.mxu0 0.0
        %1662 = vmatpush1.msra.mxu0 %v1639
        %1663 = vmatprep.subr.mxu0 0.0
        %1664 = vmatpush1.msra.mxu0 %v1640
        %1665 = vmatprep.subr.mxu0 0.0
        %1666 = vmatpush1.msra.mxu0 %v1641
        %1667 = vmatprep.subr.mxu0 0.0
        %1668 = vmatpush1.msra.mxu0 %v1642
        %1669 = vmatprep.subr.mxu0 0.0
        %1670 = vmatpush1.msra.mxu0 %v1643
        %1671 = vmatprep.subr.mxu0 0.0
        %1672 = vmatpush1.msra.mxu0 %v1644
        %1673 = vmatprep.subr.mxu0 0.0
        %1674 = vmatpush1.msra.mxu0 %v1645
        %1675 = vmatprep.subr.mxu0 0.0
        %1676 = vmatpush1.msra.mxu0 %v1646
        %1677 = vmatprep.subr.mxu0 0.0
        %1678 = vmatpush1.msra.mxu0 %v1647
        %1679 = vmatprep.subr.mxu0 0.0
        %1680 = vmatpush1.msra.mxu0 %v1648
        %1681 = vmatprep.subr.mxu0 0.0
        %1682 = vmatpush1.msra.mxu0 %v1649
        %1683 = vmatprep.subr.mxu0 0.0
        %1684 = vmatpush1.msra.mxu0 %v1650
        %1685 = vmatprep.subr.mxu0 0.0
        %1686 = vmatpush1.msra.mxu0 %v1651
        %1687 = vmatprep.subr.mxu0 0.0
        %1688 = vmatpush1.msra.mxu0 %v1652
        %1689 = vmatprep.subr.mxu0 0.0
        %1690 = vmatpush1.msra.mxu0 0.0
        %1691 = vmatprep.subr.mxu0 0.0
        %1692 = vmatpush1.msra.mxu0 0.0
        %1693 = vmatprep.subr.mxu0 0.0
        %1694 = vmatpush1.msra.mxu0 0.0
        %1695 = vmatprep.subr.mxu0 0.0
        %1696 = vmatpush1.msra.mxu0 0.0
        %1697 = vmatprep.subr.mxu0 0.0
        %1698 = vmatpush1.msra.mxu0 0.0
        %1699 = vmatprep.subr.mxu0 0.0
        %1700 = vmatpush1.msra.mxu0 0.0
        %1701 = vmatprep.subr.mxu0 0.0
        %1702 = vmatpush1.msra.mxu0 0.0
        %1703 = vmatprep.subr.mxu0 0.0
        %1704 = vmatpush1.msra.mxu0 0.0
        %1705 = vmatprep.subr.mxu0 0.0
        %1706 = vmatpush1.msra.mxu0 0.0
        %1707 = vmatprep.subr.mxu0 0.0
        %1708 = vmatpush1.msra.mxu0 0.0
        %1709 = vmatprep.subr.mxu0 0.0
        %1710 = vmatpush1.msra.mxu0 0.0
        %1711 = vmatprep.subr.mxu0 0.0
        %1712 = vmatpush1.msra.mxu0 0.0
        %1713 = vmatprep.subr.mxu0 0.0
        %1714 = vmatpush1.msra.mxu0 0.0
        %1715 = vmatprep.subr.mxu0 0.0
        %1716 = vmatpush1.msra.mxu0 0.0
        %1717 = vmatprep.subr.mxu0 0.0
        %1718 = vmatpush1.msra.mxu0 0.0
        %1719 = vmatprep.subr.mxu0 0.0
        %1720 = vmatpush1.msra.mxu0 0.0
        %1721 = vmatprep.mubr.f32.mxu0 0.0
        %1722 = vmatmul.mubr.f32.gmra.mrb[0].mxu0 %v1604
        %v1723 = vpop.f32.mrb[0].mxu0
        %v1724 = vadd.f32 %v1656, %v1723
        %v1725 = vpop.f32.mrb[0].mxu0
        %1726 = vmatprep.mubr.f32.mxu0 0.0
        %1727 = vmatmul.mubr.f32.gmra.mrb[0].mxu0 %v1605
        %v1728 = vpop.f32.mrb[0].mxu0
        %v1729 = vadd.f32 %v1656, %v1728
        %v1730 = vpop.f32.mrb[0].mxu0
        %1731 = vmatprep.mubr.f32.mxu0 0.0
        %1732 = vmatmul.mubr.f32.gmra.mrb[0].mxu0 %v1606
        %v1733 = vpop.f32.mrb[0].mxu0
        %v1734 = vadd.f32 %v1656, %v1733
        %v1735 = vpop.f32.mrb[0].mxu0
        %1736 = vmatprep.mubr.f32.mxu0 0.0
        %1737 = vmatmul.mubr.f32.gmra.mrb[0].mxu0 %v1607
        %v1738 = vpop.f32.mrb[0].mxu0
        %v1739 = vadd.f32 %v1656, %v1738
        %v1740 = vpop.f32.mrb[0].mxu0
        %1741 = vmatprep.mubr.f32.mxu0 0.0
        %1742 = vmatmul.mubr.f32.gmra.mrb[0].mxu0 %v1608
        %v1743 = vpop.f32.mrb[0].mxu0
        %v1744 = vadd.f32 %v1656, %v1743
        %v1745 = vpop.f32.mrb[0].mxu0
        %1746 = vmatprep.mubr.f32.mxu0 0.0
        %1747 = vmatmul.mubr.f32.gmra.mrb[0].mxu0 %v1609
        %v1748 = vpop.f32.mrb[0].mxu0
        %v1749 = vadd.f32 %v1656, %v1748
        %v1750 = vpop.f32.mrb[0].mxu0
        %1751 = vmatprep.mubr.f32.mxu0 0.0
        %1752 = vmatmul.mubr.f32.gmra.mrb[0].mxu0 %v1610
        %v1753 = vpop.f32.mrb[0].mxu0
        %v1754 = vadd.f32 %v1656, %v1753
        %v1755 = vpop.f32.mrb[0].mxu0
        %1756 = vmatprep.mubr.f32.mxu0 0.0
        %1757 = vmatmul.mubr.f32.gmra.mrb[0].mxu0 %v1611
        %v1758 = vpop.f32.mrb[0].mxu0
        %v1759 = vadd.f32 %v1656, %v1758
        %v1760 = vpop.f32.mrb[0].mxu0
        %1761 = vmatprep.mubr.f32.mxu0 0.0
        %1762 = vmatmul.mubr.f32.gmra.mrb[0].mxu0 %v1612
        %v1763 = vpop.f32.mrb[0].mxu0
        %v1764 = vadd.f32 %v1656, %v1763
        %v1765 = vpop.f32.mrb[0].mxu0
        %1766 = vmatprep.mubr.f32.mxu0 0.0
        %1767 = vmatmul.mubr.f32.gmra.mrb[0].mxu0 %v1613
        %v1768 = vpop.f32.mrb[0].mxu0
        %v1769 = vadd.f32 %v1656, %v1768
        %v1770 = vpop.f32.mrb[0].mxu0
        %1771 = vmatprep.mubr.f32.mxu0 0.0
        %1772 = vmatmul.mubr.f32.gmra.mrb[0].mxu0 %v1614
        %v1773 = vpop.f32.mrb[0].mxu0
        %v1774 = vadd.f32 %v1656, %v1773
        %v1775 = vpop.f32.mrb[0].mxu0
        %1776 = vmatprep.mubr.f32.mxu0 0.0
        %1777 = vmatmul.mubr.f32.gmra.mrb[0].mxu0 %v1615
        %v1778 = vpop.f32.mrb[0].mxu0
        %v1779 = vadd.f32 %v1656, %v1778
        %v1780 = vpop.f32.mrb[0].mxu0
        %1781 = vmatprep.mubr.f32.mxu0 0.0
        %1782 = vmatmul.mubr.f32.gmra.mrb[0].mxu0 %v1616
        %v1783 = vpop.f32.mrb[0].mxu0
        %v1784 = vadd.f32 %v1656, %v1783
        %v1785 = vpop.f32.mrb[0].mxu0
        %1786 = vmatprep.mubr.f32.mxu0 0.0
        %1787 = vmatmul.mubr.f32.gmra.mrb[0].mxu0 %v1617
        %v1788 = vpop.f32.mrb[0].mxu0
        %v1789 = vadd.f32 %v1656, %v1788
        %v1790 = vpop.f32.mrb[0].mxu0
        %1791 = vmatprep.mubr.f32.mxu0 0.0
        %1792 = vmatmul.mubr.f32.gmra.mrb[0].mxu0 %v1618
        %v1793 = vpop.f32.mrb[0].mxu0
        %v1794 = vadd.f32 %v1656, %v1793
        %v1795 = vpop.f32.mrb[0].mxu0
        %1796 = vmatprep.mubr.f32.mxu0 0.0
        %1797 = vmatmul.mubr.f32.gmra.mrb[0].mxu0 %v1619
        %v1798 = vpop.f32.mrb[0].mxu0
        %v1799 = vadd.f32 %v1656, %v1798
        %v1800 = vpop.f32.mrb[0].mxu0
        %1801 = vmatprep.mubr.f32.mxu0 0.0
        %1802 = vmatmul.mubr.f32.gmra.mrb[0].mxu0 %v1620
        %v1803 = vpop.f32.mrb[0].mxu0
        %v1804 = vadd.f32 %v1656, %v1803
        %v1805 = vpop.f32.mrb[0].mxu0
        %1806 = vmatprep.mubr.f32.mxu0 0.0
        %1807 = vmatmul.mubr.f32.gmra.mrb[0].mxu0 %v1621
        %v1808 = vpop.f32.mrb[0].mxu0
        %v1809 = vadd.f32 %v1656, %v1808
        %v1810 = vpop.f32.mrb[0].mxu0
        %1811 = vmatprep.mubr.f32.mxu0 0.0
        %1812 = vmatmul.mubr.f32.gmra.mrb[0].mxu0 %v1622
        %v1813 = vpop.f32.mrb[0].mxu0
        %v1814 = vadd.f32 %v1656, %v1813
        %v1815 = vpop.f32.mrb[0].mxu0
        %1816 = vmatprep.mubr.f32.mxu0 0.0
        %1817 = vmatmul.mubr.f32.gmra.mrb[0].mxu0 %v1623
        %v1818 = vpop.f32.mrb[0].mxu0
        %v1819 = vadd.f32 %v1656, %v1818
        %v1820 = vpop.f32.mrb[0].mxu0
        %1821 = vmatprep.mubr.f32.mxu0 0.0
        %1822 = vmatmul.mubr.f32.gmra.mrb[0].mxu0 %v1624
        %v1823 = vpop.f32.mrb[0].mxu0
        %v1824 = vadd.f32 %v1656, %v1823
        %v1825 = vpop.f32.mrb[0].mxu0
        %1826 = vmatprep.mubr.f32.mxu0 0.0
        %1827 = vmatmul.mubr.f32.gmra.mrb[0].mxu0 %v1625
        %v1828 = vpop.f32.mrb[0].mxu0
        %v1829 = vadd.f32 %v1656, %v1828
        %v1830 = vpop.f32.mrb[0].mxu0
        %1831 = vmatprep.mubr.f32.mxu0 0.0
        %1832 = vmatmul.mubr.f32.gmra.mrb[0].mxu0 %v1626
        %v1833 = vpop.f32.mrb[0].mxu0
        %v1834 = vadd.f32 %v1656, %v1833
        %v1835 = vpop.f32.mrb[0].mxu0
        %1836 = vmatprep.mubr.f32.mxu0 0.0
        %1837 = vmatmul.mubr.f32.gmra.mrb[0].mxu0 %v1627
        %v1838 = vpop.f32.mrb[0].mxu0
        %v1839 = vadd.f32 %v1656, %v1838
        %v1840 = vpop.f32.mrb[0].mxu0
        %1841 = vmatprep.mubr.f32.mxu0 0.0
        %1842 = vmatmul.mubr.f32.gmra.mrb[0].mxu0 %v1628
        %v1843 = vpop.f32.mrb[0].mxu0
        %v1844 = vadd.f32 %v1656, %v1843
        %v1845 = vpop.f32.mrb[0].mxu0
        %1846 = vmatprep.mubr.f32.mxu0 0.0
        %1847 = vmatmul.mubr.f32.gmra.mrb[0].mxu0 %v1629
        %v1848 = vpop.f32.mrb[0].mxu0
        %v1849 = vadd.f32 %v1656, %v1848
        %v1850 = vpop.f32.mrb[0].mxu0
        %1851 = vmatprep.mubr.f32.mxu0 0.0
        %1852 = vmatmul.mubr.f32.gmra.mrb[0].mxu0 %v1630
        %v1853 = vpop.f32.mrb[0].mxu0
        %v1854 = vadd.f32 %v1656, %v1853
        %v1855 = vpop.f32.mrb[0].mxu0
        %1856 = vmatprep.mubr.f32.mxu0 0.0
        %1857 = vmatmul.mubr.f32.gmra.mrb[0].mxu0 %v1631
        %v1858 = vpop.f32.mrb[0].mxu0
        %v1859 = vadd.f32 %v1656, %v1858
        %v1860 = vpop.f32.mrb[0].mxu0
        %1861 = vmatprep.mubr.f32.mxu0 0.0
        %1862 = vmatmul.mubr.f32.gmra.mrb[0].mxu0 %v1632
        %v1863 = vpop.f32.mrb[0].mxu0
        %v1864 = vadd.f32 %v1656, %v1863
        %v1865 = vpop.f32.mrb[0].mxu0
        %1866 = vmatprep.mubr.f32.mxu0 0.0
        %1867 = vmatmul.mubr.f32.gmra.mrb[0].mxu0 %v1633
        %v1868 = vpop.f32.mrb[0].mxu0
        %v1869 = vadd.f32 %v1656, %v1868
        %v1870 = vpop.f32.mrb[0].mxu0
        %1871 = vmatprep.mubr.f32.mxu0 0.0
        %1872 = vmatmul.mubr.f32.gmra.mrb[0].mxu0 %v1634
        %v1873 = vpop.f32.mrb[0].mxu0
        %v1874 = vadd.f32 %v1656, %v1873
        %v1875 = vpop.f32.mrb[0].mxu0
        %1876 = vmatprep.mubr.f32.mxu0 0.0
        %1877 = vmatmul.mubr.f32.gmra.mrb[0].mxu0 %v1635
        %v1878 = vpop.f32.mrb[0].mxu0
        %v1879 = vadd.f32 %v1656, %v1878
        %v1880 = vpop.f32.mrb[0].mxu0
        %1881 = vdwg.mxu0
        %1882 = vmax.xlane.f32.xlu0 %v1724
        %v1883 = vpop.xlane.xlu0 %1882
        %1884 = vmax.xlane.f32.xlu0 %v1729
        %v1885 = vpop.xlane.xlu0 %1884
        %1886 = vmax.xlane.f32.xlu0 %v1734
        %v1887 = vpop.xlane.xlu0 %1886
        %1888 = vmax.xlane.f32.xlu0 %v1739
        %v1889 = vpop.xlane.xlu0 %1888
        %1890 = vmax.xlane.f32.xlu0 %v1744
        %v1891 = vpop.xlane.xlu0 %1890
        %1892 = vmax.xlane.f32.xlu0 %v1749
        %v1893 = vpop.xlane.xlu0 %1892
        %1894 = vmax.xlane.f32.xlu0 %v1754
        %v1895 = vpop.xlane.xlu0 %1894
        %1896 = vmax.xlane.f32.xlu0 %v1759
        %v1897 = vpop.xlane.xlu0 %1896
        %1898 = vmax.xlane.f32.xlu0 %v1764
        %v1899 = vpop.xlane.xlu0 %1898
        %1900 = vmax.xlane.f32.xlu0 %v1769
        %v1901 = vpop.xlane.xlu0 %1900
        %1902 = vmax.xlane.f32.xlu0 %v1774
        %v1903 = vpop.xlane.xlu0 %1902
        %1904 = vmax.xlane.f32.xlu0 %v1779
        %v1905 = vpop.xlane.xlu0 %1904
        %1906 = vmax.xlane.f32.xlu0 %v1784
        %v1907 = vpop.xlane.xlu0 %1906
        %1908 = vmax.xlane.f32.xlu0 %v1789
        %v1909 = vpop.xlane.xlu0 %1908
        %1910 = vmax.xlane.f32.xlu0 %v1794
        %v1911 = vpop.xlane.xlu0 %1910
        %1912 = vmax.xlane.f32.xlu0 %v1799
        %v1913 = vpop.xlane.xlu0 %1912
        %1914 = vmax.xlane.f32.xlu0 %v1804
        %v1915 = vpop.xlane.xlu0 %1914
        %1916 = vmax.xlane.f32.xlu0 %v1809
        %v1917 = vpop.xlane.xlu0 %1916
        %1918 = vmax.xlane.f32.xlu0 %v1814
        %v1919 = vpop.xlane.xlu0 %1918
        %1920 = vmax.xlane.f32.xlu0 %v1819
        %v1921 = vpop.xlane.xlu0 %1920
        %1922 = vmax.xlane.f32.xlu0 %v1824
        %v1923 = vpop.xlane.xlu0 %1922
        %1924 = vmax.xlane.f32.xlu0 %v1829
        %v1925 = vpop.xlane.xlu0 %1924
        %1926 = vmax.xlane.f32.xlu0 %v1834
        %v1927 = vpop.xlane.xlu0 %1926
        %1928 = vmax.xlane.f32.xlu0 %v1839
        %v1929 = vpop.xlane.xlu0 %1928
        %1930 = vmax.xlane.f32.xlu0 %v1844
        %v1931 = vpop.xlane.xlu0 %1930
        %1932 = vmax.xlane.f32.xlu0 %v1849
        %v1933 = vpop.xlane.xlu0 %1932
        %1934 = vmax.xlane.f32.xlu0 %v1854
        %v1935 = vpop.xlane.xlu0 %1934
        %1936 = vmax.xlane.f32.xlu0 %v1859
        %v1937 = vpop.xlane.xlu0 %1936
        %1938 = vmax.xlane.f32.xlu0 %v1864
        %v1939 = vpop.xlane.xlu0 %1938
        %1940 = vmax.xlane.f32.xlu0 %v1869
        %v1941 = vpop.xlane.xlu0 %1940
        %1942 = vmax.xlane.f32.xlu0 %v1874
        %v1943 = vpop.xlane.xlu0 %1942
        %1944 = vmax.xlane.f32.xlu0 %v1879
        %v1945 = vpop.xlane.xlu0 %1944
        %v1946 = vsub.f32 %v1724, %v1883
        %v1947 = vsub.f32 %v1729, %v1885
        %v1948 = vsub.f32 %v1734, %v1887
        %v1949 = vsub.f32 %v1739, %v1889
        %v1950 = vsub.f32 %v1744, %v1891
        %v1951 = vsub.f32 %v1749, %v1893
        %v1952 = vsub.f32 %v1754, %v1895
        %v1953 = vsub.f32 %v1759, %v1897
        %v1954 = vsub.f32 %v1764, %v1899
        %v1955 = vsub.f32 %v1769, %v1901
        %v1956 = vsub.f32 %v1774, %v1903
        %v1957 = vsub.f32 %v1779, %v1905
        %v1958 = vsub.f32 %v1784, %v1907
        %v1959 = vsub.f32 %v1789, %v1909
        %v1960 = vsub.f32 %v1794, %v1911
        %v1961 = vsub.f32 %v1799, %v1913
        %v1962 = vsub.f32 %v1804, %v1915
        %v1963 = vsub.f32 %v1809, %v1917
        %v1964 = vsub.f32 %v1814, %v1919
        %v1965 = vsub.f32 %v1819, %v1921
        %v1966 = vsub.f32 %v1824, %v1923
        %v1967 = vsub.f32 %v1829, %v1925
        %v1968 = vsub.f32 %v1834, %v1927
        %v1969 = vsub.f32 %v1839, %v1929
        %v1970 = vsub.f32 %v1844, %v1931
        %v1971 = vsub.f32 %v1849, %v1933
        %v1972 = vsub.f32 %v1854, %v1935
        %v1973 = vsub.f32 %v1859, %v1937
        %v1974 = vsub.f32 %v1864, %v1939
        %v1975 = vsub.f32 %v1869, %v1941
        %v1976 = vsub.f32 %v1874, %v1943
        %v1977 = vsub.f32 %v1879, %v1945
        %v1978 = vmul.f32 %v1946, 1.442695
        %v1979 = vpow.pop %v1978
        %v1980 = vmul.f32 %v1947, 1.442695
        %v1981 = vpow.pop %v1980
        %v1982 = vmul.f32 %v1948, 1.442695
        %v1983 = vpow.pop %v1982
        %v1984 = vmul.f32 %v1949, 1.442695
        %v1985 = vpow.pop %v1984
        %v1986 = vmul.f32 %v1950, 1.442695
        %v1987 = vpow.pop %v1986
        %v1988 = vmul.f32 %v1951, 1.442695
        %v1989 = vpow.pop %v1988
        %v1990 = vmul.f32 %v1952, 1.442695
        %v1991 = vpow.pop %v1990
        %v1992 = vmul.f32 %v1953, 1.442695
        %v1993 = vpow.pop %v1992
        %v1994 = vmul.f32 %v1954, 1.442695
        %v1995 = vpow.pop %v1994
        %v1996 = vmul.f32 %v1955, 1.442695
        %v1997 = vpow.pop %v1996
        %v1998 = vmul.f32 %v1956, 1.442695
        %v1999 = vpow.pop %v1998
        %v2000 = vmul.f32 %v1957, 1.442695
        %v2001 = vpow.pop %v2000
        %v2002 = vmul.f32 %v1958, 1.442695
        %v2003 = vpow.pop %v2002
        %v2004 = vmul.f32 %v1959, 1.442695
        %v2005 = vpow.pop %v2004
        %v2006 = vmul.f32 %v1960, 1.442695
        %v2007 = vpow.pop %v2006
        %v2008 = vmul.f32 %v1961, 1.442695
        %v2009 = vpow.pop %v2008
        %v2010 = vmul.f32 %v1962, 1.442695
        %v2011 = vpow.pop %v2010
        %v2012 = vmul.f32 %v1963, 1.442695
        %v2013 = vpow.pop %v2012
        %v2014 = vmul.f32 %v1964, 1.442695
        %v2015 = vpow.pop %v2014
        %v2016 = vmul.f32 %v1965, 1.442695
        %v2017 = vpow.pop %v2016
        %v2018 = vmul.f32 %v1966, 1.442695
        %v2019 = vpow.pop %v2018
        %v2020 = vmul.f32 %v1967, 1.442695
        %v2021 = vpow.pop %v2020
        %v2022 = vmul.f32 %v1968, 1.442695
        %v2023 = vpow.pop %v2022
        %v2024 = vmul.f32 %v1969, 1.442695
        %v2025 = vpow.pop %v2024
        %v2026 = vmul.f32 %v1970, 1.442695
        %v2027 = vpow.pop %v2026
        %v2028 = vmul.f32 %v1971, 1.442695
        %v2029 = vpow.pop %v2028
        %v2030 = vmul.f32 %v1972, 1.442695
        %v2031 = vpow.pop %v2030
        %v2032 = vmul.f32 %v1973, 1.442695
        %v2033 = vpow.pop %v2032
        %v2034 = vmul.f32 %v1974, 1.442695
        %v2035 = vpow.pop %v2034
        %v2036 = vmul.f32 %v1975, 1.442695
        %v2037 = vpow.pop %v2036
        %v2038 = vmul.f32 %v1976, 1.442695
        %v2039 = vpow.pop %v2038
        %v2040 = vmul.f32 %v1977, 1.442695
        %v2041 = vpow.pop %v2040
        %2042 = vadd.xlane.f32.xlu0 %v1979
        %v2043 = vpop.xlane.xlu0 %2042
        %2044 = vadd.xlane.f32.xlu0 %v1981
        %v2045 = vpop.xlane.xlu0 %2044
        %2046 = vadd.xlane.f32.xlu0 %v1983
        %v2047 = vpop.xlane.xlu0 %2046
        %2048 = vadd.xlane.f32.xlu0 %v1985
        %v2049 = vpop.xlane.xlu0 %2048
        %2050 = vadd.xlane.f32.xlu0 %v1987
        %v2051 = vpop.xlane.xlu0 %2050
        %2052 = vadd.xlane.f32.xlu0 %v1989
        %v2053 = vpop.xlane.xlu0 %2052
        %2054 = vadd.xlane.f32.xlu0 %v1991
        %v2055 = vpop.xlane.xlu0 %2054
        %2056 = vadd.xlane.f32.xlu0 %v1993
        %v2057 = vpop.xlane.xlu0 %2056
        %2058 = vadd.xlane.f32.xlu0 %v1995
        %v2059 = vpop.xlane.xlu0 %2058
        %2060 = vadd.xlane.f32.xlu0 %v1997
        %v2061 = vpop.xlane.xlu0 %2060
        %2062 = vadd.xlane.f32.xlu0 %v1999
        %v2063 = vpop.xlane.xlu0 %2062
        %2064 = vadd.xlane.f32.xlu0 %v2001
        %v2065 = vpop.xlane.xlu0 %2064
        %2066 = vadd.xlane.f32.xlu0 %v2003
        %v2067 = vpop.xlane.xlu0 %2066
        %2068 = vadd.xlane.f32.xlu0 %v2005
        %v2069 = vpop.xlane.xlu0 %2068
        %2070 = vadd.xlane.f32.xlu0 %v2007
        %v2071 = vpop.xlane.xlu0 %2070
        %2072 = vadd.xlane.f32.xlu0 %v2009
        %v2073 = vpop.xlane.xlu0 %2072
        %2074 = vadd.xlane.f32.xlu0 %v2011
        %v2075 = vpop.xlane.xlu0 %2074
        %2076 = vadd.xlane.f32.xlu0 %v2013
        %v2077 = vpop.xlane.xlu0 %2076
        %2078 = vadd.xlane.f32.xlu0 %v2015
        %v2079 = vpop.xlane.xlu0 %2078
        %2080 = vadd.xlane.f32.xlu0 %v2017
        %v2081 = vpop.xlane.xlu0 %2080
        %2082 = vadd.xlane.f32.xlu0 %v2019
        %v2083 = vpop.xlane.xlu0 %2082
        %2084 = vadd.xlane.f32.xlu0 %v2021
        %v2085 = vpop.xlane.xlu0 %2084
        %2086 = vadd.xlane.f32.xlu0 %v2023
        %v2087 = vpop.xlane.xlu0 %2086
        %2088 = vadd.xlane.f32.xlu0 %v2025
        %v2089 = vpop.xlane.xlu0 %2088
        %2090 = vadd.xlane.f32.xlu0 %v2027
        %v2091 = vpop.xlane.xlu0 %2090
        %2092 = vadd.xlane.f32.xlu0 %v2029
        %v2093 = vpop.xlane.xlu0 %2092
        %2094 = vadd.xlane.f32.xlu0 %v2031
        %v2095 = vpop.xlane.xlu0 %2094
        %2096 = vadd.xlane.f32.xlu0 %v2033
        %v2097 = vpop.xlane.xlu0 %2096
        %2098 = vadd.xlane.f32.xlu0 %v2035
        %v2099 = vpop.xlane.xlu0 %2098
        %2100 = vadd.xlane.f32.xlu0 %v2037
        %v2101 = vpop.xlane.xlu0 %2100
        %2102 = vadd.xlane.f32.xlu0 %v2039
        %v2103 = vpop.xlane.xlu0 %2102
        %2104 = vadd.xlane.f32.xlu0 %v2041
        %v2105 = vpop.xlane.xlu0 %2104
        %v2106 = vrcp.pop %v2043
        %v2107 = vrcp.pop %v2045
        %v2108 = vrcp.pop %v2047
        %v2109 = vrcp.pop %v2049
        %v2110 = vrcp.pop %v2051
        %v2111 = vrcp.pop %v2053
        %v2112 = vrcp.pop %v2055
        %v2113 = vrcp.pop %v2057
        %v2114 = vrcp.pop %v2059
        %v2115 = vrcp.pop %v2061
        %v2116 = vrcp.pop %v2063
        %v2117 = vrcp.pop %v2065
        %v2118 = vrcp.pop %v2067
        %v2119 = vrcp.pop %v2069
        %v2120 = vrcp.pop %v2071
        %v2121 = vrcp.pop %v2073
        %v2122 = vrcp.pop %v2075
        %v2123 = vrcp.pop %v2077
        %v2124 = vrcp.pop %v2079
        %v2125 = vrcp.pop %v2081
        %v2126 = vrcp.pop %v2083
        %v2127 = vrcp.pop %v2085
        %v2128 = vrcp.pop %v2087
        %v2129 = vrcp.pop %v2089
        %v2130 = vrcp.pop %v2091
        %v2131 = vrcp.pop %v2093
        %v2132 = vrcp.pop %v2095
        %v2133 = vrcp.pop %v2097
        %v2134 = vrcp.pop %v2099
        %v2135 = vrcp.pop %v2101
        %v2136 = vrcp.pop %v2103
        %v2137 = vrcp.pop %v2105
        %v2138 = vmul.f32 %v2043, %v2106
        %v2139 = vmul.f32 %v2045, %v2107
        %v2140 = vmul.f32 %v2047, %v2108
        %v2141 = vmul.f32 %v2049, %v2109
        %v2142 = vmul.f32 %v2051, %v2110
        %v2143 = vmul.f32 %v2053, %v2111
        %v2144 = vmul.f32 %v2055, %v2112
        %v2145 = vmul.f32 %v2057, %v2113
        %v2146 = vmul.f32 %v2059, %v2114
        %v2147 = vmul.f32 %v2061, %v2115
        %v2148 = vmul.f32 %v2063, %v2116
        %v2149 = vmul.f32 %v2065, %v2117
        %v2150 = vmul.f32 %v2067, %v2118
        %v2151 = vmul.f32 %v2069, %v2119
        %v2152 = vmul.f32 %v2071, %v2120
        %v2153 = vmul.f32 %v2073, %v2121
        %v2154 = vmul.f32 %v2075, %v2122
        %v2155 = vmul.f32 %v2077, %v2123
        %v2156 = vmul.f32 %v2079, %v2124
        %v2157 = vmul.f32 %v2081, %v2125
        %v2158 = vmul.f32 %v2083, %v2126
        %v2159 = vmul.f32 %v2085, %v2127
        %v2160 = vmul.f32 %v2087, %v2128
        %v2161 = vmul.f32 %v2089, %v2129
        %v2162 = vmul.f32 %v2091, %v2130
        %v2163 = vmul.f32 %v2093, %v2131
        %v2164 = vmul.f32 %v2095, %v2132
        %v2165 = vmul.f32 %v2097, %v2133
        %v2166 = vmul.f32 %v2099, %v2134
        %v2167 = vmul.f32 %v2101, %v2135
        %v2168 = vmul.f32 %v2103, %v2136
        %v2169 = vmul.f32 %v2105, %v2137
        %v2170 = vsub.f32 2.0, %v2138
        %v2171 = vsub.f32 2.0, %v2139
        %v2172 = vsub.f32 2.0, %v2140
        %v2173 = vsub.f32 2.0, %v2141
        %v2174 = vsub.f32 2.0, %v2142
        %v2175 = vsub.f32 2.0, %v2143
        %v2176 = vsub.f32 2.0, %v2144
        %v2177 = vsub.f32 2.0, %v2145
        %v2178 = vsub.f32 2.0, %v2146
        %v2179 = vsub.f32 2.0, %v2147
        %v2180 = vsub.f32 2.0, %v2148
        %v2181 = vsub.f32 2.0, %v2149
        %v2182 = vsub.f32 2.0, %v2150
        %v2183 = vsub.f32 2.0, %v2151
        %v2184 = vsub.f32 2.0, %v2152
        %v2185 = vsub.f32 2.0, %v2153
        %v2186 = vsub.f32 2.0, %v2154
        %v2187 = vsub.f32 2.0, %v2155
        %v2188 = vsub.f32 2.0, %v2156
        %v2189 = vsub.f32 2.0, %v2157
        %v2190 = vsub.f32 2.0, %v2158
        %v2191 = vsub.f32 2.0, %v2159
        %v2192 = vsub.f32 2.0, %v2160
        %v2193 = vsub.f32 2.0, %v2161
        %v2194 = vsub.f32 2.0, %v2162
        %v2195 = vsub.f32 2.0, %v2163
        %v2196 = vsub.f32 2.0, %v2164
        %v2197 = vsub.f32 2.0, %v2165
        %v2198 = vsub.f32 2.0, %v2166
        %v2199 = vsub.f32 2.0, %v2167
        %v2200 = vsub.f32 2.0, %v2168
        %v2201 = vsub.f32 2.0, %v2169
        %v2202 = vmul.f32 %v2106, %v2170
        %v2203 = vmul.f32 %v2107, %v2171
        %v2204 = vmul.f32 %v2108, %v2172
        %v2205 = vmul.f32 %v2109, %v2173
        %v2206 = vmul.f32 %v2110, %v2174
        %v2207 = vmul.f32 %v2111, %v2175
        %v2208 = vmul.f32 %v2112, %v2176
        %v2209 = vmul.f32 %v2113, %v2177
        %v2210 = vmul.f32 %v2114, %v2178
        %v2211 = vmul.f32 %v2115, %v2179
        %v2212 = vmul.f32 %v2116, %v2180
        %v2213 = vmul.f32 %v2117, %v2181
        %v2214 = vmul.f32 %v2118, %v2182
        %v2215 = vmul.f32 %v2119, %v2183
        %v2216 = vmul.f32 %v2120, %v2184
        %v2217 = vmul.f32 %v2121, %v2185
        %v2218 = vmul.f32 %v2122, %v2186
        %v2219 = vmul.f32 %v2123, %v2187
        %v2220 = vmul.f32 %v2124, %v2188
        %v2221 = vmul.f32 %v2125, %v2189
        %v2222 = vmul.f32 %v2126, %v2190
        %v2223 = vmul.f32 %v2127, %v2191
        %v2224 = vmul.f32 %v2128, %v2192
        %v2225 = vmul.f32 %v2129, %v2193
        %v2226 = vmul.f32 %v2130, %v2194
        %v2227 = vmul.f32 %v2131, %v2195
        %v2228 = vmul.f32 %v2132, %v2196
        %v2229 = vmul.f32 %v2133, %v2197
        %v2230 = vmul.f32 %v2134, %v2198
        %v2231 = vmul.f32 %v2135, %v2199
        %v2232 = vmul.f32 %v2136, %v2200
        %v2233 = vmul.f32 %v2137, %v2201
        %v2234 = vmul.f32 %v1979, %v2202
        %v2235 = vmul.f32 %v1981, %v2203
        %v2236 = vmul.f32 %v1983, %v2204
        %v2237 = vmul.f32 %v1985, %v2205
        %v2238 = vmul.f32 %v1987, %v2206
        %v2239 = vmul.f32 %v1989, %v2207
        %v2240 = vmul.f32 %v1991, %v2208
        %v2241 = vmul.f32 %v1993, %v2209
        %v2242 = vmul.f32 %v1995, %v2210
        %v2243 = vmul.f32 %v1997, %v2211
        %v2244 = vmul.f32 %v1999, %v2212
        %v2245 = vmul.f32 %v2001, %v2213
        %v2246 = vmul.f32 %v2003, %v2214
        %v2247 = vmul.f32 %v2005, %v2215
        %v2248 = vmul.f32 %v2007, %v2216
        %v2249 = vmul.f32 %v2009, %v2217
        %v2250 = vmul.f32 %v2011, %v2218
        %v2251 = vmul.f32 %v2013, %v2219
        %v2252 = vmul.f32 %v2015, %v2220
        %v2253 = vmul.f32 %v2017, %v2221
        %v2254 = vmul.f32 %v2019, %v2222
        %v2255 = vmul.f32 %v2021, %v2223
        %v2256 = vmul.f32 %v2023, %v2224
        %v2257 = vmul.f32 %v2025, %v2225
        %v2258 = vmul.f32 %v2027, %v2226
        %v2259 = vmul.f32 %v2029, %v2227
        %v2260 = vmul.f32 %v2031, %v2228
        %v2261 = vmul.f32 %v2033, %v2229
        %v2262 = vmul.f32 %v2035, %v2230
        %v2263 = vmul.f32 %v2037, %v2231
        %v2264 = vmul.f32 %v2039, %v2232
        %v2265 = vmul.f32 %v2041, %v2233
        %s2266 = scalar_lea.vmem %s2, 256
        %v2267 = vld [vmem:[%s2266] sm:$0xff]
        %v2268 = vld [vmem:[%s2266 + $0x8] sm:$0xff]
        %v2269 = vld [vmem:[%s2266 + $0x10] sm:$0xff]
        %v2270 = vld [vmem:[%s2266 + $0x18] sm:$0xff]
        %v2271 = vld [vmem:[%s2266 + $0x20] sm:$0xff]
        %v2272 = vld [vmem:[%s2266 + $0x28] sm:$0xff]
        %v2273 = vld [vmem:[%s2266 + $0x30] sm:$0xff]
        %v2274 = vld [vmem:[%s2266 + $0x38] sm:$0xff]
        %v2275 = vld [vmem:[%s2266 + $0x40] sm:$0xff]
        %v2276 = vld [vmem:[%s2266 + $0x48] sm:$0xff]
        %v2277 = vld [vmem:[%s2266 + $0x50] sm:$0xff]
        %v2278 = vld [vmem:[%s2266 + $0x58] sm:$0xff]
        %v2279 = vld [vmem:[%s2266 + $0x60] sm:$0xff]
        %v2280 = vld [vmem:[%s2266 + $0x68] sm:$0xff]
        %v2281 = vld [vmem:[%s2266 + $0x70] sm:$0xff]
        %v2282 = vld [vmem:[%s2266 + $0x78] sm:$0xff]
        %v2283 = vlaneseq
        %v2284 = vshrl.u32 %v2283, 7
        %v2285 = vsub.s32 3, %v2284
        %v2286 = vrot.slane %v202, %v2285
        %2287 = vmatprep.subr.mxu0 0.0
        %2288 = vmatpush1.msra.mxu0 %v2267
        %2289 = vmatprep.subr.mxu0 0.0
        %2290 = vmatpush1.msra.mxu0 %v2268
        %2291 = vmatprep.subr.mxu0 0.0
        %2292 = vmatpush1.msra.mxu0 %v2269
        %2293 = vmatprep.subr.mxu0 0.0
        %2294 = vmatpush1.msra.mxu0 %v2270
        %2295 = vmatprep.subr.mxu0 0.0
        %2296 = vmatpush1.msra.mxu0 %v2271
        %2297 = vmatprep.subr.mxu0 0.0
        %2298 = vmatpush1.msra.mxu0 %v2272
        %2299 = vmatprep.subr.mxu0 0.0
        %2300 = vmatpush1.msra.mxu0 %v2273
        %2301 = vmatprep.subr.mxu0 0.0
        %2302 = vmatpush1.msra.mxu0 %v2274
        %2303 = vmatprep.subr.mxu0 0.0
        %2304 = vmatpush1.msra.mxu0 %v2275
        %2305 = vmatprep.subr.mxu0 0.0
        %2306 = vmatpush1.msra.mxu0 %v2276
        %2307 = vmatprep.subr.mxu0 0.0
        %2308 = vmatpush1.msra.mxu0 %v2277
        %2309 = vmatprep.subr.mxu0 0.0
        %2310 = vmatpush1.msra.mxu0 %v2278
        %2311 = vmatprep.subr.mxu0 0.0
        %2312 = vmatpush1.msra.mxu0 %v2279
        %2313 = vmatprep.subr.mxu0 0.0
        %2314 = vmatpush1.msra.mxu0 %v2280
        %2315 = vmatprep.subr.mxu0 0.0
        %2316 = vmatpush1.msra.mxu0 %v2281
        %2317 = vmatprep.subr.mxu0 0.0
        %2318 = vmatpush1.msra.mxu0 %v2282
        %2319 = vmatprep.subr.mxu0 0.0
        %2320 = vmatpush1.msra.mxu0 0.0
        %2321 = vmatprep.subr.mxu0 0.0
        %2322 = vmatpush1.msra.mxu0 0.0
        %2323 = vmatprep.subr.mxu0 0.0
        %2324 = vmatpush1.msra.mxu0 0.0
        %2325 = vmatprep.subr.mxu0 0.0
        %2326 = vmatpush1.msra.mxu0 0.0
        %2327 = vmatprep.subr.mxu0 0.0
        %2328 = vmatpush1.msra.mxu0 0.0
        %2329 = vmatprep.subr.mxu0 0.0
        %2330 = vmatpush1.msra.mxu0 0.0
        %2331 = vmatprep.subr.mxu0 0.0
        %2332 = vmatpush1.msra.mxu0 0.0
        %2333 = vmatprep.subr.mxu0 0.0
        %2334 = vmatpush1.msra.mxu0 0.0
        %2335 = vmatprep.subr.mxu0 0.0
        %2336 = vmatpush1.msra.mxu0 0.0
        %2337 = vmatprep.subr.mxu0 0.0
        %2338 = vmatpush1.msra.mxu0 0.0
        %2339 = vmatprep.subr.mxu0 0.0
        %2340 = vmatpush1.msra.mxu0 0.0
        %2341 = vmatprep.subr.mxu0 0.0
        %2342 = vmatpush1.msra.mxu0 0.0
        %2343 = vmatprep.subr.mxu0 0.0
        %2344 = vmatpush1.msra.mxu0 0.0
        %2345 = vmatprep.subr.mxu0 0.0
        %2346 = vmatpush1.msra.mxu0 0.0
        %2347 = vmatprep.subr.mxu0 0.0
        %2348 = vmatpush1.msra.mxu0 0.0
        %2349 = vmatprep.subr.mxu0 0.0
        %2350 = vmatpush1.msra.mxu0 0.0
        %2351 = vmatprep.mubr.f32.mxu0 0.0
        %2352 = vmatmul.mubr.f32.gmra.mrb[0].mxu0 %v2234
        %v2353 = vpop.f32.mrb[0].mxu0
        %v2354 = vadd.f32 %v2286, %v2353
        %v2355 = vpop.f32.mrb[0].mxu0
        %2356 = vmatprep.mubr.f32.mxu0 0.0
        %2357 = vmatmul.mubr.f32.gmra.mrb[0].mxu0 %v2235
        %v2358 = vpop.f32.mrb[0].mxu0
        %v2359 = vadd.f32 %v2286, %v2358
        %v2360 = vpop.f32.mrb[0].mxu0
        %2361 = vmatprep.mubr.f32.mxu0 0.0
        %2362 = vmatmul.mubr.f32.gmra.mrb[0].mxu0 %v2236
        %v2363 = vpop.f32.mrb[0].mxu0
        %v2364 = vadd.f32 %v2286, %v2363
        %v2365 = vpop.f32.mrb[0].mxu0
        %2366 = vmatprep.mubr.f32.mxu0 0.0
        %2367 = vmatmul.mubr.f32.gmra.mrb[0].mxu0 %v2237
        %v2368 = vpop.f32.mrb[0].mxu0
        %v2369 = vadd.f32 %v2286, %v2368
        %v2370 = vpop.f32.mrb[0].mxu0
        %2371 = vmatprep.mubr.f32.mxu0 0.0
        %2372 = vmatmul.mubr.f32.gmra.mrb[0].mxu0 %v2238
        %v2373 = vpop.f32.mrb[0].mxu0
        %v2374 = vadd.f32 %v2286, %v2373
        %v2375 = vpop.f32.mrb[0].mxu0
        %2376 = vmatprep.mubr.f32.mxu0 0.0
        %2377 = vmatmul.mubr.f32.gmra.mrb[0].mxu0 %v2239
        %v2378 = vpop.f32.mrb[0].mxu0
        %v2379 = vadd.f32 %v2286, %v2378
        %v2380 = vpop.f32.mrb[0].mxu0
        %2381 = vmatprep.mubr.f32.mxu0 0.0
        %2382 = vmatmul.mubr.f32.gmra.mrb[0].mxu0 %v2240
        %v2383 = vpop.f32.mrb[0].mxu0
        %v2384 = vadd.f32 %v2286, %v2383
        %v2385 = vpop.f32.mrb[0].mxu0
        %2386 = vmatprep.mubr.f32.mxu0 0.0
        %2387 = vmatmul.mubr.f32.gmra.mrb[0].mxu0 %v2241
        %v2388 = vpop.f32.mrb[0].mxu0
        %v2389 = vadd.f32 %v2286, %v2388
        %v2390 = vpop.f32.mrb[0].mxu0
        %2391 = vmatprep.mubr.f32.mxu0 0.0
        %2392 = vmatmul.mubr.f32.gmra.mrb[0].mxu0 %v2242
        %v2393 = vpop.f32.mrb[0].mxu0
        %v2394 = vadd.f32 %v2286, %v2393
        %v2395 = vpop.f32.mrb[0].mxu0
        %2396 = vmatprep.mubr.f32.mxu0 0.0
        %2397 = vmatmul.mubr.f32.gmra.mrb[0].mxu0 %v2243
        %v2398 = vpop.f32.mrb[0].mxu0
        %v2399 = vadd.f32 %v2286, %v2398
        %v2400 = vpop.f32.mrb[0].mxu0
        %2401 = vmatprep.mubr.f32.mxu0 0.0
        %2402 = vmatmul.mubr.f32.gmra.mrb[0].mxu0 %v2244
        %v2403 = vpop.f32.mrb[0].mxu0
        %v2404 = vadd.f32 %v2286, %v2403
        %v2405 = vpop.f32.mrb[0].mxu0
        %2406 = vmatprep.mubr.f32.mxu0 0.0
        %2407 = vmatmul.mubr.f32.gmra.mrb[0].mxu0 %v2245
        %v2408 = vpop.f32.mrb[0].mxu0
        %v2409 = vadd.f32 %v2286, %v2408
        %v2410 = vpop.f32.mrb[0].mxu0
        %2411 = vmatprep.mubr.f32.mxu0 0.0
        %2412 = vmatmul.mubr.f32.gmra.mrb[0].mxu0 %v2246
        %v2413 = vpop.f32.mrb[0].mxu0
        %v2414 = vadd.f32 %v2286, %v2413
        %v2415 = vpop.f32.mrb[0].mxu0
        %2416 = vmatprep.mubr.f32.mxu0 0.0
        %2417 = vmatmul.mubr.f32.gmra.mrb[0].mxu0 %v2247
        %v2418 = vpop.f32.mrb[0].mxu0
        %v2419 = vadd.f32 %v2286, %v2418
        %v2420 = vpop.f32.mrb[0].mxu0
        %2421 = vmatprep.mubr.f32.mxu0 0.0
        %2422 = vmatmul.mubr.f32.gmra.mrb[0].mxu0 %v2248
        %v2423 = vpop.f32.mrb[0].mxu0
        %v2424 = vadd.f32 %v2286, %v2423
        %v2425 = vpop.f32.mrb[0].mxu0
        %2426 = vmatprep.mubr.f32.mxu0 0.0
        %2427 = vmatmul.mubr.f32.gmra.mrb[0].mxu0 %v2249
        %v2428 = vpop.f32.mrb[0].mxu0
        %v2429 = vadd.f32 %v2286, %v2428
        %v2430 = vpop.f32.mrb[0].mxu0
        %2431 = vmatprep.mubr.f32.mxu0 0.0
        %2432 = vmatmul.mubr.f32.gmra.mrb[0].mxu0 %v2250
        %v2433 = vpop.f32.mrb[0].mxu0
        %v2434 = vadd.f32 %v2286, %v2433
        %v2435 = vpop.f32.mrb[0].mxu0
        %2436 = vmatprep.mubr.f32.mxu0 0.0
        %2437 = vmatmul.mubr.f32.gmra.mrb[0].mxu0 %v2251
        %v2438 = vpop.f32.mrb[0].mxu0
        %v2439 = vadd.f32 %v2286, %v2438
        %v2440 = vpop.f32.mrb[0].mxu0
        %2441 = vmatprep.mubr.f32.mxu0 0.0
        %2442 = vmatmul.mubr.f32.gmra.mrb[0].mxu0 %v2252
        %v2443 = vpop.f32.mrb[0].mxu0
        %v2444 = vadd.f32 %v2286, %v2443
        %v2445 = vpop.f32.mrb[0].mxu0
        %2446 = vmatprep.mubr.f32.mxu0 0.0
        %2447 = vmatmul.mubr.f32.gmra.mrb[0].mxu0 %v2253
        %v2448 = vpop.f32.mrb[0].mxu0
        %v2449 = vadd.f32 %v2286, %v2448
        %v2450 = vpop.f32.mrb[0].mxu0
        %2451 = vmatprep.mubr.f32.mxu0 0.0
        %2452 = vmatmul.mubr.f32.gmra.mrb[0].mxu0 %v2254
        %v2453 = vpop.f32.mrb[0].mxu0
        %v2454 = vadd.f32 %v2286, %v2453
        %v2455 = vpop.f32.mrb[0].mxu0
        %2456 = vmatprep.mubr.f32.mxu0 0.0
        %2457 = vmatmul.mubr.f32.gmra.mrb[0].mxu0 %v2255
        %v2458 = vpop.f32.mrb[0].mxu0
        %v2459 = vadd.f32 %v2286, %v2458
        %v2460 = vpop.f32.mrb[0].mxu0
        %2461 = vmatprep.mubr.f32.mxu0 0.0
        %2462 = vmatmul.mubr.f32.gmra.mrb[0].mxu0 %v2256
        %v2463 = vpop.f32.mrb[0].mxu0
        %v2464 = vadd.f32 %v2286, %v2463
        %v2465 = vpop.f32.mrb[0].mxu0
        %2466 = vmatprep.mubr.f32.mxu0 0.0
        %2467 = vmatmul.mubr.f32.gmra.mrb[0].mxu0 %v2257
        %v2468 = vpop.f32.mrb[0].mxu0
        %v2469 = vadd.f32 %v2286, %v2468
        %v2470 = vpop.f32.mrb[0].mxu0
        %2471 = vmatprep.mubr.f32.mxu0 0.0
        %2472 = vmatmul.mubr.f32.gmra.mrb[0].mxu0 %v2258
        %v2473 = vpop.f32.mrb[0].mxu0
        %v2474 = vadd.f32 %v2286, %v2473
        %v2475 = vpop.f32.mrb[0].mxu0
        %2476 = vmatprep.mubr.f32.mxu0 0.0
        %2477 = vmatmul.mubr.f32.gmra.mrb[0].mxu0 %v2259
        %v2478 = vpop.f32.mrb[0].mxu0
        %v2479 = vadd.f32 %v2286, %v2478
        %v2480 = vpop.f32.mrb[0].mxu0
        %2481 = vmatprep.mubr.f32.mxu0 0.0
        %2482 = vmatmul.mubr.f32.gmra.mrb[0].mxu0 %v2260
        %v2483 = vpop.f32.mrb[0].mxu0
        %v2484 = vadd.f32 %v2286, %v2483
        %v2485 = vpop.f32.mrb[0].mxu0
        %2486 = vmatprep.mubr.f32.mxu0 0.0
        %2487 = vmatmul.mubr.f32.gmra.mrb[0].mxu0 %v2261
        %v2488 = vpop.f32.mrb[0].mxu0
        %v2489 = vadd.f32 %v2286, %v2488
        %v2490 = vpop.f32.mrb[0].mxu0
        %2491 = vmatprep.mubr.f32.mxu0 0.0
        %2492 = vmatmul.mubr.f32.gmra.mrb[0].mxu0 %v2262
        %v2493 = vpop.f32.mrb[0].mxu0
        %v2494 = vadd.f32 %v2286, %v2493
        %v2495 = vpop.f32.mrb[0].mxu0
        %2496 = vmatprep.mubr.f32.mxu0 0.0
        %2497 = vmatmul.mubr.f32.gmra.mrb[0].mxu0 %v2263
        %v2498 = vpop.f32.mrb[0].mxu0
        %v2499 = vadd.f32 %v2286, %v2498
        %v2500 = vpop.f32.mrb[0].mxu0
        %2501 = vmatprep.mubr.f32.mxu0 0.0
        %2502 = vmatmul.mubr.f32.gmra.mrb[0].mxu0 %v2264
        %v2503 = vpop.f32.mrb[0].mxu0
        %v2504 = vadd.f32 %v2286, %v2503
        %v2505 = vpop.f32.mrb[0].mxu0
        %2506 = vmatprep.mubr.f32.mxu0 0.0
        %2507 = vmatmul.mubr.f32.gmra.mrb[0].mxu0 %v2265
        %v2508 = vpop.f32.mrb[0].mxu0
        %v2509 = vadd.f32 %v2286, %v2508
        %v2510 = vpop.f32.mrb[0].mxu0
        %2511 = vdwg.mxu0
        %2512 = vmax.xlane.f32.xlu0 %v2354
        %v2513 = vpop.xlane.xlu0 %2512
        %2514 = vmax.xlane.f32.xlu0 %v2359
        %v2515 = vpop.xlane.xlu0 %2514
        %2516 = vmax.xlane.f32.xlu0 %v2364
        %v2517 = vpop.xlane.xlu0 %2516
        %2518 = vmax.xlane.f32.xlu0 %v2369
        %v2519 = vpop.xlane.xlu0 %2518
        %2520 = vmax.xlane.f32.xlu0 %v2374
        %v2521 = vpop.xlane.xlu0 %2520
        %2522 = vmax.xlane.f32.xlu0 %v2379
        %v2523 = vpop.xlane.xlu0 %2522
        %2524 = vmax.xlane.f32.xlu0 %v2384
        %v2525 = vpop.xlane.xlu0 %2524
        %2526 = vmax.xlane.f32.xlu0 %v2389
        %v2527 = vpop.xlane.xlu0 %2526
        %2528 = vmax.xlane.f32.xlu0 %v2394
        %v2529 = vpop.xlane.xlu0 %2528
        %2530 = vmax.xlane.f32.xlu0 %v2399
        %v2531 = vpop.xlane.xlu0 %2530
        %2532 = vmax.xlane.f32.xlu0 %v2404
        %v2533 = vpop.xlane.xlu0 %2532
        %2534 = vmax.xlane.f32.xlu0 %v2409
        %v2535 = vpop.xlane.xlu0 %2534
        %2536 = vmax.xlane.f32.xlu0 %v2414
        %v2537 = vpop.xlane.xlu0 %2536
        %2538 = vmax.xlane.f32.xlu0 %v2419
        %v2539 = vpop.xlane.xlu0 %2538
        %2540 = vmax.xlane.f32.xlu0 %v2424
        %v2541 = vpop.xlane.xlu0 %2540
        %2542 = vmax.xlane.f32.xlu0 %v2429
        %v2543 = vpop.xlane.xlu0 %2542
        %2544 = vmax.xlane.f32.xlu0 %v2434
        %v2545 = vpop.xlane.xlu0 %2544
        %2546 = vmax.xlane.f32.xlu0 %v2439
        %v2547 = vpop.xlane.xlu0 %2546
        %2548 = vmax.xlane.f32.xlu0 %v2444
        %v2549 = vpop.xlane.xlu0 %2548
        %2550 = vmax.xlane.f32.xlu0 %v2449
        %v2551 = vpop.xlane.xlu0 %2550
        %2552 = vmax.xlane.f32.xlu0 %v2454
        %v2553 = vpop.xlane.xlu0 %2552
        %2554 = vmax.xlane.f32.xlu0 %v2459
        %v2555 = vpop.xlane.xlu0 %2554
        %2556 = vmax.xlane.f32.xlu0 %v2464
        %v2557 = vpop.xlane.xlu0 %2556
        %2558 = vmax.xlane.f32.xlu0 %v2469
        %v2559 = vpop.xlane.xlu0 %2558
        %2560 = vmax.xlane.f32.xlu0 %v2474
        %v2561 = vpop.xlane.xlu0 %2560
        %2562 = vmax.xlane.f32.xlu0 %v2479
        %v2563 = vpop.xlane.xlu0 %2562
        %2564 = vmax.xlane.f32.xlu0 %v2484
        %v2565 = vpop.xlane.xlu0 %2564
        %2566 = vmax.xlane.f32.xlu0 %v2489
        %v2567 = vpop.xlane.xlu0 %2566
        %2568 = vmax.xlane.f32.xlu0 %v2494
        %v2569 = vpop.xlane.xlu0 %2568
        %2570 = vmax.xlane.f32.xlu0 %v2499
        %v2571 = vpop.xlane.xlu0 %2570
        %2572 = vmax.xlane.f32.xlu0 %v2504
        %v2573 = vpop.xlane.xlu0 %2572
        %2574 = vmax.xlane.f32.xlu0 %v2509
        %v2575 = vpop.xlane.xlu0 %2574
        %v2576 = vsub.f32 %v2354, %v2513
        %v2577 = vsub.f32 %v2359, %v2515
        %v2578 = vsub.f32 %v2364, %v2517
        %v2579 = vsub.f32 %v2369, %v2519
        %v2580 = vsub.f32 %v2374, %v2521
        %v2581 = vsub.f32 %v2379, %v2523
        %v2582 = vsub.f32 %v2384, %v2525
        %v2583 = vsub.f32 %v2389, %v2527
        %v2584 = vsub.f32 %v2394, %v2529
        %v2585 = vsub.f32 %v2399, %v2531
        %v2586 = vsub.f32 %v2404, %v2533
        %v2587 = vsub.f32 %v2409, %v2535
        %v2588 = vsub.f32 %v2414, %v2537
        %v2589 = vsub.f32 %v2419, %v2539
        %v2590 = vsub.f32 %v2424, %v2541
        %v2591 = vsub.f32 %v2429, %v2543
        %v2592 = vsub.f32 %v2434, %v2545
        %v2593 = vsub.f32 %v2439, %v2547
        %v2594 = vsub.f32 %v2444, %v2549
        %v2595 = vsub.f32 %v2449, %v2551
        %v2596 = vsub.f32 %v2454, %v2553
        %v2597 = vsub.f32 %v2459, %v2555
        %v2598 = vsub.f32 %v2464, %v2557
        %v2599 = vsub.f32 %v2469, %v2559
        %v2600 = vsub.f32 %v2474, %v2561
        %v2601 = vsub.f32 %v2479, %v2563
        %v2602 = vsub.f32 %v2484, %v2565
        %v2603 = vsub.f32 %v2489, %v2567
        %v2604 = vsub.f32 %v2494, %v2569
        %v2605 = vsub.f32 %v2499, %v2571
        %v2606 = vsub.f32 %v2504, %v2573
        %v2607 = vsub.f32 %v2509, %v2575
        %v2608 = vmul.f32 %v2576, 1.442695
        %v2609 = vpow.pop %v2608
        %v2610 = vmul.f32 %v2577, 1.442695
        %v2611 = vpow.pop %v2610
        %v2612 = vmul.f32 %v2578, 1.442695
        %v2613 = vpow.pop %v2612
        %v2614 = vmul.f32 %v2579, 1.442695
        %v2615 = vpow.pop %v2614
        %v2616 = vmul.f32 %v2580, 1.442695
        %v2617 = vpow.pop %v2616
        %v2618 = vmul.f32 %v2581, 1.442695
        %v2619 = vpow.pop %v2618
        %v2620 = vmul.f32 %v2582, 1.442695
        %v2621 = vpow.pop %v2620
        %v2622 = vmul.f32 %v2583, 1.442695
        %v2623 = vpow.pop %v2622
        %v2624 = vmul.f32 %v2584, 1.442695
        %v2625 = vpow.pop %v2624
        %v2626 = vmul.f32 %v2585, 1.442695
        %v2627 = vpow.pop %v2626
        %v2628 = vmul.f32 %v2586, 1.442695
        %v2629 = vpow.pop %v2628
        %v2630 = vmul.f32 %v2587, 1.442695
        %v2631 = vpow.pop %v2630
        %v2632 = vmul.f32 %v2588, 1.442695
        %v2633 = vpow.pop %v2632
        %v2634 = vmul.f32 %v2589, 1.442695
        %v2635 = vpow.pop %v2634
        %v2636 = vmul.f32 %v2590, 1.442695
        %v2637 = vpow.pop %v2636
        %v2638 = vmul.f32 %v2591, 1.442695
        %v2639 = vpow.pop %v2638
        %v2640 = vmul.f32 %v2592, 1.442695
        %v2641 = vpow.pop %v2640
        %v2642 = vmul.f32 %v2593, 1.442695
        %v2643 = vpow.pop %v2642
        %v2644 = vmul.f32 %v2594, 1.442695
        %v2645 = vpow.pop %v2644
        %v2646 = vmul.f32 %v2595, 1.442695
        %v2647 = vpow.pop %v2646
        %v2648 = vmul.f32 %v2596, 1.442695
        %v2649 = vpow.pop %v2648
        %v2650 = vmul.f32 %v2597, 1.442695
        %v2651 = vpow.pop %v2650
        %v2652 = vmul.f32 %v2598, 1.442695
        %v2653 = vpow.pop %v2652
        %v2654 = vmul.f32 %v2599, 1.442695
        %v2655 = vpow.pop %v2654
        %v2656 = vmul.f32 %v2600, 1.442695
        %v2657 = vpow.pop %v2656
        %v2658 = vmul.f32 %v2601, 1.442695
        %v2659 = vpow.pop %v2658
        %v2660 = vmul.f32 %v2602, 1.442695
        %v2661 = vpow.pop %v2660
        %v2662 = vmul.f32 %v2603, 1.442695
        %v2663 = vpow.pop %v2662
        %v2664 = vmul.f32 %v2604, 1.442695
        %v2665 = vpow.pop %v2664
        %v2666 = vmul.f32 %v2605, 1.442695
        %v2667 = vpow.pop %v2666
        %v2668 = vmul.f32 %v2606, 1.442695
        %v2669 = vpow.pop %v2668
        %v2670 = vmul.f32 %v2607, 1.442695
        %v2671 = vpow.pop %v2670
        %2672 = vadd.xlane.f32.xlu0 %v2609
        %v2673 = vpop.xlane.xlu0 %2672
        %2674 = vadd.xlane.f32.xlu0 %v2611
        %v2675 = vpop.xlane.xlu0 %2674
        %2676 = vadd.xlane.f32.xlu0 %v2613
        %v2677 = vpop.xlane.xlu0 %2676
        %2678 = vadd.xlane.f32.xlu0 %v2615
        %v2679 = vpop.xlane.xlu0 %2678
        %2680 = vadd.xlane.f32.xlu0 %v2617
        %v2681 = vpop.xlane.xlu0 %2680
        %2682 = vadd.xlane.f32.xlu0 %v2619
        %v2683 = vpop.xlane.xlu0 %2682
        %2684 = vadd.xlane.f32.xlu0 %v2621
        %v2685 = vpop.xlane.xlu0 %2684
        %2686 = vadd.xlane.f32.xlu0 %v2623
        %v2687 = vpop.xlane.xlu0 %2686
        %2688 = vadd.xlane.f32.xlu0 %v2625
        %v2689 = vpop.xlane.xlu0 %2688
        %2690 = vadd.xlane.f32.xlu0 %v2627
        %v2691 = vpop.xlane.xlu0 %2690
        %2692 = vadd.xlane.f32.xlu0 %v2629
        %v2693 = vpop.xlane.xlu0 %2692
        %2694 = vadd.xlane.f32.xlu0 %v2631
        %v2695 = vpop.xlane.xlu0 %2694
        %2696 = vadd.xlane.f32.xlu0 %v2633
        %v2697 = vpop.xlane.xlu0 %2696
        %2698 = vadd.xlane.f32.xlu0 %v2635
        %v2699 = vpop.xlane.xlu0 %2698
        %2700 = vadd.xlane.f32.xlu0 %v2637
        %v2701 = vpop.xlane.xlu0 %2700
        %2702 = vadd.xlane.f32.xlu0 %v2639
        %v2703 = vpop.xlane.xlu0 %2702
        %2704 = vadd.xlane.f32.xlu0 %v2641
        %v2705 = vpop.xlane.xlu0 %2704
        %2706 = vadd.xlane.f32.xlu0 %v2643
        %v2707 = vpop.xlane.xlu0 %2706
        %2708 = vadd.xlane.f32.xlu0 %v2645
        %v2709 = vpop.xlane.xlu0 %2708
        %2710 = vadd.xlane.f32.xlu0 %v2647
        %v2711 = vpop.xlane.xlu0 %2710
        %2712 = vadd.xlane.f32.xlu0 %v2649
        %v2713 = vpop.xlane.xlu0 %2712
        %2714 = vadd.xlane.f32.xlu0 %v2651
        %v2715 = vpop.xlane.xlu0 %2714
        %2716 = vadd.xlane.f32.xlu0 %v2653
        %v2717 = vpop.xlane.xlu0 %2716
        %2718 = vadd.xlane.f32.xlu0 %v2655
        %v2719 = vpop.xlane.xlu0 %2718
        %2720 = vadd.xlane.f32.xlu0 %v2657
        %v2721 = vpop.xlane.xlu0 %2720
        %2722 = vadd.xlane.f32.xlu0 %v2659
        %v2723 = vpop.xlane.xlu0 %2722
        %2724 = vadd.xlane.f32.xlu0 %v2661
        %v2725 = vpop.xlane.xlu0 %2724
        %2726 = vadd.xlane.f32.xlu0 %v2663
        %v2727 = vpop.xlane.xlu0 %2726
        %2728 = vadd.xlane.f32.xlu0 %v2665
        %v2729 = vpop.xlane.xlu0 %2728
        %2730 = vadd.xlane.f32.xlu0 %v2667
        %v2731 = vpop.xlane.xlu0 %2730
        %2732 = vadd.xlane.f32.xlu0 %v2669
        %v2733 = vpop.xlane.xlu0 %2732
        %2734 = vadd.xlane.f32.xlu0 %v2671
        %v2735 = vpop.xlane.xlu0 %2734
        %v2736 = vrcp.pop %v2673
        %v2737 = vrcp.pop %v2675
        %v2738 = vrcp.pop %v2677
        %v2739 = vrcp.pop %v2679
        %v2740 = vrcp.pop %v2681
        %v2741 = vrcp.pop %v2683
        %v2742 = vrcp.pop %v2685
        %v2743 = vrcp.pop %v2687
        %v2744 = vrcp.pop %v2689
        %v2745 = vrcp.pop %v2691
        %v2746 = vrcp.pop %v2693
        %v2747 = vrcp.pop %v2695
        %v2748 = vrcp.pop %v2697
        %v2749 = vrcp.pop %v2699
        %v2750 = vrcp.pop %v2701
        %v2751 = vrcp.pop %v2703
        %v2752 = vrcp.pop %v2705
        %v2753 = vrcp.pop %v2707
        %v2754 = vrcp.pop %v2709
        %v2755 = vrcp.pop %v2711
        %v2756 = vrcp.pop %v2713
        %v2757 = vrcp.pop %v2715
        %v2758 = vrcp.pop %v2717
        %v2759 = vrcp.pop %v2719
        %v2760 = vrcp.pop %v2721
        %v2761 = vrcp.pop %v2723
        %v2762 = vrcp.pop %v2725
        %v2763 = vrcp.pop %v2727
        %v2764 = vrcp.pop %v2729
        %v2765 = vrcp.pop %v2731
        %v2766 = vrcp.pop %v2733
        %v2767 = vrcp.pop %v2735
        %v2768 = vmul.f32 %v2673, %v2736
        %v2769 = vmul.f32 %v2675, %v2737
        %v2770 = vmul.f32 %v2677, %v2738
        %v2771 = vmul.f32 %v2679, %v2739
        %v2772 = vmul.f32 %v2681, %v2740
        %v2773 = vmul.f32 %v2683, %v2741
        %v2774 = vmul.f32 %v2685, %v2742
        %v2775 = vmul.f32 %v2687, %v2743
        %v2776 = vmul.f32 %v2689, %v2744
        %v2777 = vmul.f32 %v2691, %v2745
        %v2778 = vmul.f32 %v2693, %v2746
        %v2779 = vmul.f32 %v2695, %v2747
        %v2780 = vmul.f32 %v2697, %v2748
        %v2781 = vmul.f32 %v2699, %v2749
        %v2782 = vmul.f32 %v2701, %v2750
        %v2783 = vmul.f32 %v2703, %v2751
        %v2784 = vmul.f32 %v2705, %v2752
        %v2785 = vmul.f32 %v2707, %v2753
        %v2786 = vmul.f32 %v2709, %v2754
        %v2787 = vmul.f32 %v2711, %v2755
        %v2788 = vmul.f32 %v2713, %v2756
        %v2789 = vmul.f32 %v2715, %v2757
        %v2790 = vmul.f32 %v2717, %v2758
        %v2791 = vmul.f32 %v2719, %v2759
        %v2792 = vmul.f32 %v2721, %v2760
        %v2793 = vmul.f32 %v2723, %v2761
        %v2794 = vmul.f32 %v2725, %v2762
        %v2795 = vmul.f32 %v2727, %v2763
        %v2796 = vmul.f32 %v2729, %v2764
        %v2797 = vmul.f32 %v2731, %v2765
        %v2798 = vmul.f32 %v2733, %v2766
        %v2799 = vmul.f32 %v2735, %v2767
        %v2800 = vsub.f32 2.0, %v2768
        %v2801 = vsub.f32 2.0, %v2769
        %v2802 = vsub.f32 2.0, %v2770
        %v2803 = vsub.f32 2.0, %v2771
        %v2804 = vsub.f32 2.0, %v2772
        %v2805 = vsub.f32 2.0, %v2773
        %v2806 = vsub.f32 2.0, %v2774
        %v2807 = vsub.f32 2.0, %v2775
        %v2808 = vsub.f32 2.0, %v2776
        %v2809 = vsub.f32 2.0, %v2777
        %v2810 = vsub.f32 2.0, %v2778
        %v2811 = vsub.f32 2.0, %v2779
        %v2812 = vsub.f32 2.0, %v2780
        %v2813 = vsub.f32 2.0, %v2781
        %v2814 = vsub.f32 2.0, %v2782
        %v2815 = vsub.f32 2.0, %v2783
        %v2816 = vsub.f32 2.0, %v2784
        %v2817 = vsub.f32 2.0, %v2785
        %v2818 = vsub.f32 2.0, %v2786
        %v2819 = vsub.f32 2.0, %v2787
        %v2820 = vsub.f32 2.0, %v2788
        %v2821 = vsub.f32 2.0, %v2789
        %v2822 = vsub.f32 2.0, %v2790
        %v2823 = vsub.f32 2.0, %v2791
        %v2824 = vsub.f32 2.0, %v2792
        %v2825 = vsub.f32 2.0, %v2793
        %v2826 = vsub.f32 2.0, %v2794
        %v2827 = vsub.f32 2.0, %v2795
        %v2828 = vsub.f32 2.0, %v2796
        %v2829 = vsub.f32 2.0, %v2797
        %v2830 = vsub.f32 2.0, %v2798
        %v2831 = vsub.f32 2.0, %v2799
        %v2832 = vmul.f32 %v2736, %v2800
        %v2833 = vmul.f32 %v2737, %v2801
        %v2834 = vmul.f32 %v2738, %v2802
        %v2835 = vmul.f32 %v2739, %v2803
        %v2836 = vmul.f32 %v2740, %v2804
        %v2837 = vmul.f32 %v2741, %v2805
        %v2838 = vmul.f32 %v2742, %v2806
        %v2839 = vmul.f32 %v2743, %v2807
        %v2840 = vmul.f32 %v2744, %v2808
        %v2841 = vmul.f32 %v2745, %v2809
        %v2842 = vmul.f32 %v2746, %v2810
        %v2843 = vmul.f32 %v2747, %v2811
        %v2844 = vmul.f32 %v2748, %v2812
        %v2845 = vmul.f32 %v2749, %v2813
        %v2846 = vmul.f32 %v2750, %v2814
        %v2847 = vmul.f32 %v2751, %v2815
        %v2848 = vmul.f32 %v2752, %v2816
        %v2849 = vmul.f32 %v2753, %v2817
        %v2850 = vmul.f32 %v2754, %v2818
        %v2851 = vmul.f32 %v2755, %v2819
        %v2852 = vmul.f32 %v2756, %v2820
        %v2853 = vmul.f32 %v2757, %v2821
        %v2854 = vmul.f32 %v2758, %v2822
        %v2855 = vmul.f32 %v2759, %v2823
        %v2856 = vmul.f32 %v2760, %v2824
        %v2857 = vmul.f32 %v2761, %v2825
        %v2858 = vmul.f32 %v2762, %v2826
        %v2859 = vmul.f32 %v2763, %v2827
        %v2860 = vmul.f32 %v2764, %v2828
        %v2861 = vmul.f32 %v2765, %v2829
        %v2862 = vmul.f32 %v2766, %v2830
        %v2863 = vmul.f32 %v2767, %v2831
        %v2864 = vmul.f32 %v2609, %v2832
        %v2865 = vmul.f32 %v2611, %v2833
        %v2866 = vmul.f32 %v2613, %v2834
        %v2867 = vmul.f32 %v2615, %v2835
        %v2868 = vmul.f32 %v2617, %v2836
        %v2869 = vmul.f32 %v2619, %v2837
        %v2870 = vmul.f32 %v2621, %v2838
        %v2871 = vmul.f32 %v2623, %v2839
        %v2872 = vmul.f32 %v2625, %v2840
        %v2873 = vmul.f32 %v2627, %v2841
        %v2874 = vmul.f32 %v2629, %v2842
        %v2875 = vmul.f32 %v2631, %v2843
        %v2876 = vmul.f32 %v2633, %v2844
        %v2877 = vmul.f32 %v2635, %v2845
        %v2878 = vmul.f32 %v2637, %v2846
        %v2879 = vmul.f32 %v2639, %v2847
        %v2880 = vmul.f32 %v2641, %v2848
        %v2881 = vmul.f32 %v2643, %v2849
        %v2882 = vmul.f32 %v2645, %v2850
        %v2883 = vmul.f32 %v2647, %v2851
        %v2884 = vmul.f32 %v2649, %v2852
        %v2885 = vmul.f32 %v2651, %v2853
        %v2886 = vmul.f32 %v2653, %v2854
        %v2887 = vmul.f32 %v2655, %v2855
        %v2888 = vmul.f32 %v2657, %v2856
        %v2889 = vmul.f32 %v2659, %v2857
        %v2890 = vmul.f32 %v2661, %v2858
        %v2891 = vmul.f32 %v2663, %v2859
        %v2892 = vmul.f32 %v2665, %v2860
        %v2893 = vmul.f32 %v2667, %v2861
        %v2894 = vmul.f32 %v2669, %v2862
        %v2895 = vmul.f32 %v2671, %v2863
        %s2896 = scalar_lea.vmem %s2, 384
        %v2897 = vld [vmem:[%s2896] sm:$0xff]
        %v2898 = vld [vmem:[%s2896 + $0x8] sm:$0xff]
        %v2899 = vld [vmem:[%s2896 + $0x10] sm:$0xff]
        %v2900 = vld [vmem:[%s2896 + $0x18] sm:$0xff]
        %v2901 = vld [vmem:[%s2896 + $0x20] sm:$0xff]
        %v2902 = vld [vmem:[%s2896 + $0x28] sm:$0xff]
        %v2903 = vld [vmem:[%s2896 + $0x30] sm:$0xff]
        %v2904 = vld [vmem:[%s2896 + $0x38] sm:$0xff]
        %v2905 = vld [vmem:[%s2896 + $0x40] sm:$0xff]
        %v2906 = vld [vmem:[%s2896 + $0x48] sm:$0xff]
        %v2907 = vld [vmem:[%s2896 + $0x50] sm:$0xff]
        %v2908 = vld [vmem:[%s2896 + $0x58] sm:$0xff]
        %v2909 = vld [vmem:[%s2896 + $0x60] sm:$0xff]
        %v2910 = vld [vmem:[%s2896 + $0x68] sm:$0xff]
        %v2911 = vld [vmem:[%s2896 + $0x70] sm:$0xff]
        %v2912 = vld [vmem:[%s2896 + $0x78] sm:$0xff]
        %v2913 = vlaneseq
        %v2914 = vshrl.u32 %v2913, 7
        %v2915 = vsub.s32 4, %v2914
        %v2916 = vrot.slane %v202, %v2915
        %2917 = vmatprep.subr.mxu0 0.0
        %2918 = vmatpush1.msra.mxu0 %v2897
        %2919 = vmatprep.subr.mxu0 0.0
        %2920 = vmatpush1.msra.mxu0 %v2898
        %2921 = vmatprep.subr.mxu0 0.0
        %2922 = vmatpush1.msra.mxu0 %v2899
        %2923 = vmatprep.subr.mxu0 0.0
        %2924 = vmatpush1.msra.mxu0 %v2900
        %2925 = vmatprep.subr.mxu0 0.0
        %2926 = vmatpush1.msra.mxu0 %v2901
        %2927 = vmatprep.subr.mxu0 0.0
        %2928 = vmatpush1.msra.mxu0 %v2902
        %2929 = vmatprep.subr.mxu0 0.0
        %2930 = vmatpush1.msra.mxu0 %v2903
        %2931 = vmatprep.subr.mxu0 0.0
        %2932 = vmatpush1.msra.mxu0 %v2904
        %2933 = vmatprep.subr.mxu0 0.0
        %2934 = vmatpush1.msra.mxu0 %v2905
        %2935 = vmatprep.subr.mxu0 0.0
        %2936 = vmatpush1.msra.mxu0 %v2906
        %2937 = vmatprep.subr.mxu0 0.0
        %2938 = vmatpush1.msra.mxu0 %v2907
        %2939 = vmatprep.subr.mxu0 0.0
        %2940 = vmatpush1.msra.mxu0 %v2908
        %2941 = vmatprep.subr.mxu0 0.0
        %2942 = vmatpush1.msra.mxu0 %v2909
        %2943 = vmatprep.subr.mxu0 0.0
        %2944 = vmatpush1.msra.mxu0 %v2910
        %2945 = vmatprep.subr.mxu0 0.0
        %2946 = vmatpush1.msra.mxu0 %v2911
        %2947 = vmatprep.subr.mxu0 0.0
        %2948 = vmatpush1.msra.mxu0 %v2912
        %2949 = vmatprep.subr.mxu0 0.0
        %2950 = vmatpush1.msra.mxu0 0.0
        %2951 = vmatprep.subr.mxu0 0.0
        %2952 = vmatpush1.msra.mxu0 0.0
        %2953 = vmatprep.subr.mxu0 0.0
        %2954 = vmatpush1.msra.mxu0 0.0
        %2955 = vmatprep.subr.mxu0 0.0
        %2956 = vmatpush1.msra.mxu0 0.0
        %2957 = vmatprep.subr.mxu0 0.0
        %2958 = vmatpush1.msra.mxu0 0.0
        %2959 = vmatprep.subr.mxu0 0.0
        %2960 = vmatpush1.msra.mxu0 0.0
        %2961 = vmatprep.subr.mxu0 0.0
        %2962 = vmatpush1.msra.mxu0 0.0
        %2963 = vmatprep.subr.mxu0 0.0
        %2964 = vmatpush1.msra.mxu0 0.0
        %2965 = vmatprep.subr.mxu0 0.0
        %2966 = vmatpush1.msra.mxu0 0.0
        %2967 = vmatprep.subr.mxu0 0.0
        %2968 = vmatpush1.msra.mxu0 0.0
        %2969 = vmatprep.subr.mxu0 0.0
        %2970 = vmatpush1.msra.mxu0 0.0
        %2971 = vmatprep.subr.mxu0 0.0
        %2972 = vmatpush1.msra.mxu0 0.0
        %2973 = vmatprep.subr.mxu0 0.0
        %2974 = vmatpush1.msra.mxu0 0.0
        %2975 = vmatprep.subr.mxu0 0.0
        %2976 = vmatpush1.msra.mxu0 0.0
        %2977 = vmatprep.subr.mxu0 0.0
        %2978 = vmatpush1.msra.mxu0 0.0
        %2979 = vmatprep.subr.mxu0 0.0
        %2980 = vmatpush1.msra.mxu0 0.0
        %2981 = vmatprep.mubr.f32.mxu0 0.0
        %2982 = vmatmul.mubr.f32.gmra.mrb[0].mxu0 %v2864
        %v2983 = vpop.f32.mrb[0].mxu0
        %v2984 = vadd.f32 %v2916, %v2983
        %v2985 = vpop.f32.mrb[0].mxu0
        %2986 = vmatprep.mubr.f32.mxu0 0.0
        %2987 = vmatmul.mubr.f32.gmra.mrb[0].mxu0 %v2865
        %v2988 = vpop.f32.mrb[0].mxu0
        %v2989 = vadd.f32 %v2916, %v2988
        %v2990 = vpop.f32.mrb[0].mxu0
        %2991 = vmatprep.mubr.f32.mxu0 0.0
        %2992 = vmatmul.mubr.f32.gmra.mrb[0].mxu0 %v2866
        %v2993 = vpop.f32.mrb[0].mxu0
        %v2994 = vadd.f32 %v2916, %v2993
        %v2995 = vpop.f32.mrb[0].mxu0
        %2996 = vmatprep.mubr.f32.mxu0 0.0
        %2997 = vmatmul.mubr.f32.gmra.mrb[0].mxu0 %v2867
        %v2998 = vpop.f32.mrb[0].mxu0
        %v2999 = vadd.f32 %v2916, %v2998
        %v3000 = vpop.f32.mrb[0].mxu0
        %3001 = vmatprep.mubr.f32.mxu0 0.0
        %3002 = vmatmul.mubr.f32.gmra.mrb[0].mxu0 %v2868
        %v3003 = vpop.f32.mrb[0].mxu0
        %v3004 = vadd.f32 %v2916, %v3003
        %v3005 = vpop.f32.mrb[0].mxu0
        %3006 = vmatprep.mubr.f32.mxu0 0.0
        %3007 = vmatmul.mubr.f32.gmra.mrb[0].mxu0 %v2869
        %v3008 = vpop.f32.mrb[0].mxu0
        %v3009 = vadd.f32 %v2916, %v3008
        %v3010 = vpop.f32.mrb[0].mxu0
        %3011 = vmatprep.mubr.f32.mxu0 0.0
        %3012 = vmatmul.mubr.f32.gmra.mrb[0].mxu0 %v2870
        %v3013 = vpop.f32.mrb[0].mxu0
        %v3014 = vadd.f32 %v2916, %v3013
        %v3015 = vpop.f32.mrb[0].mxu0
        %3016 = vmatprep.mubr.f32.mxu0 0.0
        %3017 = vmatmul.mubr.f32.gmra.mrb[0].mxu0 %v2871
        %v3018 = vpop.f32.mrb[0].mxu0
        %v3019 = vadd.f32 %v2916, %v3018
        %v3020 = vpop.f32.mrb[0].mxu0
        %3021 = vmatprep.mubr.f32.mxu0 0.0
        %3022 = vmatmul.mubr.f32.gmra.mrb[0].mxu0 %v2872
        %v3023 = vpop.f32.mrb[0].mxu0
        %v3024 = vadd.f32 %v2916, %v3023
        %v3025 = vpop.f32.mrb[0].mxu0
        %3026 = vmatprep.mubr.f32.mxu0 0.0
        %3027 = vmatmul.mubr.f32.gmra.mrb[0].mxu0 %v2873
        %v3028 = vpop.f32.mrb[0].mxu0
        %v3029 = vadd.f32 %v2916, %v3028
        %v3030 = vpop.f32.mrb[0].mxu0
        %3031 = vmatprep.mubr.f32.mxu0 0.0
        %3032 = vmatmul.mubr.f32.gmra.mrb[0].mxu0 %v2874
        %v3033 = vpop.f32.mrb[0].mxu0
        %v3034 = vadd.f32 %v2916, %v3033
        %v3035 = vpop.f32.mrb[0].mxu0
        %3036 = vmatprep.mubr.f32.mxu0 0.0
        %3037 = vmatmul.mubr.f32.gmra.mrb[0].mxu0 %v2875
        %v3038 = vpop.f32.mrb[0].mxu0
        %v3039 = vadd.f32 %v2916, %v3038
        %v3040 = vpop.f32.mrb[0].mxu0
        %3041 = vmatprep.mubr.f32.mxu0 0.0
        %3042 = vmatmul.mubr.f32.gmra.mrb[0].mxu0 %v2876
        %v3043 = vpop.f32.mrb[0].mxu0
        %v3044 = vadd.f32 %v2916, %v3043
        %v3045 = vpop.f32.mrb[0].mxu0
        %3046 = vmatprep.mubr.f32.mxu0 0.0
        %3047 = vmatmul.mubr.f32.gmra.mrb[0].mxu0 %v2877
        %v3048 = vpop.f32.mrb[0].mxu0
        %v3049 = vadd.f32 %v2916, %v3048
        %v3050 = vpop.f32.mrb[0].mxu0
        %3051 = vmatprep.mubr.f32.mxu0 0.0
        %3052 = vmatmul.mubr.f32.gmra.mrb[0].mxu0 %v2878
        %v3053 = vpop.f32.mrb[0].mxu0
        %v3054 = vadd.f32 %v2916, %v3053
        %v3055 = vpop.f32.mrb[0].mxu0
        %3056 = vmatprep.mubr.f32.mxu0 0.0
        %3057 = vmatmul.mubr.f32.gmra.mrb[0].mxu0 %v2879
        %v3058 = vpop.f32.mrb[0].mxu0
        %v3059 = vadd.f32 %v2916, %v3058
        %v3060 = vpop.f32.mrb[0].mxu0
        %3061 = vmatprep.mubr.f32.mxu0 0.0
        %3062 = vmatmul.mubr.f32.gmra.mrb[0].mxu0 %v2880
        %v3063 = vpop.f32.mrb[0].mxu0
        %v3064 = vadd.f32 %v2916, %v3063
        %v3065 = vpop.f32.mrb[0].mxu0
        %3066 = vmatprep.mubr.f32.mxu0 0.0
        %3067 = vmatmul.mubr.f32.gmra.mrb[0].mxu0 %v2881
        %v3068 = vpop.f32.mrb[0].mxu0
        %v3069 = vadd.f32 %v2916, %v3068
        %v3070 = vpop.f32.mrb[0].mxu0
        %3071 = vmatprep.mubr.f32.mxu0 0.0
        %3072 = vmatmul.mubr.f32.gmra.mrb[0].mxu0 %v2882
        %v3073 = vpop.f32.mrb[0].mxu0
        %v3074 = vadd.f32 %v2916, %v3073
        %v3075 = vpop.f32.mrb[0].mxu0
        %3076 = vmatprep.mubr.f32.mxu0 0.0
        %3077 = vmatmul.mubr.f32.gmra.mrb[0].mxu0 %v2883
        %v3078 = vpop.f32.mrb[0].mxu0
        %v3079 = vadd.f32 %v2916, %v3078
        %v3080 = vpop.f32.mrb[0].mxu0
        %3081 = vmatprep.mubr.f32.mxu0 0.0
        %3082 = vmatmul.mubr.f32.gmra.mrb[0].mxu0 %v2884
        %v3083 = vpop.f32.mrb[0].mxu0
        %v3084 = vadd.f32 %v2916, %v3083
        %v3085 = vpop.f32.mrb[0].mxu0
        %3086 = vmatprep.mubr.f32.mxu0 0.0
        %3087 = vmatmul.mubr.f32.gmra.mrb[0].mxu0 %v2885
        %v3088 = vpop.f32.mrb[0].mxu0
        %v3089 = vadd.f32 %v2916, %v3088
        %v3090 = vpop.f32.mrb[0].mxu0
        %3091 = vmatprep.mubr.f32.mxu0 0.0
        %3092 = vmatmul.mubr.f32.gmra.mrb[0].mxu0 %v2886
        %v3093 = vpop.f32.mrb[0].mxu0
        %v3094 = vadd.f32 %v2916, %v3093
        %v3095 = vpop.f32.mrb[0].mxu0
        %3096 = vmatprep.mubr.f32.mxu0 0.0
        %3097 = vmatmul.mubr.f32.gmra.mrb[0].mxu0 %v2887
        %v3098 = vpop.f32.mrb[0].mxu0
        %v3099 = vadd.f32 %v2916, %v3098
        %v3100 = vpop.f32.mrb[0].mxu0
        %3101 = vmatprep.mubr.f32.mxu0 0.0
        %3102 = vmatmul.mubr.f32.gmra.mrb[0].mxu0 %v2888
        %v3103 = vpop.f32.mrb[0].mxu0
        %v3104 = vadd.f32 %v2916, %v3103
        %v3105 = vpop.f32.mrb[0].mxu0
        %3106 = vmatprep.mubr.f32.mxu0 0.0
        %3107 = vmatmul.mubr.f32.gmra.mrb[0].mxu0 %v2889
        %v3108 = vpop.f32.mrb[0].mxu0
        %v3109 = vadd.f32 %v2916, %v3108
        %v3110 = vpop.f32.mrb[0].mxu0
        %3111 = vmatprep.mubr.f32.mxu0 0.0
        %3112 = vmatmul.mubr.f32.gmra.mrb[0].mxu0 %v2890
        %v3113 = vpop.f32.mrb[0].mxu0
        %v3114 = vadd.f32 %v2916, %v3113
        %v3115 = vpop.f32.mrb[0].mxu0
        %3116 = vmatprep.mubr.f32.mxu0 0.0
        %3117 = vmatmul.mubr.f32.gmra.mrb[0].mxu0 %v2891
        %v3118 = vpop.f32.mrb[0].mxu0
        %v3119 = vadd.f32 %v2916, %v3118
        %v3120 = vpop.f32.mrb[0].mxu0
        %3121 = vmatprep.mubr.f32.mxu0 0.0
        %3122 = vmatmul.mubr.f32.gmra.mrb[0].mxu0 %v2892
        %v3123 = vpop.f32.mrb[0].mxu0
        %v3124 = vadd.f32 %v2916, %v3123
        %v3125 = vpop.f32.mrb[0].mxu0
        %3126 = vmatprep.mubr.f32.mxu0 0.0
        %3127 = vmatmul.mubr.f32.gmra.mrb[0].mxu0 %v2893
        %v3128 = vpop.f32.mrb[0].mxu0
        %v3129 = vadd.f32 %v2916, %v3128
        %v3130 = vpop.f32.mrb[0].mxu0
        %3131 = vmatprep.mubr.f32.mxu0 0.0
        %3132 = vmatmul.mubr.f32.gmra.mrb[0].mxu0 %v2894
        %v3133 = vpop.f32.mrb[0].mxu0
        %v3134 = vadd.f32 %v2916, %v3133
        %v3135 = vpop.f32.mrb[0].mxu0
        %3136 = vmatprep.mubr.f32.mxu0 0.0
        %3137 = vmatmul.mubr.f32.gmra.mrb[0].mxu0 %v2895
        %v3138 = vpop.f32.mrb[0].mxu0
        %v3139 = vadd.f32 %v2916, %v3138
        %v3140 = vpop.f32.mrb[0].mxu0
        %3141 = vdwg.mxu0
        %3142 = vmax.xlane.f32.xlu0 %v2984
        %v3143 = vpop.xlane.xlu0 %3142
        %3144 = vmax.xlane.f32.xlu0 %v2989
        %v3145 = vpop.xlane.xlu0 %3144
        %3146 = vmax.xlane.f32.xlu0 %v2994
        %v3147 = vpop.xlane.xlu0 %3146
        %3148 = vmax.xlane.f32.xlu0 %v2999
        %v3149 = vpop.xlane.xlu0 %3148
        %3150 = vmax.xlane.f32.xlu0 %v3004
        %v3151 = vpop.xlane.xlu0 %3150
        %3152 = vmax.xlane.f32.xlu0 %v3009
        %v3153 = vpop.xlane.xlu0 %3152
        %3154 = vmax.xlane.f32.xlu0 %v3014
        %v3155 = vpop.xlane.xlu0 %3154
        %3156 = vmax.xlane.f32.xlu0 %v3019
        %v3157 = vpop.xlane.xlu0 %3156
        %3158 = vmax.xlane.f32.xlu0 %v3024
        %v3159 = vpop.xlane.xlu0 %3158
        %3160 = vmax.xlane.f32.xlu0 %v3029
        %v3161 = vpop.xlane.xlu0 %3160
        %3162 = vmax.xlane.f32.xlu0 %v3034
        %v3163 = vpop.xlane.xlu0 %3162
        %3164 = vmax.xlane.f32.xlu0 %v3039
        %v3165 = vpop.xlane.xlu0 %3164
        %3166 = vmax.xlane.f32.xlu0 %v3044
        %v3167 = vpop.xlane.xlu0 %3166
        %3168 = vmax.xlane.f32.xlu0 %v3049
        %v3169 = vpop.xlane.xlu0 %3168
        %3170 = vmax.xlane.f32.xlu0 %v3054
        %v3171 = vpop.xlane.xlu0 %3170
        %3172 = vmax.xlane.f32.xlu0 %v3059
        %v3173 = vpop.xlane.xlu0 %3172
        %3174 = vmax.xlane.f32.xlu0 %v3064
        %v3175 = vpop.xlane.xlu0 %3174
        %3176 = vmax.xlane.f32.xlu0 %v3069
        %v3177 = vpop.xlane.xlu0 %3176
        %3178 = vmax.xlane.f32.xlu0 %v3074
        %v3179 = vpop.xlane.xlu0 %3178
        %3180 = vmax.xlane.f32.xlu0 %v3079
        %v3181 = vpop.xlane.xlu0 %3180
        %3182 = vmax.xlane.f32.xlu0 %v3084
        %v3183 = vpop.xlane.xlu0 %3182
        %3184 = vmax.xlane.f32.xlu0 %v3089
        %v3185 = vpop.xlane.xlu0 %3184
        %3186 = vmax.xlane.f32.xlu0 %v3094
        %v3187 = vpop.xlane.xlu0 %3186
        %3188 = vmax.xlane.f32.xlu0 %v3099
        %v3189 = vpop.xlane.xlu0 %3188
        %3190 = vmax.xlane.f32.xlu0 %v3104
        %v3191 = vpop.xlane.xlu0 %3190
        %3192 = vmax.xlane.f32.xlu0 %v3109
        %v3193 = vpop.xlane.xlu0 %3192
        %3194 = vmax.xlane.f32.xlu0 %v3114
        %v3195 = vpop.xlane.xlu0 %3194
        %3196 = vmax.xlane.f32.xlu0 %v3119
        %v3197 = vpop.xlane.xlu0 %3196
        %3198 = vmax.xlane.f32.xlu0 %v3124
        %v3199 = vpop.xlane.xlu0 %3198
        %3200 = vmax.xlane.f32.xlu0 %v3129
        %v3201 = vpop.xlane.xlu0 %3200
        %3202 = vmax.xlane.f32.xlu0 %v3134
        %v3203 = vpop.xlane.xlu0 %3202
        %3204 = vmax.xlane.f32.xlu0 %v3139
        %v3205 = vpop.xlane.xlu0 %3204
        %v3206 = vsub.f32 %v2984, %v3143
        %v3207 = vsub.f32 %v2989, %v3145
        %v3208 = vsub.f32 %v2994, %v3147
        %v3209 = vsub.f32 %v2999, %v3149
        %v3210 = vsub.f32 %v3004, %v3151
        %v3211 = vsub.f32 %v3009, %v3153
        %v3212 = vsub.f32 %v3014, %v3155
        %v3213 = vsub.f32 %v3019, %v3157
        %v3214 = vsub.f32 %v3024, %v3159
        %v3215 = vsub.f32 %v3029, %v3161
        %v3216 = vsub.f32 %v3034, %v3163
        %v3217 = vsub.f32 %v3039, %v3165
        %v3218 = vsub.f32 %v3044, %v3167
        %v3219 = vsub.f32 %v3049, %v3169
        %v3220 = vsub.f32 %v3054, %v3171
        %v3221 = vsub.f32 %v3059, %v3173
        %v3222 = vsub.f32 %v3064, %v3175
        %v3223 = vsub.f32 %v3069, %v3177
        %v3224 = vsub.f32 %v3074, %v3179
        %v3225 = vsub.f32 %v3079, %v3181
        %v3226 = vsub.f32 %v3084, %v3183
        %v3227 = vsub.f32 %v3089, %v3185
        %v3228 = vsub.f32 %v3094, %v3187
        %v3229 = vsub.f32 %v3099, %v3189
        %v3230 = vsub.f32 %v3104, %v3191
        %v3231 = vsub.f32 %v3109, %v3193
        %v3232 = vsub.f32 %v3114, %v3195
        %v3233 = vsub.f32 %v3119, %v3197
        %v3234 = vsub.f32 %v3124, %v3199
        %v3235 = vsub.f32 %v3129, %v3201
        %v3236 = vsub.f32 %v3134, %v3203
        %v3237 = vsub.f32 %v3139, %v3205
        %v3238 = vmul.f32 %v3206, 1.442695
        %v3239 = vpow.pop %v3238
        %v3240 = vmul.f32 %v3207, 1.442695
        %v3241 = vpow.pop %v3240
        %v3242 = vmul.f32 %v3208, 1.442695
        %v3243 = vpow.pop %v3242
        %v3244 = vmul.f32 %v3209, 1.442695
        %v3245 = vpow.pop %v3244
        %v3246 = vmul.f32 %v3210, 1.442695
        %v3247 = vpow.pop %v3246
        %v3248 = vmul.f32 %v3211, 1.442695
        %v3249 = vpow.pop %v3248
        %v3250 = vmul.f32 %v3212, 1.442695
        %v3251 = vpow.pop %v3250
        %v3252 = vmul.f32 %v3213, 1.442695
        %v3253 = vpow.pop %v3252
        %v3254 = vmul.f32 %v3214, 1.442695
        %v3255 = vpow.pop %v3254
        %v3256 = vmul.f32 %v3215, 1.442695
        %v3257 = vpow.pop %v3256
        %v3258 = vmul.f32 %v3216, 1.442695
        %v3259 = vpow.pop %v3258
        %v3260 = vmul.f32 %v3217, 1.442695
        %v3261 = vpow.pop %v3260
        %v3262 = vmul.f32 %v3218, 1.442695
        %v3263 = vpow.pop %v3262
        %v3264 = vmul.f32 %v3219, 1.442695
        %v3265 = vpow.pop %v3264
        %v3266 = vmul.f32 %v3220, 1.442695
        %v3267 = vpow.pop %v3266
        %v3268 = vmul.f32 %v3221, 1.442695
        %v3269 = vpow.pop %v3268
        %v3270 = vmul.f32 %v3222, 1.442695
        %v3271 = vpow.pop %v3270
        %v3272 = vmul.f32 %v3223, 1.442695
        %v3273 = vpow.pop %v3272
        %v3274 = vmul.f32 %v3224, 1.442695
        %v3275 = vpow.pop %v3274
        %v3276 = vmul.f32 %v3225, 1.442695
        %v3277 = vpow.pop %v3276
        %v3278 = vmul.f32 %v3226, 1.442695
        %v3279 = vpow.pop %v3278
        %v3280 = vmul.f32 %v3227, 1.442695
        %v3281 = vpow.pop %v3280
        %v3282 = vmul.f32 %v3228, 1.442695
        %v3283 = vpow.pop %v3282
        %v3284 = vmul.f32 %v3229, 1.442695
        %v3285 = vpow.pop %v3284
        %v3286 = vmul.f32 %v3230, 1.442695
        %v3287 = vpow.pop %v3286
        %v3288 = vmul.f32 %v3231, 1.442695
        %v3289 = vpow.pop %v3288
        %v3290 = vmul.f32 %v3232, 1.442695
        %v3291 = vpow.pop %v3290
        %v3292 = vmul.f32 %v3233, 1.442695
        %v3293 = vpow.pop %v3292
        %v3294 = vmul.f32 %v3234, 1.442695
        %v3295 = vpow.pop %v3294
        %v3296 = vmul.f32 %v3235, 1.442695
        %v3297 = vpow.pop %v3296
        %v3298 = vmul.f32 %v3236, 1.442695
        %v3299 = vpow.pop %v3298
        %v3300 = vmul.f32 %v3237, 1.442695
        %v3301 = vpow.pop %v3300
        %3302 = vadd.xlane.f32.xlu0 %v3239
        %v3303 = vpop.xlane.xlu0 %3302
        %3304 = vadd.xlane.f32.xlu0 %v3241
        %v3305 = vpop.xlane.xlu0 %3304
        %3306 = vadd.xlane.f32.xlu0 %v3243
        %v3307 = vpop.xlane.xlu0 %3306
        %3308 = vadd.xlane.f32.xlu0 %v3245
        %v3309 = vpop.xlane.xlu0 %3308
        %3310 = vadd.xlane.f32.xlu0 %v3247
        %v3311 = vpop.xlane.xlu0 %3310
        %3312 = vadd.xlane.f32.xlu0 %v3249
        %v3313 = vpop.xlane.xlu0 %3312
        %3314 = vadd.xlane.f32.xlu0 %v3251
        %v3315 = vpop.xlane.xlu0 %3314
        %3316 = vadd.xlane.f32.xlu0 %v3253
        %v3317 = vpop.xlane.xlu0 %3316
        %3318 = vadd.xlane.f32.xlu0 %v3255
        %v3319 = vpop.xlane.xlu0 %3318
        %3320 = vadd.xlane.f32.xlu0 %v3257
        %v3321 = vpop.xlane.xlu0 %3320
        %3322 = vadd.xlane.f32.xlu0 %v3259
        %v3323 = vpop.xlane.xlu0 %3322
        %3324 = vadd.xlane.f32.xlu0 %v3261
        %v3325 = vpop.xlane.xlu0 %3324
        %3326 = vadd.xlane.f32.xlu0 %v3263
        %v3327 = vpop.xlane.xlu0 %3326
        %3328 = vadd.xlane.f32.xlu0 %v3265
        %v3329 = vpop.xlane.xlu0 %3328
        %3330 = vadd.xlane.f32.xlu0 %v3267
        %v3331 = vpop.xlane.xlu0 %3330
        %3332 = vadd.xlane.f32.xlu0 %v3269
        %v3333 = vpop.xlane.xlu0 %3332
        %3334 = vadd.xlane.f32.xlu0 %v3271
        %v3335 = vpop.xlane.xlu0 %3334
        %3336 = vadd.xlane.f32.xlu0 %v3273
        %v3337 = vpop.xlane.xlu0 %3336
        %3338 = vadd.xlane.f32.xlu0 %v3275
        %v3339 = vpop.xlane.xlu0 %3338
        %3340 = vadd.xlane.f32.xlu0 %v3277
        %v3341 = vpop.xlane.xlu0 %3340
        %3342 = vadd.xlane.f32.xlu0 %v3279
        %v3343 = vpop.xlane.xlu0 %3342
        %3344 = vadd.xlane.f32.xlu0 %v3281
        %v3345 = vpop.xlane.xlu0 %3344
        %3346 = vadd.xlane.f32.xlu0 %v3283
        %v3347 = vpop.xlane.xlu0 %3346
        %3348 = vadd.xlane.f32.xlu0 %v3285
        %v3349 = vpop.xlane.xlu0 %3348
        %3350 = vadd.xlane.f32.xlu0 %v3287
        %v3351 = vpop.xlane.xlu0 %3350
        %3352 = vadd.xlane.f32.xlu0 %v3289
        %v3353 = vpop.xlane.xlu0 %3352
        %3354 = vadd.xlane.f32.xlu0 %v3291
        %v3355 = vpop.xlane.xlu0 %3354
        %3356 = vadd.xlane.f32.xlu0 %v3293
        %v3357 = vpop.xlane.xlu0 %3356
        %3358 = vadd.xlane.f32.xlu0 %v3295
        %v3359 = vpop.xlane.xlu0 %3358
        %3360 = vadd.xlane.f32.xlu0 %v3297
        %v3361 = vpop.xlane.xlu0 %3360
        %3362 = vadd.xlane.f32.xlu0 %v3299
        %v3363 = vpop.xlane.xlu0 %3362
        %3364 = vadd.xlane.f32.xlu0 %v3301
        %v3365 = vpop.xlane.xlu0 %3364
        %v3366 = vrcp.pop %v3303
        %v3367 = vrcp.pop %v3305
        %v3368 = vrcp.pop %v3307
        %v3369 = vrcp.pop %v3309
        %v3370 = vrcp.pop %v3311
        %v3371 = vrcp.pop %v3313
        %v3372 = vrcp.pop %v3315
        %v3373 = vrcp.pop %v3317
        %v3374 = vrcp.pop %v3319
        %v3375 = vrcp.pop %v3321
        %v3376 = vrcp.pop %v3323
        %v3377 = vrcp.pop %v3325
        %v3378 = vrcp.pop %v3327
        %v3379 = vrcp.pop %v3329
        %v3380 = vrcp.pop %v3331
        %v3381 = vrcp.pop %v3333
        %v3382 = vrcp.pop %v3335
        %v3383 = vrcp.pop %v3337
        %v3384 = vrcp.pop %v3339
        %v3385 = vrcp.pop %v3341
        %v3386 = vrcp.pop %v3343
        %v3387 = vrcp.pop %v3345
        %v3388 = vrcp.pop %v3347
        %v3389 = vrcp.pop %v3349
        %v3390 = vrcp.pop %v3351
        %v3391 = vrcp.pop %v3353
        %v3392 = vrcp.pop %v3355
        %v3393 = vrcp.pop %v3357
        %v3394 = vrcp.pop %v3359
        %v3395 = vrcp.pop %v3361
        %v3396 = vrcp.pop %v3363
        %v3397 = vrcp.pop %v3365
        %v3398 = vmul.f32 %v3303, %v3366
        %v3399 = vmul.f32 %v3305, %v3367
        %v3400 = vmul.f32 %v3307, %v3368
        %v3401 = vmul.f32 %v3309, %v3369
        %v3402 = vmul.f32 %v3311, %v3370
        %v3403 = vmul.f32 %v3313, %v3371
        %v3404 = vmul.f32 %v3315, %v3372
        %v3405 = vmul.f32 %v3317, %v3373
        %v3406 = vmul.f32 %v3319, %v3374
        %v3407 = vmul.f32 %v3321, %v3375
        %v3408 = vmul.f32 %v3323, %v3376
        %v3409 = vmul.f32 %v3325, %v3377
        %v3410 = vmul.f32 %v3327, %v3378
        %v3411 = vmul.f32 %v3329, %v3379
        %v3412 = vmul.f32 %v3331, %v3380
        %v3413 = vmul.f32 %v3333, %v3381
        %v3414 = vmul.f32 %v3335, %v3382
        %v3415 = vmul.f32 %v3337, %v3383
        %v3416 = vmul.f32 %v3339, %v3384
        %v3417 = vmul.f32 %v3341, %v3385
        %v3418 = vmul.f32 %v3343, %v3386
        %v3419 = vmul.f32 %v3345, %v3387
        %v3420 = vmul.f32 %v3347, %v3388
        %v3421 = vmul.f32 %v3349, %v3389
        %v3422 = vmul.f32 %v3351, %v3390
        %v3423 = vmul.f32 %v3353, %v3391
        %v3424 = vmul.f32 %v3355, %v3392
        %v3425 = vmul.f32 %v3357, %v3393
        %v3426 = vmul.f32 %v3359, %v3394
        %v3427 = vmul.f32 %v3361, %v3395
        %v3428 = vmul.f32 %v3363, %v3396
        %v3429 = vmul.f32 %v3365, %v3397
        %v3430 = vsub.f32 2.0, %v3398
        %v3431 = vsub.f32 2.0, %v3399
        %v3432 = vsub.f32 2.0, %v3400
        %v3433 = vsub.f32 2.0, %v3401
        %v3434 = vsub.f32 2.0, %v3402
        %v3435 = vsub.f32 2.0, %v3403
        %v3436 = vsub.f32 2.0, %v3404
        %v3437 = vsub.f32 2.0, %v3405
        %v3438 = vsub.f32 2.0, %v3406
        %v3439 = vsub.f32 2.0, %v3407
        %v3440 = vsub.f32 2.0, %v3408
        %v3441 = vsub.f32 2.0, %v3409
        %v3442 = vsub.f32 2.0, %v3410
        %v3443 = vsub.f32 2.0, %v3411
        %v3444 = vsub.f32 2.0, %v3412
        %v3445 = vsub.f32 2.0, %v3413
        %v3446 = vsub.f32 2.0, %v3414
        %v3447 = vsub.f32 2.0, %v3415
        %v3448 = vsub.f32 2.0, %v3416
        %v3449 = vsub.f32 2.0, %v3417
        %v3450 = vsub.f32 2.0, %v3418
        %v3451 = vsub.f32 2.0, %v3419
        %v3452 = vsub.f32 2.0, %v3420
        %v3453 = vsub.f32 2.0, %v3421
        %v3454 = vsub.f32 2.0, %v3422
        %v3455 = vsub.f32 2.0, %v3423
        %v3456 = vsub.f32 2.0, %v3424
        %v3457 = vsub.f32 2.0, %v3425
        %v3458 = vsub.f32 2.0, %v3426
        %v3459 = vsub.f32 2.0, %v3427
        %v3460 = vsub.f32 2.0, %v3428
        %v3461 = vsub.f32 2.0, %v3429
        %v3462 = vmul.f32 %v3366, %v3430
        %v3463 = vmul.f32 %v3367, %v3431
        %v3464 = vmul.f32 %v3368, %v3432
        %v3465 = vmul.f32 %v3369, %v3433
        %v3466 = vmul.f32 %v3370, %v3434
        %v3467 = vmul.f32 %v3371, %v3435
        %v3468 = vmul.f32 %v3372, %v3436
        %v3469 = vmul.f32 %v3373, %v3437
        %v3470 = vmul.f32 %v3374, %v3438
        %v3471 = vmul.f32 %v3375, %v3439
        %v3472 = vmul.f32 %v3376, %v3440
        %v3473 = vmul.f32 %v3377, %v3441
        %v3474 = vmul.f32 %v3378, %v3442
        %v3475 = vmul.f32 %v3379, %v3443
        %v3476 = vmul.f32 %v3380, %v3444
        %v3477 = vmul.f32 %v3381, %v3445
        %v3478 = vmul.f32 %v3382, %v3446
        %v3479 = vmul.f32 %v3383, %v3447
        %v3480 = vmul.f32 %v3384, %v3448
        %v3481 = vmul.f32 %v3385, %v3449
        %v3482 = vmul.f32 %v3386, %v3450
        %v3483 = vmul.f32 %v3387, %v3451
        %v3484 = vmul.f32 %v3388, %v3452
        %v3485 = vmul.f32 %v3389, %v3453
        %v3486 = vmul.f32 %v3390, %v3454
        %v3487 = vmul.f32 %v3391, %v3455
        %v3488 = vmul.f32 %v3392, %v3456
        %v3489 = vmul.f32 %v3393, %v3457
        %v3490 = vmul.f32 %v3394, %v3458
        %v3491 = vmul.f32 %v3395, %v3459
        %v3492 = vmul.f32 %v3396, %v3460
        %v3493 = vmul.f32 %v3397, %v3461
        %v3494 = vmul.f32 %v3239, %v3462
        %v3495 = vmul.f32 %v3241, %v3463
        %v3496 = vmul.f32 %v3243, %v3464
        %v3497 = vmul.f32 %v3245, %v3465
        %v3498 = vmul.f32 %v3247, %v3466
        %v3499 = vmul.f32 %v3249, %v3467
        %v3500 = vmul.f32 %v3251, %v3468
        %v3501 = vmul.f32 %v3253, %v3469
        %v3502 = vmul.f32 %v3255, %v3470
        %v3503 = vmul.f32 %v3257, %v3471
        %v3504 = vmul.f32 %v3259, %v3472
        %v3505 = vmul.f32 %v3261, %v3473
        %v3506 = vmul.f32 %v3263, %v3474
        %v3507 = vmul.f32 %v3265, %v3475
        %v3508 = vmul.f32 %v3267, %v3476
        %v3509 = vmul.f32 %v3269, %v3477
        %v3510 = vmul.f32 %v3271, %v3478
        %v3511 = vmul.f32 %v3273, %v3479
        %v3512 = vmul.f32 %v3275, %v3480
        %v3513 = vmul.f32 %v3277, %v3481
        %v3514 = vmul.f32 %v3279, %v3482
        %v3515 = vmul.f32 %v3281, %v3483
        %v3516 = vmul.f32 %v3283, %v3484
        %v3517 = vmul.f32 %v3285, %v3485
        %v3518 = vmul.f32 %v3287, %v3486
        %v3519 = vmul.f32 %v3289, %v3487
        %v3520 = vmul.f32 %v3291, %v3488
        %v3521 = vmul.f32 %v3293, %v3489
        %v3522 = vmul.f32 %v3295, %v3490
        %v3523 = vmul.f32 %v3297, %v3491
        %v3524 = vmul.f32 %v3299, %v3492
        %v3525 = vmul.f32 %v3301, %v3493
        %3526 = vst [vmem:[%s193] sm:$0xff] %v3494
        %3527 = vst [vmem:[%s193 + $0x8] sm:$0xff] %v3495
        %3528 = vst [vmem:[%s193 + $0x10] sm:$0xff] %v3496
        %3529 = vst [vmem:[%s193 + $0x18] sm:$0xff] %v3497
        %3530 = vst [vmem:[%s193 + $0x20] sm:$0xff] %v3498
        %3531 = vst [vmem:[%s193 + $0x28] sm:$0xff] %v3499
        %3532 = vst [vmem:[%s193 + $0x30] sm:$0xff] %v3500
        %3533 = vst [vmem:[%s193 + $0x38] sm:$0xff] %v3501
        %3534 = vst [vmem:[%s193 + $0x40] sm:$0xff] %v3502
        %3535 = vst [vmem:[%s193 + $0x48] sm:$0xff] %v3503
        %3536 = vst [vmem:[%s193 + $0x50] sm:$0xff] %v3504
        %3537 = vst [vmem:[%s193 + $0x58] sm:$0xff] %v3505
        %3538 = vst [vmem:[%s193 + $0x60] sm:$0xff] %v3506
        %3539 = vst [vmem:[%s193 + $0x68] sm:$0xff] %v3507
        %3540 = vst [vmem:[%s193 + $0x70] sm:$0xff] %v3508
        %3541 = vst [vmem:[%s193 + $0x78] sm:$0xff] %v3509
        %3542 = vst [vmem:[%s193 + $0x80] sm:$0xff] %v3510
        %3543 = vst [vmem:[%s193 + $0x88] sm:$0xff] %v3511
        %3544 = vst [vmem:[%s193 + $0x90] sm:$0xff] %v3512
        %3545 = vst [vmem:[%s193 + $0x98] sm:$0xff] %v3513
        %3546 = vst [vmem:[%s193 + $0xa0] sm:$0xff] %v3514
        %3547 = vst [vmem:[%s193 + $0xa8] sm:$0xff] %v3515
        %3548 = vst [vmem:[%s193 + $0xb0] sm:$0xff] %v3516
        %3549 = vst [vmem:[%s193 + $0xb8] sm:$0xff] %v3517
        %3550 = vst [vmem:[%s193 + $0xc0] sm:$0xff] %v3518
        %3551 = vst [vmem:[%s193 + $0xc8] sm:$0xff] %v3519
        %3552 = vst [vmem:[%s193 + $0xd0] sm:$0xff] %v3520
        %3553 = vst [vmem:[%s193 + $0xd8] sm:$0xff] %v3521
        %3554 = vst [vmem:[%s193 + $0xe0] sm:$0xff] %v3522
        %3555 = vst [vmem:[%s193 + $0xe8] sm:$0xff] %v3523
        %3556 = vst [vmem:[%s193 + $0xf0] sm:$0xff] %v3524
        %3557 = vst [vmem:[%s193 + $0xf8] sm:$0xff] %v3525
        %s3558 = sand.u32 %s115, 1
        %s3559 = scalar_lea.sflag [#allocation3], %s3558
        %s3560 = sand.u32 %s115, 1
        %s3561 = smul.addr %s3560, 256
        %s3562 = scalar_lea.vmem [#allocation2], %s3561
        // Predicated region
        $region37: #{tpu_custom_call.1} parent=35 // pred_check
          %p3563 = pneg %p125
        $region38: #{tpu_custom_call.1} parent=35 // pred_check_branch
          %3565 = sbr.rel (%p3563) target = $region40
        $region39: #{tpu_custom_call.1} parent=35 // pred_region
          %s3566 = smul.u32 32, %s18
          %s3568 = ssub.s32 4096, 4096
          %3569 = vsyncadd %s3559, %s3568
          %s3570 = smul.addr %s3566, 128
          %s3571 = scalar_lea.hbm %s4, %s3570
          %s3572 = sshll.u32 %s3562, 4
          %s3573 = int_to_ptr.vmem [resolvable:$true] %s3572
          %3578 = dma.vmem_to_hbm [thread:$0]  %s3573, 4096, %s3571, %s3559, 128, 128, 8
        $region40: #{tpu_custom_call.1} parent=35 // pred_fallthru
          _
      $region36: #{tpu_custom_call.1} parent=5 // pred_fallthru
        _
      %p3579 = scmp.le.s32.totalorder 2, %s13
      // Predicated region
      $region41: #{tpu_custom_call.1} parent=5 // pred_check
        %p3580 = pneg %p3579
      $region42: #{tpu_custom_call.1} parent=5 // pred_check_branch
        %3582 = sbr.rel (%p3580) target = $region44
      $region43: #{tpu_custom_call.1} parent=5 // pred_region
        %s3583 = ssub.s32 %s13, 2
        // Predicated region
        $region45: #{tpu_custom_call.1} parent=43 // pred_check
          %p3584 = pneg %p131
        $region46: #{tpu_custom_call.1} parent=43 // pred_check_branch
          %3586 = sbr.rel (%p3584) target = $region48
        $region47: #{tpu_custom_call.1} parent=43 // pred_region
          %s3587 = sand.u32 %s116, 1
          %s3588 = scalar_lea.sflag [#allocation3], %s3587
          %s3589 = sand.u32 %s116, 1
          %s3590 = smul.addr %s3589, 256
          %s3591 = scalar_lea.vmem [#allocation2], %s3590
          %3592 = dma.done %s3588, 4096
        $region48: #{tpu_custom_call.1} parent=43 // pred_fallthru
          _
      $region44: #{tpu_custom_call.1} parent=5 // pred_fallthru
        _
    $region6: #{tpu_custom_call.1} parent=1 // loop_footer
      %s17 = sadd.s32 1, %s13
    $region7: #{tpu_custom_call.1} parent=1 // loop_footer_branch
      %12 = sbr.rel target = $region3
    $region8: #{tpu_custom_call.1} parent=1 // loop_exit
      _
    %3593 = vsyncpa [#allocation3], 1
    %s3594 = scalar_lea.sflag [#allocation3], 1
    %3595 = vsyncpa %s3594, 1

</llo_original>
